<compile_context>
chip_gen: v6e
topology: v6e:2x2x1
jax: 0.10.0
libtpu: 0.0.40
codegen_flags: <defaults>
</compile_context>

<pallas_src>
import functools

import jax
import jax.numpy as jnp
from jax import lax
from jax.experimental import pallas as pl
from jax.experimental.pallas import tpu as pltpu


# ---------------------------------------------------------------------------
# Small helpers
# ---------------------------------------------------------------------------
def _round_up(x, m):
    return ((x + m - 1) // m) * m


def _tap_offsets(stride, hph):
    """(row, col) offsets of the 9 conv taps inside the phase-stacked input."""
    offs = []
    for dh in range(3):
        for dw in range(3):
            p = (dh % stride) * stride + (dw % stride)     # phase index
            offs.append((p * hph + dh // stride, dw // stride))
    return tuple(offs)


def _phase_split_stack(xp, s):
    """(N, Hp, Wp, C) -> (N, s*s*Hp/s, Wp/s, C); phase (ph,pw) stacked along H."""
    n, hp, wp, c = xp.shape
    hph, wph = hp // s, wp // s
    x6 = xp.reshape(n, hph, s, wph, s, c).transpose(0, 2, 4, 1, 3, 5)
    return x6.reshape(n, s * s * hph, wph, c)


def fold_bn(gamma, beta, mean, var, eps=1e-5):
    scale = gamma / jnp.sqrt(var + eps)
    shift = beta - mean * scale
    return scale.astype(jnp.float32), shift.astype(jnp.float32)


# ---------------------------------------------------------------------------
# Pallas kernels
# ---------------------------------------------------------------------------
def _stage1_kernel(*refs, taps, Ho, Wo, Cp_in, Cp_out, has_shortcut):
    """BN1+ReLU -> conv1 (9 taps) [-> 1x1 shortcut] -> BN2+ReLU."""
    if has_shortcut:
        (x_ref, mask_ref, w1_ref, s1_ref, b1_ref, s2_ref, b2_ref, wsc_ref,
         o2_ref, sc_ref) = refs
    else:
        (x_ref, mask_ref, w1_ref, s1_ref, b1_ref, s2_ref, b2_ref,
         o2_ref) = refs
        wsc_ref = sc_ref = None

    # Fused BN1 + ReLU prologue.  The mask zeroes the conv-padding halo so it
    # matches PyTorch's zero padding applied AFTER bn1/relu.
    out1 = jnp.maximum(x_ref[0] * s1_ref[...] + b1_ref[...], 0.0) * mask_ref[...]

    # conv1 as 9 accumulated tap matmuls (MXU, f32 accumulation).
    acc = jnp.zeros((Ho * Wo, Cp_out), jnp.float32)
    center = None
    for t, (ro, co) in enumerate(taps):
        a = out1[ro:ro + Ho, co:co + Wo, :].reshape(Ho * Wo, Cp_in)
        if t == 4:                       # centre tap == strided input of 1x1 shortcut
            center = a
        acc = acc + jnp.dot(a, w1_ref[t], preferred_element_type=jnp.float32)

    # Fused BN2 + ReLU epilogue; store conv2's input directly.
    o2 = jnp.maximum(acc * s2_ref[...] + b2_ref[...], 0.0)
    o2_ref[0] = o2.reshape(Ho, Wo, Cp_out)

    if has_shortcut:
        sc = jnp.dot(center, wsc_ref[...], preferred_element_type=jnp.float32)
        sc_ref[0] = sc.reshape(Ho, Wo, Cp_out)


def _stage2_kernel(x_ref, w2_ref, res_ref, o_ref, *, taps, Ho, Wo, Cp):
    """conv2 (9 taps) + residual add, fully fused."""
    acc = res_ref[0].reshape(Ho * Wo, Cp)
    for t, (ro, co) in enumerate(taps):
        a = x_ref[0, ro:ro + Ho, co:co + Wo, :].reshape(Ho * Wo, Cp)
        acc = acc + jnp.dot(a, w2_ref[t], preferred_element_type=jnp.float32)
    o_ref[0] = acc.reshape(Ho, Wo, Cp)


# ---------------------------------------------------------------------------
# pallas_call wrappers
# ---------------------------------------------------------------------------
def _stage1(x_ph, mask, w1, s1, b1, s2, b2, *, wsc, stride, Ho, Wo):
    N, PH, PW, Cp_in = x_ph.shape
    Cp_out = w1.shape[-1]
    hph = PH // (stride * stride)
    taps = _tap_offsets(stride, hph)
    has_shortcut = wsc is not None

    kernel = functools.partial(_stage1_kernel, taps=taps, Ho=Ho, Wo=Wo,
                               Cp_in=Cp_in, Cp_out=Cp_out,
                               has_shortcut=has_shortcut)

    in_specs = [
        pl.BlockSpec((1, PH, PW, Cp_in), lambda n: (n, 0, 0, 0)),   # activations
        pl.BlockSpec((PH, PW, 1), lambda n: (0, 0, 0)),             # pad mask (pinned)
        pl.BlockSpec((9, Cp_in, Cp_out), lambda n: (0, 0, 0)),      # w1 (pinned)
        pl.BlockSpec((1, Cp_in), lambda n: (0, 0)),                 # bn1 scale
        pl.BlockSpec((1, Cp_in), lambda n: (0, 0)),                 # bn1 shift
        pl.BlockSpec((1, Cp_out), lambda n: (0, 0)),                # bn2 scale
        pl.BlockSpec((1, Cp_out), lambda n: (0, 0)),                # bn2 shift
    ]
    inputs = [x_ph, mask, w1, s1, b1, s2, b2]
    if has_shortcut:
        in_specs.append(pl.BlockSpec((Cp_in, Cp_out), lambda n: (0, 0)))
        inputs.append(wsc)

    out_block = pl.BlockSpec((1, Ho, Wo, Cp_out), lambda n: (n, 0, 0, 0))
    if has_shortcut:
        out_shape = (jax.ShapeDtypeStruct((N, Ho, Wo, Cp_out), jnp.float32),
                     jax.ShapeDtypeStruct((N, Ho, Wo, Cp_out), jnp.float32))
        out_specs = (out_block, out_block)
    else:
        out_shape = jax.ShapeDtypeStruct((N, Ho, Wo, Cp_out), jnp.float32)
        out_specs = out_block

    return pl.pallas_call(
        kernel,
        out_shape=out_shape,
        grid=(N,),
        in_specs=in_specs,
        out_specs=out_specs,
        compiler_params=pltpu.CompilerParams(
            dimension_semantics=("parallel",)),
    )(*inputs)


def _stage2(o2p, w2, residual, *, Ho, Wo):
    N, PH, PW, Cp = o2p.shape
    taps = _tap_offsets(1, PH)
    kernel = functools.partial(_stage2_kernel, taps=taps, Ho=Ho, Wo=Wo, Cp=Cp)
    return pl.pallas_call(
        kernel,
        out_shape=jax.ShapeDtypeStruct((N, Ho, Wo, Cp), jnp.float32),
        grid=(N,),
        in_specs=[
            pl.BlockSpec((1, PH, PW, Cp), lambda n: (n, 0, 0, 0)),  # padded o2
            pl.BlockSpec((9, Cp, Cp), lambda n: (0, 0, 0)),         # w2 (pinned)
            pl.BlockSpec((1, Ho, Wo, Cp), lambda n: (n, 0, 0, 0)),  # residual
        ],
        out_specs=pl.BlockSpec((1, Ho, Wo, Cp), lambda n: (n, 0, 0, 0)),
        compiler_params=pltpu.CompilerParams(
            dimension_semantics=("parallel",)),
    )(o2p, w2, residual)


# ---------------------------------------------------------------------------
# PreActBlock forward (Pallas-backed)
# ---------------------------------------------------------------------------
@functools.partial(jax.jit, static_argnames=("stride", "has_shortcut"))
def preact_block_forward(x_nchw, params, *, stride, has_shortcut):
    N, Cin, H, W = x_nchw.shape
    Cout = params["w1_hwio"].shape[-1]
    Cp_in = _round_up(Cin, 128)
    Cp_out = _round_up(Cout, 128)
    assert (H + 2) % stride == 0 and (W + 2) % stride == 0
    Ho = (H + 2 - 3) // stride + 1
    Wo = (W + 2 - 3) // stride + 1

    # NHWC, lane-pad channels, spatial pad for conv1, stride-phase split.
    x = jnp.transpose(x_nchw, (0, 2, 3, 1)).astype(jnp.float32)
    xc = jnp.pad(x, ((0, 0), (0, 0), (0, 0), (0, Cp_in - Cin)))
    xp = jnp.pad(xc, ((0, 0), (1, 1), (1, 1), (0, 0)))
    x_ph = _phase_split_stack(xp, stride)                       # (N, PH, PW, Cp_in)

    # Mask of "real" (non conv-padding) positions, in the same phase layout.
    ones_sp = jnp.pad(jnp.ones((1, H, W, 1), jnp.float32),
                      ((0, 0), (1, 1), (1, 1), (0, 0)))
    mask = _phase_split_stack(ones_sp, stride)[0]               # (PH, PW, 1)

    # Round the sublane (W-phase) dim up to a multiple of 8 for clean layouts.
    PW = x_ph.shape[2]
    PWp = _round_up(PW, 8)
    x_ph = jnp.pad(x_ph, ((0, 0), (0, 0), (0, PWp - PW), (0, 0)))
    mask = jnp.pad(mask, ((0, 0), (0, PWp - PW), (0, 0)))

    # Fold eval-mode BN into per-channel scale/shift, padded to lane width.
    s1, b1 = fold_bn(params["bn1_gamma"], params["bn1_beta"],
                     params["bn1_mean"], params["bn1_var"])
    s2, b2 = fold_bn(params["bn2_gamma"], params["bn2_beta"],
                     params["bn2_mean"], params["bn2_var"])
    s1 = jnp.pad(s1, (0, Cp_in - Cin), constant_values=1.0).reshape(1, Cp_in)
    b1 = jnp.pad(b1, (0, Cp_in - Cin)).reshape(1, Cp_in)
    s2 = jnp.pad(s2, (0, Cp_out - Cout), constant_values=1.0).reshape(1, Cp_out)
    b2 = jnp.pad(b2, (0, Cp_out - Cout)).reshape(1, Cp_out)

    # Weights, channel padded, tap-major (dh*3+dw, Cin, Cout).
    w1 = jnp.pad(params["w1_hwio"],
                 ((0, 0), (0, 0), (0, Cp_in - Cin), (0, Cp_out - Cout)))
    w1 = w1.reshape(9, Cp_in, Cp_out)
    w2 = jnp.pad(params["w2_hwio"],
                 ((0, 0), (0, 0), (0, Cp_out - Cout), (0, Cp_out - Cout)))
    w2 = w2.reshape(9, Cp_out, Cp_out)

    if has_shortcut:
        wsc = jnp.pad(params["wsc_hwio"].reshape(Cin, Cout),
                      ((0, Cp_in - Cin), (0, Cp_out - Cout)))
        o2, shortcut = _stage1(x_ph, mask, w1, s1, b1, s2, b2,
                               wsc=wsc, stride=stride, Ho=Ho, Wo=Wo)
    else:
        o2 = _stage1(x_ph, mask, w1, s1, b1, s2, b2,
                     wsc=None, stride=stride, Ho=Ho, Wo=Wo)
        shortcut = xc                                            # identity shortcut

    # conv2 input: spatial pad (stride 1 => single phase), sublane-align W.
    o2p = jnp.pad(o2, ((0, 0), (1, 1), (1, 1), (0, 0)))
    PW2 = o2p.shape[2]
    o2p = jnp.pad(o2p, ((0, 0), (0, 0), (0, _round_up(PW2, 8) - PW2), (0, 0)))

    out = _stage2(o2p, w2, shortcut, Ho=Ho, Wo=Wo)               # (N, Ho, Wo, Cp_out)
    out = out[..., :Cout]
    return jnp.transpose(out, (0, 3, 1, 2))                     # back to NCHW


# ---------------------------------------------------------------------------
# Pure-JAX reference (for correctness check)
# ---------------------------------------------------------------------------
def reference_forward(x_nchw, params, *, stride, has_shortcut):
    dn = ("NHWC", "HWIO", "NHWC")
    x = jnp.transpose(x_nchw, (0, 2, 3, 1))
    s1, b1 = fold_bn(params["bn1_gamma"], params["bn1_beta"],
                     params["bn1_mean"], params["bn1_var"])
    out1 = jnp.maximum(x * s1 + b1, 0.0)
    if has_shortcut:
        shortcut = lax.conv_general_dilated(
            out1, params["wsc_hwio"], (stride, stride), "VALID",
            dimension_numbers=dn)
    else:
        shortcut = x
    c1 = lax.conv_general_dilated(
        out1, params["w1_hwio"], (stride, stride), ((1, 1), (1, 1)),
        dimension_numbers=dn)
    s2, b2 = fold_bn(params["bn2_gamma"], params["bn2_beta"],
                     params["bn2_mean"], params["bn2_var"])
    o2 = jnp.maximum(c1 * s2 + b2, 0.0)
    c2 = lax.conv_general_dilated(
        o2, params["w2_hwio"], (1, 1), ((1, 1), (1, 1)),
        dimension_numbers=dn)
    return jnp.transpose(c2 + shortcut, (0, 3, 1, 2))


# ---------------------------------------------------------------------------
# Deterministic parameter init (shapes from PreActBlock.__init__)
# ---------------------------------------------------------------------------
def make_params(key, in_channels, out_channels):
    ks = jax.random.split(key, 10)
    w1 = 0.1 * jax.random.normal(ks[0], (out_channels, in_channels, 3, 3), jnp.float32)
    w2 = 0.1 * jax.random.normal(ks[1], (out_channels, out_channels, 3, 3), jnp.float32)
    wsc = 0.1 * jax.random.normal(ks[2], (out_channels, in_channels, 1, 1), jnp.float32)
    return {
        "w1_hwio": jnp.transpose(w1, (2, 3, 1, 0)),
        "w2_hwio": jnp.transpose(w2, (2, 3, 1, 0)),
        "wsc_hwio": jnp.transpose(wsc, (2, 3, 1, 0)),
        "bn1_gamma": jax.random.uniform(ks[3], (in_channels,), jnp.float32, 0.5, 1.5),
        "bn1_beta": 0.1 * jax.random.normal(ks[4], (in_channels,), jnp.float32),
        "bn1_mean": 0.1 * jax.random.normal(ks[5], (in_channels,), jnp.float32),
        "bn1_var": jax.random.uniform(ks[6], (in_channels,), jnp.float32, 0.5, 1.5),
        "bn2_gamma": jax.random.uniform(ks[7], (out_channels,), jnp.float32, 0.5, 1.5),
        "bn2_beta": 0.1 * jax.random.normal(ks[8], (out_channels,), jnp.float32),
        "bn2_mean": jnp.zeros((out_channels,), jnp.float32),
        "bn2_var": jnp.ones((out_channels,), jnp.float32),
    }


if __name__ == "__main__":
    key = jax.random.PRNGKey(0)

    # Config 1: downsampling block with projection shortcut (stride=2, 4 -> 8).
    N, Cin, H, W, Cout, stride = 2, 4, 16, 16, 8, 2
    has_shortcut = (stride != 1) or (Cin != Cout)
    kx, kp, key = jax.random.split(key, 3)
    x = jax.random.normal(kx, (N, Cin, H, W), jnp.float32)
    params = make_params(kp, Cin, Cout)
    out = jax.block_until_ready(
        preact_block_forward(x, params, stride=stride, has_shortcut=has_shortcut))
    ref = reference_forward(x, params, stride=stride, has_shortcut=has_shortcut)
    assert out.shape == (N, Cout, H // stride, W // stride), out.shape
    assert jnp.allclose(out, ref, atol=1e-2, rtol=1e-2), \
        f"config1 max abs err = {jnp.max(jnp.abs(out - ref))}"

    # Config 2: identity-shortcut block (stride=1, channels preserved, 8 -> 8).
    N2, C2, H2, W2, stride2 = 2, 8, 16, 16, 1
    kx2, kp2 = jax.random.split(key)
    x2 = jax.random.normal(kx2, (N2, C2, H2, W2), jnp.float32)
    params2 = make_params(kp2, C2, C2)
    out2 = jax.block_until_ready(
        preact_block_forward(x2, params2, stride=stride2, has_shortcut=False))
    ref2 = reference_forward(x2, params2, stride=stride2, has_shortcut=False)
    assert out2.shape == (N2, C2, H2, W2), out2.shape
    assert jnp.allclose(out2, ref2, atol=1e-2, rtol=1e-2), \
        f"config2 max abs err = {jnp.max(jnp.abs(out2 - ref2))}"

    print("KERNEL_OK")
</pallas_src>

<mosaic_0001>
module attributes {stable_mosaic.version = 11 : i64} {
  func.func @_stage2_kernel(%arg0: i32, %arg1: memref<1x10x16x128xf32, #tpu.memory_space<vmem>>, %arg2: memref<9x128x128xf32, #tpu.memory_space<vmem>>, %arg3: memref<1x8x8x128xf32, #tpu.memory_space<vmem>>, %arg4: memref<1x8x8x128xf32, #tpu.memory_space<vmem>>) attributes {dimension_semantics = [#tpu.dimension_semantics<parallel>], iteration_bounds = array<i64: 2>, scalar_prefetch = 0 : i64, scratch_operands = 0 : i64, tpu.core_type = #tpu.core_type<tc>, window_params = [{transform_indices = @transform_0, window_bounds = array<i64: 1, 10, 16, 128>}, {pipeline_mode = #tpu.pipeline_mode<synchronous>, transform_indices = @transform_1, window_bounds = array<i64: 9, 128, 128>}, {transform_indices = @transform_2, window_bounds = array<i64: 1, 8, 8, 128>}, {transform_indices = @transform_3, window_bounds = array<i64: 1, 8, 8, 128>}]} {
    %c0 = arith.constant 0 : index
    %c0_0 = arith.constant 0 : index
    %c0_1 = arith.constant 0 : index
    %c0_2 = arith.constant 0 : index
    %0 = vector.load %arg3[%c0, %c0_0, %c0_1, %c0_2] : memref<1x8x8x128xf32, #tpu.memory_space<vmem>>, vector<1x8x8x128xf32>
    %1 = vector.shape_cast %0 : vector<1x8x8x128xf32> to vector<8x8x128xf32>
    %2 = vector.shape_cast %1 : vector<8x8x128xf32> to vector<64x128xf32>
    %c0_3 = arith.constant 0 : index
    %c0_4 = arith.constant 0 : index
    %c0_5 = arith.constant 0 : index
    %c0_6 = arith.constant 0 : index
    %3 = vector.load %arg1[%c0_3, %c0_4, %c0_5, %c0_6] : memref<1x10x16x128xf32, #tpu.memory_space<vmem>>, vector<1x8x8x128xf32>
    %4 = vector.shape_cast %3 : vector<1x8x8x128xf32> to vector<8x8x128xf32>
    %5 = vector.shape_cast %4 : vector<8x8x128xf32> to vector<64x128xf32>
    %c0_7 = arith.constant 0 : index
    %c0_8 = arith.constant 0 : index
    %c0_9 = arith.constant 0 : index
    %6 = vector.load %arg2[%c0_7, %c0_8, %c0_9] : memref<9x128x128xf32, #tpu.memory_space<vmem>>, vector<1x128x128xf32>
    %7 = vector.shape_cast %6 : vector<1x128x128xf32> to vector<128x128xf32>
    %cst = arith.constant dense<0.000000e+00> : vector<64x128xf32>
    %8 = tpu.matmul %5, %7, %cst {dimension_numbers = #tpu.dot_dimension_numbers<[1], [0], [0], [1], [0, 0, 1, 1], [], []>} : vector<64x128xf32>, vector<128x128xf32>, vector<64x128xf32> -> vector<64x128xf32>
    %9 = arith.addf %2, %8 : vector<64x128xf32>
    %c0_10 = arith.constant 0 : index
    %c0_11 = arith.constant 0 : index
    %c1 = arith.constant 1 : index
    %c0_12 = arith.constant 0 : index
    %10 = vector.load %arg1[%c0_10, %c0_11, %c1, %c0_12] : memref<1x10x16x128xf32, #tpu.memory_space<vmem>>, vector<1x8x8x128xf32>
    %11 = vector.shape_cast %10 : vector<1x8x8x128xf32> to vector<8x8x128xf32>
    %12 = vector.shape_cast %11 : vector<8x8x128xf32> to vector<64x128xf32>
    %c1_13 = arith.constant 1 : index
    %c0_14 = arith.constant 0 : index
    %c0_15 = arith.constant 0 : index
    %13 = vector.load %arg2[%c1_13, %c0_14, %c0_15] : memref<9x128x128xf32, #tpu.memory_space<vmem>>, vector<1x128x128xf32>
    %14 = vector.shape_cast %13 : vector<1x128x128xf32> to vector<128x128xf32>
    %cst_16 = arith.constant dense<0.000000e+00> : vector<64x128xf32>
    %15 = tpu.matmul %12, %14, %cst_16 {dimension_numbers = #tpu.dot_dimension_numbers<[1], [0], [0], [1], [0, 0, 1, 1], [], []>} : vector<64x128xf32>, vector<128x128xf32>, vector<64x128xf32> -> vector<64x128xf32>
    %16 = arith.addf %9, %15 : vector<64x128xf32>
    %c0_17 = arith.constant 0 : index
    %c0_18 = arith.constant 0 : index
    %c2 = arith.constant 2 : index
    %c0_19 = arith.constant 0 : index
    %17 = vector.load %arg1[%c0_17, %c0_18, %c2, %c0_19] : memref<1x10x16x128xf32, #tpu.memory_space<vmem>>, vector<1x8x8x128xf32>
    %18 = vector.shape_cast %17 : vector<1x8x8x128xf32> to vector<8x8x128xf32>
    %19 = vector.shape_cast %18 : vector<8x8x128xf32> to vector<64x128xf32>
    %c2_20 = arith.constant 2 : index
    %c0_21 = arith.constant 0 : index
    %c0_22 = arith.constant 0 : index
    %20 = vector.load %arg2[%c2_20, %c0_21, %c0_22] : memref<9x128x128xf32, #tpu.memory_space<vmem>>, vector<1x128x128xf32>
    %21 = vector.shape_cast %20 : vector<1x128x128xf32> to vector<128x128xf32>
    %cst_23 = arith.constant dense<0.000000e+00> : vector<64x128xf32>
    %22 = tpu.matmul %19, %21, %cst_23 {dimension_numbers = #tpu.dot_dimension_numbers<[1], [0], [0], [1], [0, 0, 1, 1], [], []>} : vector<64x128xf32>, vector<128x128xf32>, vector<64x128xf32> -> vector<64x128xf32>
    %23 = arith.addf %16, %22 : vector<64x128xf32>
    %c0_24 = arith.constant 0 : index
    %c1_25 = arith.constant 1 : index
    %c0_26 = arith.constant 0 : index
    %c0_27 = arith.constant 0 : index
    %24 = vector.load %arg1[%c0_24, %c1_25, %c0_26, %c0_27] : memref<1x10x16x128xf32, #tpu.memory_space<vmem>>, vector<1x8x8x128xf32>
    %25 = vector.shape_cast %24 : vector<1x8x8x128xf32> to vector<8x8x128xf32>
    %26 = vector.shape_cast %25 : vector<8x8x128xf32> to vector<64x128xf32>
    %c3 = arith.constant 3 : index
    %c0_28 = arith.constant 0 : index
    %c0_29 = arith.constant 0 : index
    %27 = vector.load %arg2[%c3, %c0_28, %c0_29] : memref<9x128x128xf32, #tpu.memory_space<vmem>>, vector<1x128x128xf32>
    %28 = vector.shape_cast %27 : vector<1x128x128xf32> to vector<128x128xf32>
    %cst_30 = arith.constant dense<0.000000e+00> : vector<64x128xf32>
    %29 = tpu.matmul %26, %28, %cst_30 {dimension_numbers = #tpu.dot_dimension_numbers<[1], [0], [0], [1], [0, 0, 1, 1], [], []>} : vector<64x128xf32>, vector<128x128xf32>, vector<64x128xf32> -> vector<64x128xf32>
    %30 = arith.addf %23, %29 : vector<64x128xf32>
    %c0_31 = arith.constant 0 : index
    %c1_32 = arith.constant 1 : index
    %c1_33 = arith.constant 1 : index
    %c0_34 = arith.constant 0 : index
    %31 = vector.load %arg1[%c0_31, %c1_32, %c1_33, %c0_34] : memref<1x10x16x128xf32, #tpu.memory_space<vmem>>, vector<1x8x8x128xf32>
    %32 = vector.shape_cast %31 : vector<1x8x8x128xf32> to vector<8x8x128xf32>
    %33 = vector.shape_cast %32 : vector<8x8x128xf32> to vector<64x128xf32>
    %c4 = arith.constant 4 : index
    %c0_35 = arith.constant 0 : index
    %c0_36 = arith.constant 0 : index
    %34 = vector.load %arg2[%c4, %c0_35, %c0_36] : memref<9x128x128xf32, #tpu.memory_space<vmem>>, vector<1x128x128xf32>
    %35 = vector.shape_cast %34 : vector<1x128x128xf32> to vector<128x128xf32>
    %cst_37 = arith.constant dense<0.000000e+00> : vector<64x128xf32>
    %36 = tpu.matmul %33, %35, %cst_37 {dimension_numbers = #tpu.dot_dimension_numbers<[1], [0], [0], [1], [0, 0, 1, 1], [], []>} : vector<64x128xf32>, vector<128x128xf32>, vector<64x128xf32> -> vector<64x128xf32>
    %37 = arith.addf %30, %36 : vector<64x128xf32>
    %c0_38 = arith.constant 0 : index
    %c1_39 = arith.constant 1 : index
    %c2_40 = arith.constant 2 : index
    %c0_41 = arith.constant 0 : index
    %38 = vector.load %arg1[%c0_38, %c1_39, %c2_40, %c0_41] : memref<1x10x16x128xf32, #tpu.memory_space<vmem>>, vector<1x8x8x128xf32>
    %39 = vector.shape_cast %38 : vector<1x8x8x128xf32> to vector<8x8x128xf32>
    %40 = vector.shape_cast %39 : vector<8x8x128xf32> to vector<64x128xf32>
    %c5 = arith.constant 5 : index
    %c0_42 = arith.constant 0 : index
    %c0_43 = arith.constant 0 : index
    %41 = vector.load %arg2[%c5, %c0_42, %c0_43] : memref<9x128x128xf32, #tpu.memory_space<vmem>>, vector<1x128x128xf32>
    %42 = vector.shape_cast %41 : vector<1x128x128xf32> to vector<128x128xf32>
    %cst_44 = arith.constant dense<0.000000e+00> : vector<64x128xf32>
    %43 = tpu.matmul %40, %42, %cst_44 {dimension_numbers = #tpu.dot_dimension_numbers<[1], [0], [0], [1], [0, 0, 1, 1], [], []>} : vector<64x128xf32>, vector<128x128xf32>, vector<64x128xf32> -> vector<64x128xf32>
    %44 = arith.addf %37, %43 : vector<64x128xf32>
    %c0_45 = arith.constant 0 : index
    %c2_46 = arith.constant 2 : index
    %c0_47 = arith.constant 0 : index
    %c0_48 = arith.constant 0 : index
    %45 = vector.load %arg1[%c0_45, %c2_46, %c0_47, %c0_48] : memref<1x10x16x128xf32, #tpu.memory_space<vmem>>, vector<1x8x8x128xf32>
    %46 = vector.shape_cast %45 : vector<1x8x8x128xf32> to vector<8x8x128xf32>
    %47 = vector.shape_cast %46 : vector<8x8x128xf32> to vector<64x128xf32>
    %c6 = arith.constant 6 : index
    %c0_49 = arith.constant 0 : index
    %c0_50 = arith.constant 0 : index
    %48 = vector.load %arg2[%c6, %c0_49, %c0_50] : memref<9x128x128xf32, #tpu.memory_space<vmem>>, vector<1x128x128xf32>
    %49 = vector.shape_cast %48 : vector<1x128x128xf32> to vector<128x128xf32>
    %cst_51 = arith.constant dense<0.000000e+00> : vector<64x128xf32>
    %50 = tpu.matmul %47, %49, %cst_51 {dimension_numbers = #tpu.dot_dimension_numbers<[1], [0], [0], [1], [0, 0, 1, 1], [], []>} : vector<64x128xf32>, vector<128x128xf32>, vector<64x128xf32> -> vector<64x128xf32>
    %51 = arith.addf %44, %50 : vector<64x128xf32>
    %c0_52 = arith.constant 0 : index
    %c2_53 = arith.constant 2 : index
    %c1_54 = arith.constant 1 : index
    %c0_55 = arith.constant 0 : index
    %52 = vector.load %arg1[%c0_52, %c2_53, %c1_54, %c0_55] : memref<1x10x16x128xf32, #tpu.memory_space<vmem>>, vector<1x8x8x128xf32>
    %53 = vector.shape_cast %52 : vector<1x8x8x128xf32> to vector<8x8x128xf32>
    %54 = vector.shape_cast %53 : vector<8x8x128xf32> to vector<64x128xf32>
    %c7 = arith.constant 7 : index
    %c0_56 = arith.constant 0 : index
    %c0_57 = arith.constant 0 : index
    %55 = vector.load %arg2[%c7, %c0_56, %c0_57] : memref<9x128x128xf32, #tpu.memory_space<vmem>>, vector<1x128x128xf32>
    %56 = vector.shape_cast %55 : vector<1x128x128xf32> to vector<128x128xf32>
    %cst_58 = arith.constant dense<0.000000e+00> : vector<64x128xf32>
    %57 = tpu.matmul %54, %56, %cst_58 {dimension_numbers = #tpu.dot_dimension_numbers<[1], [0], [0], [1], [0, 0, 1, 1], [], []>} : vector<64x128xf32>, vector<128x128xf32>, vector<64x128xf32> -> vector<64x128xf32>
    %58 = arith.addf %51, %57 : vector<64x128xf32>
    %c0_59 = arith.constant 0 : index
    %c2_60 = arith.constant 2 : index
    %c2_61 = arith.constant 2 : index
    %c0_62 = arith.constant 0 : index
    %59 = vector.load %arg1[%c0_59, %c2_60, %c2_61, %c0_62] : memref<1x10x16x128xf32, #tpu.memory_space<vmem>>, vector<1x8x8x128xf32>
    %60 = vector.shape_cast %59 : vector<1x8x8x128xf32> to vector<8x8x128xf32>
    %61 = vector.shape_cast %60 : vector<8x8x128xf32> to vector<64x128xf32>
    %c8 = arith.constant 8 : index
    %c0_63 = arith.constant 0 : index
    %c0_64 = arith.constant 0 : index
    %62 = vector.load %arg2[%c8, %c0_63, %c0_64] : memref<9x128x128xf32, #tpu.memory_space<vmem>>, vector<1x128x128xf32>
    %63 = vector.shape_cast %62 : vector<1x128x128xf32> to vector<128x128xf32>
    %cst_65 = arith.constant dense<0.000000e+00> : vector<64x128xf32>
    %64 = tpu.matmul %61, %63, %cst_65 {dimension_numbers = #tpu.dot_dimension_numbers<[1], [0], [0], [1], [0, 0, 1, 1], [], []>} : vector<64x128xf32>, vector<128x128xf32>, vector<64x128xf32> -> vector<64x128xf32>
    %65 = arith.addf %58, %64 : vector<64x128xf32>
    %66 = vector.shape_cast %65 : vector<64x128xf32> to vector<8x8x128xf32>
    %c0_66 = arith.constant 0 : index
    %c0_67 = arith.constant 0 : index
    %c0_68 = arith.constant 0 : index
    %c0_69 = arith.constant 0 : index
    %67 = vector.load %arg4[%c0_66, %c0_67, %c0_68, %c0_69] : memref<1x8x8x128xf32, #tpu.memory_space<vmem>>, vector<1x8x8x128xf32>
    %68 = vector.shape_cast %67 : vector<1x8x8x128xf32> to vector<8x8x128xf32>
    %69 = vector.shape_cast %66 : vector<8x8x128xf32> to vector<1x8x8x128xf32>
    tpu.vector_store %arg4[%c0_66, %c0_67, %c0_68, %c0_69], %69 {strides = array<i32>} : memref<1x8x8x128xf32, #tpu.memory_space<vmem>>, vector<1x8x8x128xf32>,
    return
  }
  func.func @transform_0(%arg0: i32) -> (i32, i32, i32, i32) {
    %c0_i32 = arith.constant 0 : i32
    %c0_i32_0 = arith.constant 0 : i32
    %c0_i32_1 = arith.constant 0 : i32
    %c0_i32_2 = arith.constant 0 : i32
    return %arg0, %c0_i32, %c0_i32_0, %c0_i32_1 : i32, i32, i32, i32
  }
  func.func @transform_1(%arg0: i32) -> (i32, i32, i32) {
    %c0_i32 = arith.constant 0 : i32
    %c0_i32_0 = arith.constant 0 : i32
    %c0_i32_1 = arith.constant 0 : i32
    %c0_i32_2 = arith.constant 0 : i32
    return %c0_i32, %c0_i32_0, %c0_i32_1 : i32, i32, i32
  }
  func.func @transform_2(%arg0: i32) -> (i32, i32, i32, i32) {
    %c0_i32 = arith.constant 0 : i32
    %c0_i32_0 = arith.constant 0 : i32
    %c0_i32_1 = arith.constant 0 : i32
    %c0_i32_2 = arith.constant 0 : i32
    return %arg0, %c0_i32, %c0_i32_0, %c0_i32_1 : i32, i32, i32, i32
  }
  func.func @transform_3(%arg0: i32) -> (i32, i32, i32, i32) {
    %c0_i32 = arith.constant 0 : i32
    %c0_i32_0 = arith.constant 0 : i32
    %c0_i32_1 = arith.constant 0 : i32
    %c0_i32_2 = arith.constant 0 : i32
    return %arg0, %c0_i32, %c0_i32_0, %c0_i32_1 : i32, i32, i32, i32
  }
}

module attributes {stable_mosaic.version = 11 : i64} {
  func.func @_stage1_kernel(%arg0: i32, %arg1: memref<1x36x16x128xf32, #tpu.memory_space<vmem>>, %arg2: memref<36x16x1xf32, #tpu.memory_space<vmem>>, %arg3: memref<9x128x128xf32, #tpu.memory_space<vmem>>, %arg4: memref<1x128xf32, #tpu.memory_space<vmem>>, %arg5: memref<1x128xf32, #tpu.memory_space<vmem>>, %arg6: memref<1x128xf32, #tpu.memory_space<vmem>>, %arg7: memref<1x128xf32, #tpu.memory_space<vmem>>, %arg8: memref<128x128xf32, #tpu.memory_space<vmem>>, %arg9: memref<1x8x8x128xf32, #tpu.memory_space<vmem>>, %arg10: memref<1x8x8x128xf32, #tpu.memory_space<vmem>>) attributes {dimension_semantics = [#tpu.dimension_semantics<parallel>], iteration_bounds = array<i64: 2>, scalar_prefetch = 0 : i64, scratch_operands = 0 : i64, tpu.core_type = #tpu.core_type<tc>, window_params = [{transform_indices = @transform_0, window_bounds = array<i64: 1, 36, 16, 128>}, {pipeline_mode = #tpu.pipeline_mode<synchronous>, transform_indices = @transform_1, window_bounds = array<i64: 36, 16, 1>}, {pipeline_mode = #tpu.pipeline_mode<synchronous>, transform_indices = @transform_2, window_bounds = array<i64: 9, 128, 128>}, {pipeline_mode = #tpu.pipeline_mode<synchronous>, transform_indices = @transform_3, window_bounds = array<i64: 1, 128>}, {pipeline_mode = #tpu.pipeline_mode<synchronous>, transform_indices = @transform_4, window_bounds = array<i64: 1, 128>}, {pipeline_mode = #tpu.pipeline_mode<synchronous>, transform_indices = @transform_5, window_bounds = array<i64: 1, 128>}, {pipeline_mode = #tpu.pipeline_mode<synchronous>, transform_indices = @transform_6, window_bounds = array<i64: 1, 128>}, {pipeline_mode = #tpu.pipeline_mode<synchronous>, transform_indices = @transform_7, window_bounds = array<i64: 128, 128>}, {transform_indices = @transform_8, window_bounds = array<i64: 1, 8, 8, 128>}, {transform_indices = @transform_9, window_bounds = array<i64: 1, 8, 8, 128>}]} {
    %c0 = arith.constant 0 : index
    %c0_0 = arith.constant 0 : index
    %c0_1 = arith.constant 0 : index
    %c0_2 = arith.constant 0 : index
    %0 = vector.load %arg1[%c0, %c0_0, %c0_1, %c0_2] : memref<1x36x16x128xf32, #tpu.memory_space<vmem>>, vector<1x36x16x128xf32>
    %1 = vector.shape_cast %0 : vector<1x36x16x128xf32> to vector<36x16x128xf32>
    %c0_3 = arith.constant 0 : index
    %c0_4 = arith.constant 0 : index
    %2 = vector.load %arg4[%c0_3, %c0_4] : memref<1x128xf32, #tpu.memory_space<vmem>>, vector<1x128xf32>
    %3 = vector.shape_cast %2 : vector<1x128xf32> to vector<1x1x128xf32>
    %4 = vector.broadcast %3 : vector<1x1x128xf32> to vector<36x16x128xf32>
    %5 = arith.mulf %1, %4 : vector<36x16x128xf32>
    %c0_5 = arith.constant 0 : index
    %c0_6 = arith.constant 0 : index
    %6 = vector.load %arg5[%c0_5, %c0_6] : memref<1x128xf32, #tpu.memory_space<vmem>>, vector<1x128xf32>
    %7 = vector.shape_cast %6 : vector<1x128xf32> to vector<1x1x128xf32>
    %8 = vector.broadcast %7 : vector<1x1x128xf32> to vector<36x16x128xf32>
    %9 = arith.addf %5, %8 : vector<36x16x128xf32>
    %cst = arith.constant 0.000000e+00 : f32
    %10 = vector.broadcast %cst : f32 to vector<36x16x128xf32>
    %11 = arith.maximumf %9, %10 : vector<36x16x128xf32>
    %c0_7 = arith.constant 0 : index
    %c0_8 = arith.constant 0 : index
    %c0_9 = arith.constant 0 : index
    %12 = vector.load %arg2[%c0_7, %c0_8, %c0_9] : memref<36x16x1xf32, #tpu.memory_space<vmem>>, vector<36x16x1xf32>
    %13 = vector.broadcast %12 : vector<36x16x1xf32> to vector<36x16x128xf32>
    %14 = arith.mulf %11, %13 : vector<36x16x128xf32>
    %cst_10 = arith.constant 0.000000e+00 : f32
    %15 = vector.broadcast %cst_10 : f32 to vector<64x128xf32>
    %16 = vector.extract_strided_slice %14 {offsets = [0, 0, 0], sizes = [8, 8, 128], strides = [1, 1, 1]} : vector<36x16x128xf32> to vector<8x8x128xf32>
    %17 = vector.shape_cast %16 : vector<8x8x128xf32> to vector<64x128xf32>
    %c0_11 = arith.constant 0 : index
    %c0_12 = arith.constant 0 : index
    %c0_13 = arith.constant 0 : index
    %18 = vector.load %arg3[%c0_11, %c0_12, %c0_13] : memref<9x128x128xf32, #tpu.memory_space<vmem>>, vector<1x128x128xf32>
    %19 = vector.shape_cast %18 : vector<1x128x128xf32> to vector<128x128xf32>
    %cst_14 = arith.constant dense<0.000000e+00> : vector<64x128xf32>
    %20 = tpu.matmul %17, %19, %cst_14 {dimension_numbers = #tpu.dot_dimension_numbers<[1], [0], [0], [1], [0, 0, 1, 1], [], []>} : vector<64x128xf32>, vector<128x128xf32>, vector<64x128xf32> -> vector<64x128xf32>
    %21 = arith.addf %15, %20 : vector<64x128xf32>
    %22 = vector.extract_strided_slice %14 {offsets = [9, 0, 0], sizes = [8, 8, 128], strides = [1, 1, 1]} : vector<36x16x128xf32> to vector<8x8x128xf32>
    %23 = vector.shape_cast %22 : vector<8x8x128xf32> to vector<64x128xf32>
    %c1 = arith.constant 1 : index
    %c0_15 = arith.constant 0 : index
    %c0_16 = arith.constant 0 : index
    %24 = vector.load %arg3[%c1, %c0_15, %c0_16] : memref<9x128x128xf32, #tpu.memory_space<vmem>>, vector<1x128x128xf32>
    %25 = vector.shape_cast %24 : vector<1x128x128xf32> to vector<128x128xf32>
    %cst_17 = arith.constant dense<0.000000e+00> : vector<64x128xf32>
    %26 = tpu.matmul %23, %25, %cst_17 {dimension_numbers = #tpu.dot_dimension_numbers<[1], [0], [0], [1], [0, 0, 1, 1], [], []>} : vector<64x128xf32>, vector<128x128xf32>, vector<64x128xf32> -> vector<64x128xf32>
    %27 = arith.addf %21, %26 : vector<64x128xf32>
    %28 = vector.extract_strided_slice %14 {offsets = [0, 1, 0], sizes = [8, 8, 128], strides = [1, 1, 1]} : vector<36x16x128xf32> to vector<8x8x128xf32>
    %29 = vector.shape_cast %28 : vector<8x8x128xf32> to vector<64x128xf32>
    %c2 = arith.constant 2 : index
    %c0_18 = arith.constant 0 : index
    %c0_19 = arith.constant 0 : index
    %30 = vector.load %arg3[%c2, %c0_18, %c0_19] : memref<9x128x128xf32, #tpu.memory_space<vmem>>, vector<1x128x128xf32>
    %31 = vector.shape_cast %30 : vector<1x128x128xf32> to vector<128x128xf32>
    %cst_20 = arith.constant dense<0.000000e+00> : vector<64x128xf32>
    %32 = tpu.matmul %29, %31, %cst_20 {dimension_numbers = #tpu.dot_dimension_numbers<[1], [0], [0], [1], [0, 0, 1, 1], [], []>} : vector<64x128xf32>, vector<128x128xf32>, vector<64x128xf32> -> vector<64x128xf32>
    %33 = arith.addf %27, %32 : vector<64x128xf32>
    %34 = vector.extract_strided_slice %14 {offsets = [18, 0, 0], sizes = [8, 8, 128], strides = [1, 1, 1]} : vector<36x16x128xf32> to vector<8x8x128xf32>
    %35 = vector.shape_cast %34 : vector<8x8x128xf32> to vector<64x128xf32>
    %c3 = arith.constant 3 : index
    %c0_21 = arith.constant 0 : index
    %c0_22 = arith.constant 0 : index
    %36 = vector.load %arg3[%c3, %c0_21, %c0_22] : memref<9x128x128xf32, #tpu.memory_space<vmem>>, vector<1x128x128xf32>
    %37 = vector.shape_cast %36 : vector<1x128x128xf32> to vector<128x128xf32>
    %cst_23 = arith.constant dense<0.000000e+00> : vector<64x128xf32>
    %38 = tpu.matmul %35, %37, %cst_23 {dimension_numbers = #tpu.dot_dimension_numbers<[1], [0], [0], [1], [0, 0, 1, 1], [], []>} : vector<64x128xf32>, vector<128x128xf32>, vector<64x128xf32> -> vector<64x128xf32>
    %39 = arith.addf %33, %38 : vector<64x128xf32>
    %40 = vector.extract_strided_slice %14 {offsets = [27, 0, 0], sizes = [8, 8, 128], strides = [1, 1, 1]} : vector<36x16x128xf32> to vector<8x8x128xf32>
    %41 = vector.shape_cast %40 : vector<8x8x128xf32> to vector<64x128xf32>
    %c4 = arith.constant 4 : index
    %c0_24 = arith.constant 0 : index
    %c0_25 = arith.constant 0 : index
    %42 = vector.load %arg3[%c4, %c0_24, %c0_25] : memref<9x128x128xf32, #tpu.memory_space<vmem>>, vector<1x128x128xf32>
    %43 = vector.shape_cast %42 : vector<1x128x128xf32> to vector<128x128xf32>
    %cst_26 = arith.constant dense<0.000000e+00> : vector<64x128xf32>
    %44 = tpu.matmul %41, %43, %cst_26 {dimension_numbers = #tpu.dot_dimension_numbers<[1], [0], [0], [1], [0, 0, 1, 1], [], []>} : vector<64x128xf32>, vector<128x128xf32>, vector<64x128xf32> -> vector<64x128xf32>
    %45 = arith.addf %39, %44 : vector<64x128xf32>
    %46 = vector.extract_strided_slice %14 {offsets = [18, 1, 0], sizes = [8, 8, 128], strides = [1, 1, 1]} : vector<36x16x128xf32> to vector<8x8x128xf32>
    %47 = vector.shape_cast %46 : vector<8x8x128xf32> to vector<64x128xf32>
    %c5 = arith.constant 5 : index
    %c0_27 = arith.constant 0 : index
    %c0_28 = arith.constant 0 : index
    %48 = vector.load %arg3[%c5, %c0_27, %c0_28] : memref<9x128x128xf32, #tpu.memory_space<vmem>>, vector<1x128x128xf32>
    %49 = vector.shape_cast %48 : vector<1x128x128xf32> to vector<128x128xf32>
    %cst_29 = arith.constant dense<0.000000e+00> : vector<64x128xf32>
    %50 = tpu.matmul %47, %49, %cst_29 {dimension_numbers = #tpu.dot_dimension_numbers<[1], [0], [0], [1], [0, 0, 1, 1], [], []>} : vector<64x128xf32>, vector<128x128xf32>, vector<64x128xf32> -> vector<64x128xf32>
    %51 = arith.addf %45, %50 : vector<64x128xf32>
    %52 = vector.extract_strided_slice %14 {offsets = [1, 0, 0], sizes = [8, 8, 128], strides = [1, 1, 1]} : vector<36x16x128xf32> to vector<8x8x128xf32>
    %53 = vector.shape_cast %52 : vector<8x8x128xf32> to vector<64x128xf32>
    %c6 = arith.constant 6 : index
    %c0_30 = arith.constant 0 : index
    %c0_31 = arith.constant 0 : index
    %54 = vector.load %arg3[%c6, %c0_30, %c0_31] : memref<9x128x128xf32, #tpu.memory_space<vmem>>, vector<1x128x128xf32>
    %55 = vector.shape_cast %54 : vector<1x128x128xf32> to vector<128x128xf32>
    %cst_32 = arith.constant dense<0.000000e+00> : vector<64x128xf32>
    %56 = tpu.matmul %53, %55, %cst_32 {dimension_numbers = #tpu.dot_dimension_numbers<[1], [0], [0], [1], [0, 0, 1, 1], [], []>} : vector<64x128xf32>, vector<128x128xf32>, vector<64x128xf32> -> vector<64x128xf32>
    %57 = arith.addf %51, %56 : vector<64x128xf32>
    %58 = vector.extract_strided_slice %14 {offsets = [10, 0, 0], sizes = [8, 8, 128], strides = [1, 1, 1]} : vector<36x16x128xf32> to vector<8x8x128xf32>
    %59 = vector.shape_cast %58 : vector<8x8x128xf32> to vector<64x128xf32>
    %c7 = arith.constant 7 : index
    %c0_33 = arith.constant 0 : index
    %c0_34 = arith.constant 0 : index
    %60 = vector.load %arg3[%c7, %c0_33, %c0_34] : memref<9x128x128xf32, #tpu.memory_space<vmem>>, vector<1x128x128xf32>
    %61 = vector.shape_cast %60 : vector<1x128x128xf32> to vector<128x128xf32>
    %cst_35 = arith.constant dense<0.000000e+00> : vector<64x128xf32>
    %62 = tpu.matmul %59, %61, %cst_35 {dimension_numbers = #tpu.dot_dimension_numbers<[1], [0], [0], [1], [0, 0, 1, 1], [], []>} : vector<64x128xf32>, vector<128x128xf32>, vector<64x128xf32> -> vector<64x128xf32>
    %63 = arith.addf %57, %62 : vector<64x128xf32>
    %64 = vector.extract_strided_slice %14 {offsets = [1, 1, 0], sizes = [8, 8, 128], strides = [1, 1, 1]} : vector<36x16x128xf32> to vector<8x8x128xf32>
    %65 = vector.shape_cast %64 : vector<8x8x128xf32> to vector<64x128xf32>
    %c8 = arith.constant 8 : index
    %c0_36 = arith.constant 0 : index
    %c0_37 = arith.constant 0 : index
    %66 = vector.load %arg3[%c8, %c0_36, %c0_37] : memref<9x128x128xf32, #tpu.memory_space<vmem>>, vector<1x128x128xf32>
    %67 = vector.shape_cast %66 : vector<1x128x128xf32> to vector<128x128xf32>
    %cst_38 = arith.constant dense<0.000000e+00> : vector<64x128xf32>
    %68 = tpu.matmul %65, %67, %cst_38 {dimension_numbers = #tpu.dot_dimension_numbers<[1], [0], [0], [1], [0, 0, 1, 1], [], []>} : vector<64x128xf32>, vector<128x128xf32>, vector<64x128xf32> -> vector<64x128xf32>
    %69 = arith.addf %63, %68 : vector<64x128xf32>
    %c0_39 = arith.constant 0 : index
    %c0_40 = arith.constant 0 : index
    %70 = vector.load %arg6[%c0_39, %c0_40] : memref<1x128xf32, #tpu.memory_space<vmem>>, vector<1x128xf32>
    %71 = vector.broadcast %70 : vector<1x128xf32> to vector<64x128xf32>
    %72 = arith.mulf %69, %71 : vector<64x128xf32>
    %c0_41 = arith.constant 0 : index
    %c0_42 = arith.constant 0 : index
    %73 = vector.load %arg7[%c0_41, %c0_42] : memref<1x128xf32, #tpu.memory_space<vmem>>, vector<1x128xf32>
    %74 = vector.broadcast %73 : vector<1x128xf32> to vector<64x128xf32>
    %75 = arith.addf %72, %74 : vector<64x128xf32>
    %cst_43 = arith.constant 0.000000e+00 : f32
    %76 = vector.broadcast %cst_43 : f32 to vector<64x128xf32>
    %77 = arith.maximumf %75, %76 : vector<64x128xf32>
    %78 = vector.shape_cast %77 : vector<64x128xf32> to vector<8x8x128xf32>
    %c0_44 = arith.constant 0 : index
    %c0_45 = arith.constant 0 : index
    %c0_46 = arith.constant 0 : index
    %c0_47 = arith.constant 0 : index
    %79 = vector.load %arg9[%c0_44, %c0_45, %c0_46, %c0_47] : memref<1x8x8x128xf32, #tpu.memory_space<vmem>>, vector<1x8x8x128xf32>
    %80 = vector.shape_cast %79 : vector<1x8x8x128xf32> to vector<8x8x128xf32>
    %81 = vector.shape_cast %78 : vector<8x8x128xf32> to vector<1x8x8x128xf32>
    tpu.vector_store %arg9[%c0_44, %c0_45, %c0_46, %c0_47], %81 {strides = array<i32>} : memref<1x8x8x128xf32, #tpu.memory_space<vmem>>, vector<1x8x8x128xf32>,
    %c0_48 = arith.constant 0 : index
    %c0_49 = arith.constant 0 : index
    %82 = vector.load %arg8[%c0_48, %c0_49] : memref<128x128xf32, #tpu.memory_space<vmem>>, vector<128x128xf32>
    %cst_50 = arith.constant dense<0.000000e+00> : vector<64x128xf32>
    %83 = tpu.matmul %41, %82, %cst_50 {dimension_numbers = #tpu.dot_dimension_numbers<[1], [0], [0], [1], [0, 0, 1, 1], [], []>} : vector<64x128xf32>, vector<128x128xf32>, vector<64x128xf32> -> vector<64x128xf32>
    %84 = vector.shape_cast %83 : vector<64x128xf32> to vector<8x8x128xf32>
    %c0_51 = arith.constant 0 : index
    %c0_52 = arith.constant 0 : index
    %c0_53 = arith.constant 0 : index
    %c0_54 = arith.constant 0 : index
    %85 = vector.load %arg10[%c0_51, %c0_52, %c0_53, %c0_54] : memref<1x8x8x128xf32, #tpu.memory_space<vmem>>, vector<1x8x8x128xf32>
    %86 = vector.shape_cast %85 : vector<1x8x8x128xf32> to vector<8x8x128xf32>
    %87 = vector.shape_cast %84 : vector<8x8x128xf32> to vector<1x8x8x128xf32>
    tpu.vector_store %arg10[%c0_51, %c0_52, %c0_53, %c0_54], %87 {strides = array<i32>} : memref<1x8x8x128xf32, #tpu.memory_space<vmem>>, vector<1x8x8x128xf32>,
    return
  }
  func.func @transform_0(%arg0: i32) -> (i32, i32, i32, i32) {
    %c0_i32 = arith.constant 0 : i32
    %c0_i32_0 = arith.constant 0 : i32
    %c0_i32_1 = arith.constant 0 : i32
    %c0_i32_2 = arith.constant 0 : i32
    return %arg0, %c0_i32, %c0_i32_0, %c0_i32_1 : i32, i32, i32, i32
  }
  func.func @transform_1(%arg0: i32) -> (i32, i32, i32) {
    %c0_i32 = arith.constant 0 : i32
    %c0_i32_0 = arith.constant 0 : i32
    %c0_i32_1 = arith.constant 0 : i32
    %c0_i32_2 = arith.constant 0 : i32
    return %c0_i32, %c0_i32_0, %c0_i32_1 : i32, i32, i32
  }
  func.func @transform_2(%arg0: i32) -> (i32, i32, i32) {
    %c0_i32 = arith.constant 0 : i32
    %c0_i32_0 = arith.constant 0 : i32
    %c0_i32_1 = arith.constant 0 : i32
    %c0_i32_2 = arith.constant 0 : i32
    return %c0_i32, %c0_i32_0, %c0_i32_1 : i32, i32, i32
  }
  func.func @transform_3(%arg0: i32) -> (i32, i32) {
    %c0_i32 = arith.constant 0 : i32
    %c0_i32_0 = arith.constant 0 : i32
    %c0_i32_1 = arith.constant 0 : i32
    return %c0_i32, %c0_i32_0 : i32, i32
  }
  func.func @transform_4(%arg0: i32) -> (i32, i32) {
    %c0_i32 = arith.constant 0 : i32
    %c0_i32_0 = arith.constant 0 : i32
    %c0_i32_1 = arith.constant 0 : i32
    return %c0_i32, %c0_i32_0 : i32, i32
  }
  func.func @transform_5(%arg0: i32) -> (i32, i32) {
    %c0_i32 = arith.constant 0 : i32
    %c0_i32_0 = arith.constant 0 : i32
    %c0_i32_1 = arith.constant 0 : i32
    return %c0_i32, %c0_i32_0 : i32, i32
  }
  func.func @transform_6(%arg0: i32) -> (i32, i32) {
    %c0_i32 = arith.constant 0 : i32
    %c0_i32_0 = arith.constant 0 : i32
    %c0_i32_1 = arith.constant 0 : i32
    return %c0_i32, %c0_i32_0 : i32, i32
  }
  func.func @transform_7(%arg0: i32) -> (i32, i32) {
    %c0_i32 = arith.constant 0 : i32
    %c0_i32_0 = arith.constant 0 : i32
    %c0_i32_1 = arith.constant 0 : i32
    return %c0_i32, %c0_i32_0 : i32, i32
  }
  func.func @transform_8(%arg0: i32) -> (i32, i32, i32, i32) {
    %c0_i32 = arith.constant 0 : i32
    %c0_i32_0 = arith.constant 0 : i32
    %c0_i32_1 = arith.constant 0 : i32
    %c0_i32_2 = arith.constant 0 : i32
    return %arg0, %c0_i32, %c0_i32_0, %c0_i32_1 : i32, i32, i32, i32
  }
  func.func @transform_9(%arg0: i32) -> (i32, i32, i32, i32) {
    %c0_i32 = arith.constant 0 : i32
    %c0_i32_0 = arith.constant 0 : i32
    %c0_i32_1 = arith.constant 0 : i32
    %c0_i32_2 = arith.constant 0 : i32
    return %arg0, %c0_i32, %c0_i32_0, %c0_i32_1 : i32, i32, i32, i32
  }
}

</mosaic_0001>

<llo_original>
// kernel: preact_block_forward.3
$region0: #{preact_block_forward.3}
  #allocation0 [shape = 'u32[]', space=smem, size = 0x4, offset = 0x4, fixed_abs, tag = 'smem constant byte address 0x4 - core index']
  #allocation1 [shape = 'u32[144,128]{1,0:T(1,128)}', space=vmem, size = 0x12000, scoped, tag = 'internal scratch']
  %s0 = inlined_call_operand.vmem [shape: f32[2,10,16,128], index: 0, kind: input, shape index: {}]
  %s1 = inlined_call_operand.vmem [shape: f32[9,128,128], index: 1, kind: input, shape index: {}]
  %s2 = inlined_call_operand.vmem [shape: f32[2,8,8,128], index: 2, kind: input, shape index: {}]
  %s3 = inlined_call_operand.vmem [shape: f32[2,8,8,128], index: 3, kind: output, shape index: {}]
  %s4 = sld [smem:[#allocation0]]
  $region45: #{preact_block_forward.3} parent=0
    _
  %s6 = ssub.s32 1, %s4
  %s7 = scalar_select 0, %s6, %s4
  loop: start=0, step=1, limit=4
  $region2: #{preact_block_forward.3} parent=0 // loop_pre_header
    _
  $region3: #{preact_block_forward.3} parent=0 // loop_header
    %s9 = sphi 0, %s13
    %p10 = scmp.ge.s32.totalorder %s9, 4
    %s19 = sphi 0, %s21
    %s22 = sphi 0, %s19
    %s23 = sphi 0, %s22
    %s39 = sphi 0, %s23
    %s43 = sphi 0, %s43
    %s45 = sphi 0, %s43
    %s46 = sphi 0, %s45
    %s60 = sphi 0, %s46
    %s66 = sphi 0, %s68
    %s69 = sphi 0, %s66
    %s70 = sphi 0, %s69
    %s86 = sphi 0, %s70
    %s92 = sphi 0, %s94
    %s95 = sphi 0, %s92
    %s96 = sphi 0, %s95
    %s112 = sphi 0, %s96
  $region4: #{preact_block_forward.3} parent=0 // loop_header_branch
    %12 = sbr.rel (%p10) target = $region8
  $region5: #{preact_block_forward.3} parent=0 // loop_body
    %s14 = ssub.s32 %s9, 1
    %s15 = ssub.s32 %s9, 2
    %s16 = sadd.s32 %s9, 1
    %s17 = ssub.s32 %s9, %s16
    %p18 = scmp.eq.s32.totalorder %s17, 0
    %s20 = sadd.s32 %s19, 1
    %s21 = scalar_select %p18, %s19, %s20
    %p24 = pneg %p18
    %p25 = scmp.eq.s32.totalorder %s9, 1
    %p26 = por %p24, %p25
    %p27 = scmp.ne.s32.totalorder %s19, %s22
    %p28 = scmp.eq.s32.totalorder %s9, 0
    %p29 = por %p27, %p28
    %p30 = scmp.ne.s32.totalorder %s19, %s22
    %p31 = scmp.eq.s32.totalorder %s14, 1
    %p32 = por %p30, %p31
    %p33 = scmp.ne.s32.totalorder %s22, %s23
    %p34 = scmp.eq.s32.totalorder %s14, 0
    %p35 = por %p33, %p34
    %p36 = scmp.ne.s32.totalorder %s22, %s23
    %p37 = scmp.eq.s32.totalorder %s15, 1
    %p38 = por %p36, %p37
    %p40 = scmp.ne.s32.totalorder %s23, %s39
    %p41 = scmp.eq.s32.totalorder %s15, 0
    %p42 = por %p40, %p41
    %s44 = sadd.s32 %s43, 1
    %p47 = scmp.eq.s32.totalorder %s9, 1
    %p48 = scmp.ne.s32.totalorder %s43, %s45
    %p49 = scmp.eq.s32.totalorder %s9, 0
    %p50 = por %p48, %p49
    %p51 = scmp.ne.s32.totalorder %s43, %s45
    %p52 = scmp.eq.s32.totalorder %s14, 1
    %p53 = por %p51, %p52
    %p54 = scmp.ne.s32.totalorder %s45, %s46
    %p55 = scmp.eq.s32.totalorder %s14, 0
    %p56 = por %p54, %p55
    %p57 = scmp.ne.s32.totalorder %s45, %s46
    %p58 = scmp.eq.s32.totalorder %s15, 1
    %p59 = por %p57, %p58
    %p61 = scmp.ne.s32.totalorder %s46, %s60
    %p62 = scmp.eq.s32.totalorder %s15, 0
    %p63 = por %p61, %p62
    %s64 = ssub.s32 %s9, %s16
    %p65 = scmp.eq.s32.totalorder %s64, 0
    %s67 = sadd.s32 %s66, 1
    %s68 = scalar_select %p65, %s66, %s67
    %p71 = pneg %p65
    %p72 = scmp.eq.s32.totalorder %s9, 1
    %p73 = por %p71, %p72
    %p74 = scmp.ne.s32.totalorder %s66, %s69
    %p75 = scmp.eq.s32.totalorder %s9, 0
    %p76 = por %p74, %p75
    %p77 = scmp.ne.s32.totalorder %s66, %s69
    %p78 = scmp.eq.s32.totalorder %s14, 1
    %p79 = por %p77, %p78
    %p80 = scmp.ne.s32.totalorder %s69, %s70
    %p81 = scmp.eq.s32.totalorder %s14, 0
    %p82 = por %p80, %p81
    %p83 = scmp.ne.s32.totalorder %s69, %s70
    %p84 = scmp.eq.s32.totalorder %s15, 1
    %p85 = por %p83, %p84
    %p87 = scmp.ne.s32.totalorder %s70, %s86
    %p88 = scmp.eq.s32.totalorder %s15, 0
    %p89 = por %p87, %p88
    %s90 = ssub.s32 %s9, %s16
    %p91 = scmp.eq.s32.totalorder %s90, 0
    %s93 = sadd.s32 %s92, 1
    %s94 = scalar_select %p91, %s92, %s93
    %p97 = pneg %p91
    %p98 = scmp.eq.s32.totalorder %s9, 1
    %p99 = por %p97, %p98
    %p100 = scmp.ne.s32.totalorder %s92, %s95
    %p101 = scmp.eq.s32.totalorder %s9, 0
    %p102 = por %p100, %p101
    %p103 = scmp.ne.s32.totalorder %s92, %s95
    %p104 = scmp.eq.s32.totalorder %s14, 1
    %p105 = por %p103, %p104
    %p106 = scmp.ne.s32.totalorder %s95, %s96
    %p107 = scmp.eq.s32.totalorder %s14, 0
    %p108 = por %p106, %p107
    %p109 = scmp.ne.s32.totalorder %s95, %s96
    %p110 = scmp.eq.s32.totalorder %s15, 1
    %p111 = por %p109, %p110
    %p113 = scmp.ne.s32.totalorder %s96, %s112
    %p114 = scmp.eq.s32.totalorder %s15, 0
    %p115 = por %p113, %p114
    %p116 = scmp.le.s32.totalorder 1, %s9
    %p117 = scmp.lt.s32.totalorder %s9, 3
    %p118 = pnand %p116, %p117
    %p119 = pneg %p118
    // Predicated region
    $region9: #{preact_block_forward.3} parent=5 // pred_check
      _
    $region10: #{preact_block_forward.3} parent=5 // pred_check_branch
      %121 = sbr.rel (%p118) target = $region12
    $region11: #{preact_block_forward.3} parent=5 // pred_region
      %s122 = ssub.s32 %s9, 1
      // Predicated region
      $region13: #{preact_block_forward.3} parent=11 // pred_check
        %p123 = pneg %p56
      $region14: #{preact_block_forward.3} parent=11 // pred_check_branch
        %125 = sbr.rel (%p123) target = $region16
      $region15: #{preact_block_forward.3} parent=11 // pred_region
        _
      $region16: #{preact_block_forward.3} parent=11 // pred_fallthru
        _
    $region12: #{preact_block_forward.3} parent=5 // pred_fallthru
      _
    %p126 = scmp.lt.s32.totalorder %s9, 2
    // Predicated region
    $region17: #{preact_block_forward.3} parent=5 // pred_check
      %p127 = pneg %p126
    $region18: #{preact_block_forward.3} parent=5 // pred_check_branch
      %129 = sbr.rel (%p127) target = $region20
    $region19: #{preact_block_forward.3} parent=5 // pred_region
      // Predicated region
      $region21: #{preact_block_forward.3} parent=19 // pred_check
        %p130 = pneg %p29
      $region22: #{preact_block_forward.3} parent=19 // pred_check_branch
        %132 = sbr.rel (%p130) target = $region24
      $region23: #{preact_block_forward.3} parent=19 // pred_region
        %p133 = scmp.lt.s32.totalorder %s9, 1
        %s134 = scalar_select %p133, %s9, 1
        %s135 = smul.addr %s134, 20
        %s136 = smul.addr %s135, 8
        %s137 = scalar_lea.vmem %s0, %s136
      $region24: #{preact_block_forward.3} parent=19 // pred_fallthru
        _
      // Predicated region
      $region25: #{preact_block_forward.3} parent=19 // pred_check
        %p138 = pneg %p76
      $region26: #{preact_block_forward.3} parent=19 // pred_check_branch
        %140 = sbr.rel (%p138) target = $region28
      $region27: #{preact_block_forward.3} parent=19 // pred_region
        %p141 = scmp.lt.s32.totalorder %s9, 1
        %s142 = scalar_select %p141, %s9, 1
        %s143 = smul.addr %s142, 8
        %s144 = smul.addr %s143, 8
        %s145 = scalar_lea.vmem %s2, %s144
      $region28: #{preact_block_forward.3} parent=19 // pred_fallthru
        _
    $region20: #{preact_block_forward.3} parent=5 // pred_fallthru
      _
    %p146 = scmp.le.s32.totalorder 1, %s9
    %p147 = scmp.lt.s32.totalorder %s9, 3
    %p148 = pnand %p146, %p147
    %p149 = pneg %p148
    // Predicated region
    $region29: #{preact_block_forward.3} parent=5 // pred_check
      _
    $region30: #{preact_block_forward.3} parent=5 // pred_check_branch
      %151 = sbr.rel (%p148) target = $region32
    $region31: #{preact_block_forward.3} parent=5 // pred_region
      %s152 = ssub.s32 %s9, 1
      %p153 = scmp.lt.s32.totalorder %s14, 1
      %s154 = scalar_select %p153, %s14, 1
      %s155 = smul.addr %s154, 20
      %s156 = smul.addr %s155, 8
      %s157 = scalar_lea.vmem %s0, %s156
      %p158 = pneg %p35
      %p159 = pneg %p32
      %p160 = pneg %p56
      %p161 = pneg %p53
      %p162 = scmp.lt.s32.totalorder %s14, 1
      %s163 = scalar_select %p162, %s14, 1
      %s164 = smul.addr %s163, 8
      %s165 = smul.addr %s164, 8
      %s166 = scalar_lea.vmem %s2, %s165
      %p167 = pneg %p82
      %p168 = pneg %p79
      %p169 = pneg %p108
      %p170 = pneg %p105
      %p171 = scmp.lt.s32.totalorder %s14, 1
      %s172 = scalar_select %p171, %s14, 1
      %s173 = smul.addr %s172, 8
      %s174 = smul.addr %s173, 8
      %s175 = scalar_lea.vmem %s3, %s174
      %p176 = scmp.lt.s32.totalorder %s14, 1
      %s177 = scalar_select %p176, %s14, 1
      %s178 = smul.addr %s177, 20
      %s179 = smul.addr %s178, 8
      %s180 = scalar_lea.vmem %s0, %s179
      %p181 = scmp.lt.s32.totalorder %s14, 1
      %s182 = scalar_select %p181, %s14, 1
      %s183 = smul.addr %s182, 8
      %s184 = smul.addr %s183, 8
      %s185 = scalar_lea.vmem %s2, %s184
      %p186 = scmp.lt.s32.totalorder %s14, 1
      %s187 = scalar_select %p186, %s14, 1
      %s188 = smul.addr %s187, 8
      %s189 = smul.addr %s188, 8
      %s190 = scalar_lea.vmem %s3, %s189
      %v191 = vld [vmem:[%s185] sm:$0xff]
      %v192 = vld [vmem:[%s185 + $0x8] sm:$0xff]
      %v193 = vld [vmem:[%s185 + $0x10] sm:$0xff]
      %v194 = vld [vmem:[%s185 + $0x18] sm:$0xff]
      %v195 = vld [vmem:[%s185 + $0x20] sm:$0xff]
      %v196 = vld [vmem:[%s185 + $0x28] sm:$0xff]
      %v197 = vld [vmem:[%s185 + $0x30] sm:$0xff]
      %v198 = vld [vmem:[%s185 + $0x38] sm:$0xff]
      %v199 = vld [vmem:[%s180] sm:$0xff]
      %v200 = vld [vmem:[%s180 + $0x10] sm:$0xff]
      %v201 = vld [vmem:[%s180 + $0x20] sm:$0xff]
      %v202 = vld [vmem:[%s180 + $0x30] sm:$0xff]
      %v203 = vld [vmem:[%s180 + $0x40] sm:$0xff]
      %v204 = vld [vmem:[%s180 + $0x50] sm:$0xff]
      %v205 = vld [vmem:[%s180 + $0x60] sm:$0xff]
      %v206 = vld [vmem:[%s180 + $0x70] sm:$0xff]
      %v207 = vld [vmem:[%s1] sm:$0xff]
      %v208 = vld [vmem:[%s1 + $0x8] sm:$0xff]
      %v209 = vld [vmem:[%s1 + $0x10] sm:$0xff]
      %v210 = vld [vmem:[%s1 + $0x18] sm:$0xff]
      %v211 = vld [vmem:[%s1 + $0x20] sm:$0xff]
      %v212 = vld [vmem:[%s1 + $0x28] sm:$0xff]
      %v213 = vld [vmem:[%s1 + $0x30] sm:$0xff]
      %v214 = vld [vmem:[%s1 + $0x38] sm:$0xff]
      %v215 = vld [vmem:[%s1 + $0x40] sm:$0xff]
      %v216 = vld [vmem:[%s1 + $0x48] sm:$0xff]
      %v217 = vld [vmem:[%s1 + $0x50] sm:$0xff]
      %v218 = vld [vmem:[%s1 + $0x58] sm:$0xff]
      %v219 = vld [vmem:[%s1 + $0x60] sm:$0xff]
      %v220 = vld [vmem:[%s1 + $0x68] sm:$0xff]
      %v221 = vld [vmem:[%s1 + $0x70] sm:$0xff]
      %v222 = vld [vmem:[%s1 + $0x78] sm:$0xff]
      %223 = vmatprep.subr.mxu0 0.0
      %224 = vmatpush1.msra.mxu0 %v222
      %225 = vmatprep.subr.mxu0 0.0
      %226 = vmatpush1.msra.mxu0 %v221
      %227 = vmatprep.subr.mxu0 0.0
      %228 = vmatpush1.msra.mxu0 %v220
      %229 = vmatprep.subr.mxu0 0.0
      %230 = vmatpush1.msra.mxu0 %v219
      %231 = vmatprep.subr.mxu0 0.0
      %232 = vmatpush1.msra.mxu0 %v218
      %233 = vmatprep.subr.mxu0 0.0
      %234 = vmatpush1.msra.mxu0 %v217
      %235 = vmatprep.subr.mxu0 0.0
      %236 = vmatpush1.msra.mxu0 %v216
      %237 = vmatprep.subr.mxu0 0.0
      %238 = vmatpush1.msra.mxu0 %v215
      %239 = vmatprep.subr.mxu0 0.0
      %240 = vmatpush1.msra.mxu0 %v214
      %241 = vmatprep.subr.mxu0 0.0
      %242 = vmatpush1.msra.mxu0 %v213
      %243 = vmatprep.subr.mxu0 0.0
      %244 = vmatpush1.msra.mxu0 %v212
      %245 = vmatprep.subr.mxu0 0.0
      %246 = vmatpush1.msra.mxu0 %v211
      %247 = vmatprep.subr.mxu0 0.0
      %248 = vmatpush1.msra.mxu0 %v210
      %249 = vmatprep.subr.mxu0 0.0
      %250 = vmatpush1.msra.mxu0 %v209
      %251 = vmatprep.subr.mxu0 0.0
      %252 = vmatpush1.msra.mxu0 %v208
      %253 = vmatprep.subr.mxu0 0.0
      %254 = vmatpush1.msra.mxu0 %v207
      %255 = vmatprep.subr.mxu0 0.0
      %256 = vmatpush2.msra.mxu0 0.0
      %257 = vmatprep.subr.mxu0 0.0
      %258 = vmatpush2.msra.mxu0 0.0
      %259 = vmatprep.subr.mxu0 0.0
      %260 = vmatpush2.msra.mxu0 0.0
      %261 = vmatprep.subr.mxu0 0.0
      %262 = vmatpush2.msra.mxu0 0.0
      %263 = vmatprep.subr.mxu0 0.0
      %264 = vmatpush2.msra.mxu0 0.0
      %265 = vmatprep.subr.mxu0 0.0
      %266 = vmatpush2.msra.mxu0 0.0
      %267 = vmatprep.subr.mxu0 0.0
      %268 = vmatpush2.msra.mxu0 0.0
      %269 = vmatprep.subr.mxu0 0.0
      %270 = vmatpush2.msra.mxu0 0.0
      %271 = vmatprep.subr.mxu0 0.0
      %272 = vmatpush2.msra.mxu0 0.0
      %273 = vmatprep.subr.mxu0 0.0
      %274 = vmatpush2.msra.mxu0 0.0
      %275 = vmatprep.subr.mxu0 0.0
      %276 = vmatpush2.msra.mxu0 0.0
      %277 = vmatprep.subr.mxu0 0.0
      %278 = vmatpush2.msra.mxu0 0.0
      %279 = vmatprep.subr.mxu0 0.0
      %280 = vmatpush2.msra.mxu0 0.0
      %281 = vmatprep.subr.mxu0 0.0
      %282 = vmatpush2.msra.mxu0 0.0
      %283 = vmatprep.subr.mxu0 0.0
      %284 = vmatpush2.msra.mxu0 0.0
      %285 = vmatprep.subr.mxu0 0.0
      %286 = vmatpush2.msra.mxu0 0.0
      %287 = vmatprep.mubr.f32.mxu0 0.0
      %288 = vmatmul.mubr.f32.gmra.mxu0 %v199
      %v289 = vpop.f32.mrf.mxu0
      %v290 = vadd.f32 0.0, %v289
      %v291 = vpop.f32.mrf.mxu0
      %292 = vmatprep.mubr.f32.mxu0 0.0
      %293 = vmatmul.mubr.f32.gmra.mxu0 %v200
      %v294 = vpop.f32.mrf.mxu0
      %v295 = vadd.f32 0.0, %v294
      %v296 = vpop.f32.mrf.mxu0
      %297 = vmatprep.mubr.f32.mxu0 0.0
      %298 = vmatmul.mubr.f32.gmra.mxu0 %v201
      %v299 = vpop.f32.mrf.mxu0
      %v300 = vadd.f32 0.0, %v299
      %v301 = vpop.f32.mrf.mxu0
      %302 = vmatprep.mubr.f32.mxu0 0.0
      %303 = vmatmul.mubr.f32.gmra.mxu0 %v202
      %v304 = vpop.f32.mrf.mxu0
      %v305 = vadd.f32 0.0, %v304
      %v306 = vpop.f32.mrf.mxu0
      %307 = vmatprep.mubr.f32.mxu0 0.0
      %308 = vmatmul.mubr.f32.gmra.mxu0 %v203
      %v309 = vpop.f32.mrf.mxu0
      %v310 = vadd.f32 0.0, %v309
      %v311 = vpop.f32.mrf.mxu0
      %312 = vmatprep.mubr.f32.mxu0 0.0
      %313 = vmatmul.mubr.f32.gmra.mxu0 %v204
      %v314 = vpop.f32.mrf.mxu0
      %v315 = vadd.f32 0.0, %v314
      %v316 = vpop.f32.mrf.mxu0
      %317 = vmatprep.mubr.f32.mxu0 0.0
      %318 = vmatmul.mubr.f32.gmra.mxu0 %v205
      %v319 = vpop.f32.mrf.mxu0
      %v320 = vadd.f32 0.0, %v319
      %v321 = vpop.f32.mrf.mxu0
      %322 = vmatprep.mubr.f32.mxu0 0.0
      %323 = vmatmul.mubr.f32.gmra.mxu0 %v206
      %v324 = vpop.f32.mrf.mxu0
      %v325 = vadd.f32 0.0, %v324
      %v326 = vpop.f32.mrf.mxu0
      %327 = vdwg.mxu0
      %v328 = vadd.f32 %v191, %v290
      %v329 = vadd.f32 %v192, %v295
      %v330 = vadd.f32 %v193, %v300
      %v331 = vadd.f32 %v194, %v305
      %v332 = vadd.f32 %v195, %v310
      %v333 = vadd.f32 %v196, %v315
      %v334 = vadd.f32 %v197, %v320
      %v335 = vadd.f32 %v198, %v325
      %v336 = vld [vmem:[%s180 + $0x1] sm:$0xff]
      %v337 = vld [vmem:[%s180 + $0x11] sm:$0xff]
      %v338 = vld [vmem:[%s180 + $0x21] sm:$0xff]
      %v339 = vld [vmem:[%s180 + $0x31] sm:$0xff]
      %v340 = vld [vmem:[%s180 + $0x41] sm:$0xff]
      %v341 = vld [vmem:[%s180 + $0x51] sm:$0xff]
      %v342 = vld [vmem:[%s180 + $0x61] sm:$0xff]
      %v343 = vld [vmem:[%s180 + $0x71] sm:$0xff]
      %s344 = scalar_lea.vmem %s1, 128
      %v345 = vld [vmem:[%s344] sm:$0xff]
      %v346 = vld [vmem:[%s344 + $0x8] sm:$0xff]
      %v347 = vld [vmem:[%s344 + $0x10] sm:$0xff]
      %v348 = vld [vmem:[%s344 + $0x18] sm:$0xff]
      %v349 = vld [vmem:[%s344 + $0x20] sm:$0xff]
      %v350 = vld [vmem:[%s344 + $0x28] sm:$0xff]
      %v351 = vld [vmem:[%s344 + $0x30] sm:$0xff]
      %v352 = vld [vmem:[%s344 + $0x38] sm:$0xff]
      %v353 = vld [vmem:[%s344 + $0x40] sm:$0xff]
      %v354 = vld [vmem:[%s344 + $0x48] sm:$0xff]
      %v355 = vld [vmem:[%s344 + $0x50] sm:$0xff]
      %v356 = vld [vmem:[%s344 + $0x58] sm:$0xff]
      %v357 = vld [vmem:[%s344 + $0x60] sm:$0xff]
      %v358 = vld [vmem:[%s344 + $0x68] sm:$0xff]
      %v359 = vld [vmem:[%s344 + $0x70] sm:$0xff]
      %v360 = vld [vmem:[%s344 + $0x78] sm:$0xff]
      %361 = vmatprep.subr.mxu0 0.0
      %362 = vmatpush1.msra.mxu0 %v360
      %363 = vmatprep.subr.mxu0 0.0
      %364 = vmatpush1.msra.mxu0 %v359
      %365 = vmatprep.subr.mxu0 0.0
      %366 = vmatpush1.msra.mxu0 %v358
      %367 = vmatprep.subr.mxu0 0.0
      %368 = vmatpush1.msra.mxu0 %v357
      %369 = vmatprep.subr.mxu0 0.0
      %370 = vmatpush1.msra.mxu0 %v356
      %371 = vmatprep.subr.mxu0 0.0
      %372 = vmatpush1.msra.mxu0 %v355
      %373 = vmatprep.subr.mxu0 0.0
      %374 = vmatpush1.msra.mxu0 %v354
      %375 = vmatprep.subr.mxu0 0.0
      %376 = vmatpush1.msra.mxu0 %v353
      %377 = vmatprep.subr.mxu0 0.0
      %378 = vmatpush1.msra.mxu0 %v352
      %379 = vmatprep.subr.mxu0 0.0
      %380 = vmatpush1.msra.mxu0 %v351
      %381 = vmatprep.subr.mxu0 0.0
      %382 = vmatpush1.msra.mxu0 %v350
      %383 = vmatprep.subr.mxu0 0.0
      %384 = vmatpush1.msra.mxu0 %v349
      %385 = vmatprep.subr.mxu0 0.0
      %386 = vmatpush1.msra.mxu0 %v348
      %387 = vmatprep.subr.mxu0 0.0
      %388 = vmatpush1.msra.mxu0 %v347
      %389 = vmatprep.subr.mxu0 0.0
      %390 = vmatpush1.msra.mxu0 %v346
      %391 = vmatprep.subr.mxu0 0.0
      %392 = vmatpush1.msra.mxu0 %v345
      %393 = vmatprep.subr.mxu0 0.0
      %394 = vmatpush2.msra.mxu0 0.0
      %395 = vmatprep.subr.mxu0 0.0
      %396 = vmatpush2.msra.mxu0 0.0
      %397 = vmatprep.subr.mxu0 0.0
      %398 = vmatpush2.msra.mxu0 0.0
      %399 = vmatprep.subr.mxu0 0.0
      %400 = vmatpush2.msra.mxu0 0.0
      %401 = vmatprep.subr.mxu0 0.0
      %402 = vmatpush2.msra.mxu0 0.0
      %403 = vmatprep.subr.mxu0 0.0
      %404 = vmatpush2.msra.mxu0 0.0
      %405 = vmatprep.subr.mxu0 0.0
      %406 = vmatpush2.msra.mxu0 0.0
      %407 = vmatprep.subr.mxu0 0.0
      %408 = vmatpush2.msra.mxu0 0.0
      %409 = vmatprep.subr.mxu0 0.0
      %410 = vmatpush2.msra.mxu0 0.0
      %411 = vmatprep.subr.mxu0 0.0
      %412 = vmatpush2.msra.mxu0 0.0
      %413 = vmatprep.subr.mxu0 0.0
      %414 = vmatpush2.msra.mxu0 0.0
      %415 = vmatprep.subr.mxu0 0.0
      %416 = vmatpush2.msra.mxu0 0.0
      %417 = vmatprep.subr.mxu0 0.0
      %418 = vmatpush2.msra.mxu0 0.0
      %419 = vmatprep.subr.mxu0 0.0
      %420 = vmatpush2.msra.mxu0 0.0
      %421 = vmatprep.subr.mxu0 0.0
      %422 = vmatpush2.msra.mxu0 0.0
      %423 = vmatprep.subr.mxu0 0.0
      %424 = vmatpush2.msra.mxu0 0.0
      %425 = vmatprep.mubr.f32.mxu0 0.0
      %426 = vmatmul.mubr.f32.gmra.mxu0 %v336
      %v427 = vpop.f32.mrf.mxu0
      %v428 = vadd.f32 0.0, %v427
      %v429 = vpop.f32.mrf.mxu0
      %430 = vmatprep.mubr.f32.mxu0 0.0
      %431 = vmatmul.mubr.f32.gmra.mxu0 %v337
      %v432 = vpop.f32.mrf.mxu0
      %v433 = vadd.f32 0.0, %v432
      %v434 = vpop.f32.mrf.mxu0
      %435 = vmatprep.mubr.f32.mxu0 0.0
      %436 = vmatmul.mubr.f32.gmra.mxu0 %v338
      %v437 = vpop.f32.mrf.mxu0
      %v438 = vadd.f32 0.0, %v437
      %v439 = vpop.f32.mrf.mxu0
      %440 = vmatprep.mubr.f32.mxu0 0.0
      %441 = vmatmul.mubr.f32.gmra.mxu0 %v339
      %v442 = vpop.f32.mrf.mxu0
      %v443 = vadd.f32 0.0, %v442
      %v444 = vpop.f32.mrf.mxu0
      %445 = vmatprep.mubr.f32.mxu0 0.0
      %446 = vmatmul.mubr.f32.gmra.mxu0 %v340
      %v447 = vpop.f32.mrf.mxu0
      %v448 = vadd.f32 0.0, %v447
      %v449 = vpop.f32.mrf.mxu0
      %450 = vmatprep.mubr.f32.mxu0 0.0
      %451 = vmatmul.mubr.f32.gmra.mxu0 %v341
      %v452 = vpop.f32.mrf.mxu0
      %v453 = vadd.f32 0.0, %v452
      %v454 = vpop.f32.mrf.mxu0
      %455 = vmatprep.mubr.f32.mxu0 0.0
      %456 = vmatmul.mubr.f32.gmra.mxu0 %v342
      %v457 = vpop.f32.mrf.mxu0
      %v458 = vadd.f32 0.0, %v457
      %v459 = vpop.f32.mrf.mxu0
      %460 = vmatprep.mubr.f32.mxu0 0.0
      %461 = vmatmul.mubr.f32.gmra.mxu0 %v343
      %v462 = vpop.f32.mrf.mxu0
      %v463 = vadd.f32 0.0, %v462
      %v464 = vpop.f32.mrf.mxu0
      %465 = vdwg.mxu0
      %v466 = vadd.f32 %v328, %v428
      %v467 = vadd.f32 %v329, %v433
      %v468 = vadd.f32 %v330, %v438
      %v469 = vadd.f32 %v331, %v443
      %v470 = vadd.f32 %v332, %v448
      %v471 = vadd.f32 %v333, %v453
      %v472 = vadd.f32 %v334, %v458
      %v473 = vadd.f32 %v335, %v463
      %v474 = vld [vmem:[%s180 + $0x2] sm:$0xff]
      %v475 = vld [vmem:[%s180 + $0x12] sm:$0xff]
      %v476 = vld [vmem:[%s180 + $0x22] sm:$0xff]
      %v477 = vld [vmem:[%s180 + $0x32] sm:$0xff]
      %v478 = vld [vmem:[%s180 + $0x42] sm:$0xff]
      %v479 = vld [vmem:[%s180 + $0x52] sm:$0xff]
      %v480 = vld [vmem:[%s180 + $0x62] sm:$0xff]
      %v481 = vld [vmem:[%s180 + $0x72] sm:$0xff]
      %s482 = scalar_lea.vmem %s1, 256
      %v483 = vld [vmem:[%s482] sm:$0xff]
      %v484 = vld [vmem:[%s482 + $0x8] sm:$0xff]
      %v485 = vld [vmem:[%s482 + $0x10] sm:$0xff]
      %v486 = vld [vmem:[%s482 + $0x18] sm:$0xff]
      %v487 = vld [vmem:[%s482 + $0x20] sm:$0xff]
      %v488 = vld [vmem:[%s482 + $0x28] sm:$0xff]
      %v489 = vld [vmem:[%s482 + $0x30] sm:$0xff]
      %v490 = vld [vmem:[%s482 + $0x38] sm:$0xff]
      %v491 = vld [vmem:[%s482 + $0x40] sm:$0xff]
      %v492 = vld [vmem:[%s482 + $0x48] sm:$0xff]
      %v493 = vld [vmem:[%s482 + $0x50] sm:$0xff]
      %v494 = vld [vmem:[%s482 + $0x58] sm:$0xff]
      %v495 = vld [vmem:[%s482 + $0x60] sm:$0xff]
      %v496 = vld [vmem:[%s482 + $0x68] sm:$0xff]
      %v497 = vld [vmem:[%s482 + $0x70] sm:$0xff]
      %v498 = vld [vmem:[%s482 + $0x78] sm:$0xff]
      %499 = vmatprep.subr.mxu0 0.0
      %500 = vmatpush1.msra.mxu0 %v498
      %501 = vmatprep.subr.mxu0 0.0
      %502 = vmatpush1.msra.mxu0 %v497
      %503 = vmatprep.subr.mxu0 0.0
      %504 = vmatpush1.msra.mxu0 %v496
      %505 = vmatprep.subr.mxu0 0.0
      %506 = vmatpush1.msra.mxu0 %v495
      %507 = vmatprep.subr.mxu0 0.0
      %508 = vmatpush1.msra.mxu0 %v494
      %509 = vmatprep.subr.mxu0 0.0
      %510 = vmatpush1.msra.mxu0 %v493
      %511 = vmatprep.subr.mxu0 0.0
      %512 = vmatpush1.msra.mxu0 %v492
      %513 = vmatprep.subr.mxu0 0.0
      %514 = vmatpush1.msra.mxu0 %v491
      %515 = vmatprep.subr.mxu0 0.0
      %516 = vmatpush1.msra.mxu0 %v490
      %517 = vmatprep.subr.mxu0 0.0
      %518 = vmatpush1.msra.mxu0 %v489
      %519 = vmatprep.subr.mxu0 0.0
      %520 = vmatpush1.msra.mxu0 %v488
      %521 = vmatprep.subr.mxu0 0.0
      %522 = vmatpush1.msra.mxu0 %v487
      %523 = vmatprep.subr.mxu0 0.0
      %524 = vmatpush1.msra.mxu0 %v486
      %525 = vmatprep.subr.mxu0 0.0
      %526 = vmatpush1.msra.mxu0 %v485
      %527 = vmatprep.subr.mxu0 0.0
      %528 = vmatpush1.msra.mxu0 %v484
      %529 = vmatprep.subr.mxu0 0.0
      %530 = vmatpush1.msra.mxu0 %v483
      %531 = vmatprep.subr.mxu0 0.0
      %532 = vmatpush2.msra.mxu0 0.0
      %533 = vmatprep.subr.mxu0 0.0
      %534 = vmatpush2.msra.mxu0 0.0
      %535 = vmatprep.subr.mxu0 0.0
      %536 = vmatpush2.msra.mxu0 0.0
      %537 = vmatprep.subr.mxu0 0.0
      %538 = vmatpush2.msra.mxu0 0.0
      %539 = vmatprep.subr.mxu0 0.0
      %540 = vmatpush2.msra.mxu0 0.0
      %541 = vmatprep.subr.mxu0 0.0
      %542 = vmatpush2.msra.mxu0 0.0
      %543 = vmatprep.subr.mxu0 0.0
      %544 = vmatpush2.msra.mxu0 0.0
      %545 = vmatprep.subr.mxu0 0.0
      %546 = vmatpush2.msra.mxu0 0.0
      %547 = vmatprep.subr.mxu0 0.0
      %548 = vmatpush2.msra.mxu0 0.0
      %549 = vmatprep.subr.mxu0 0.0
      %550 = vmatpush2.msra.mxu0 0.0
      %551 = vmatprep.subr.mxu0 0.0
      %552 = vmatpush2.msra.mxu0 0.0
      %553 = vmatprep.subr.mxu0 0.0
      %554 = vmatpush2.msra.mxu0 0.0
      %555 = vmatprep.subr.mxu0 0.0
      %556 = vmatpush2.msra.mxu0 0.0
      %557 = vmatprep.subr.mxu0 0.0
      %558 = vmatpush2.msra.mxu0 0.0
      %559 = vmatprep.subr.mxu0 0.0
      %560 = vmatpush2.msra.mxu0 0.0
      %561 = vmatprep.subr.mxu0 0.0
      %562 = vmatpush2.msra.mxu0 0.0
      %563 = vmatprep.mubr.f32.mxu0 0.0
      %564 = vmatmul.mubr.f32.gmra.mxu0 %v474
      %v565 = vpop.f32.mrf.mxu0
      %v566 = vadd.f32 0.0, %v565
      %v567 = vpop.f32.mrf.mxu0
      %568 = vmatprep.mubr.f32.mxu0 0.0
      %569 = vmatmul.mubr.f32.gmra.mxu0 %v475
      %v570 = vpop.f32.mrf.mxu0
      %v571 = vadd.f32 0.0, %v570
      %v572 = vpop.f32.mrf.mxu0
      %573 = vmatprep.mubr.f32.mxu0 0.0
      %574 = vmatmul.mubr.f32.gmra.mxu0 %v476
      %v575 = vpop.f32.mrf.mxu0
      %v576 = vadd.f32 0.0, %v575
      %v577 = vpop.f32.mrf.mxu0
      %578 = vmatprep.mubr.f32.mxu0 0.0
      %579 = vmatmul.mubr.f32.gmra.mxu0 %v477
      %v580 = vpop.f32.mrf.mxu0
      %v581 = vadd.f32 0.0, %v580
      %v582 = vpop.f32.mrf.mxu0
      %583 = vmatprep.mubr.f32.mxu0 0.0
      %584 = vmatmul.mubr.f32.gmra.mxu0 %v478
      %v585 = vpop.f32.mrf.mxu0
      %v586 = vadd.f32 0.0, %v585
      %v587 = vpop.f32.mrf.mxu0
      %588 = vmatprep.mubr.f32.mxu0 0.0
      %589 = vmatmul.mubr.f32.gmra.mxu0 %v479
      %v590 = vpop.f32.mrf.mxu0
      %v591 = vadd.f32 0.0, %v590
      %v592 = vpop.f32.mrf.mxu0
      %593 = vmatprep.mubr.f32.mxu0 0.0
      %594 = vmatmul.mubr.f32.gmra.mxu0 %v480
      %v595 = vpop.f32.mrf.mxu0
      %v596 = vadd.f32 0.0, %v595
      %v597 = vpop.f32.mrf.mxu0
      %598 = vmatprep.mubr.f32.mxu0 0.0
      %599 = vmatmul.mubr.f32.gmra.mxu0 %v481
      %v600 = vpop.f32.mrf.mxu0
      %v601 = vadd.f32 0.0, %v600
      %v602 = vpop.f32.mrf.mxu0
      %603 = vdwg.mxu0
      %v604 = vadd.f32 %v466, %v566
      %v605 = vadd.f32 %v467, %v571
      %v606 = vadd.f32 %v468, %v576
      %v607 = vadd.f32 %v469, %v581
      %v608 = vadd.f32 %v470, %v586
      %v609 = vadd.f32 %v471, %v591
      %v610 = vadd.f32 %v472, %v596
      %v611 = vadd.f32 %v473, %v601
      %s612 = scalar_lea.vmem %s180, 16
      %v613 = vld [vmem:[%s612] sm:$0xff]
      %v614 = vld [vmem:[%s612 + $0x10] sm:$0xff]
      %v615 = vld [vmem:[%s612 + $0x20] sm:$0xff]
      %v616 = vld [vmem:[%s612 + $0x30] sm:$0xff]
      %v617 = vld [vmem:[%s612 + $0x40] sm:$0xff]
      %v618 = vld [vmem:[%s612 + $0x50] sm:$0xff]
      %v619 = vld [vmem:[%s612 + $0x60] sm:$0xff]
      %v620 = vld [vmem:[%s612 + $0x70] sm:$0xff]
      %s621 = scalar_lea.vmem %s1, 384
      %v622 = vld [vmem:[%s621] sm:$0xff]
      %v623 = vld [vmem:[%s621 + $0x8] sm:$0xff]
      %v624 = vld [vmem:[%s621 + $0x10] sm:$0xff]
      %v625 = vld [vmem:[%s621 + $0x18] sm:$0xff]
      %v626 = vld [vmem:[%s621 + $0x20] sm:$0xff]
      %v627 = vld [vmem:[%s621 + $0x28] sm:$0xff]
      %v628 = vld [vmem:[%s621 + $0x30] sm:$0xff]
      %v629 = vld [vmem:[%s621 + $0x38] sm:$0xff]
      %v630 = vld [vmem:[%s621 + $0x40] sm:$0xff]
      %v631 = vld [vmem:[%s621 + $0x48] sm:$0xff]
      %v632 = vld [vmem:[%s621 + $0x50] sm:$0xff]
      %v633 = vld [vmem:[%s621 + $0x58] sm:$0xff]
      %v634 = vld [vmem:[%s621 + $0x60] sm:$0xff]
      %v635 = vld [vmem:[%s621 + $0x68] sm:$0xff]
      %v636 = vld [vmem:[%s621 + $0x70] sm:$0xff]
      %v637 = vld [vmem:[%s621 + $0x78] sm:$0xff]
      %638 = vmatprep.subr.mxu0 0.0
      %639 = vmatpush1.msra.mxu0 %v637
      %640 = vmatprep.subr.mxu0 0.0
      %641 = vmatpush1.msra.mxu0 %v636
      %642 = vmatprep.subr.mxu0 0.0
      %643 = vmatpush1.msra.mxu0 %v635
      %644 = vmatprep.subr.mxu0 0.0
      %645 = vmatpush1.msra.mxu0 %v634
      %646 = vmatprep.subr.mxu0 0.0
      %647 = vmatpush1.msra.mxu0 %v633
      %648 = vmatprep.subr.mxu0 0.0
      %649 = vmatpush1.msra.mxu0 %v632
      %650 = vmatprep.subr.mxu0 0.0
      %651 = vmatpush1.msra.mxu0 %v631
      %652 = vmatprep.subr.mxu0 0.0
      %653 = vmatpush1.msra.mxu0 %v630
      %654 = vmatprep.subr.mxu0 0.0
      %655 = vmatpush1.msra.mxu0 %v629
      %656 = vmatprep.subr.mxu0 0.0
      %657 = vmatpush1.msra.mxu0 %v628
      %658 = vmatprep.subr.mxu0 0.0
      %659 = vmatpush1.msra.mxu0 %v627
      %660 = vmatprep.subr.mxu0 0.0
      %661 = vmatpush1.msra.mxu0 %v626
      %662 = vmatprep.subr.mxu0 0.0
      %663 = vmatpush1.msra.mxu0 %v625
      %664 = vmatprep.subr.mxu0 0.0
      %665 = vmatpush1.msra.mxu0 %v624
      %666 = vmatprep.subr.mxu0 0.0
      %667 = vmatpush1.msra.mxu0 %v623
      %668 = vmatprep.subr.mxu0 0.0
      %669 = vmatpush1.msra.mxu0 %v622
      %670 = vmatprep.subr.mxu0 0.0
      %671 = vmatpush2.msra.mxu0 0.0
      %672 = vmatprep.subr.mxu0 0.0
      %673 = vmatpush2.msra.mxu0 0.0
      %674 = vmatprep.subr.mxu0 0.0
      %675 = vmatpush2.msra.mxu0 0.0
      %676 = vmatprep.subr.mxu0 0.0
      %677 = vmatpush2.msra.mxu0 0.0
      %678 = vmatprep.subr.mxu0 0.0
      %679 = vmatpush2.msra.mxu0 0.0
      %680 = vmatprep.subr.mxu0 0.0
      %681 = vmatpush2.msra.mxu0 0.0
      %682 = vmatprep.subr.mxu0 0.0
      %683 = vmatpush2.msra.mxu0 0.0
      %684 = vmatprep.subr.mxu0 0.0
      %685 = vmatpush2.msra.mxu0 0.0
      %686 = vmatprep.subr.mxu0 0.0
      %687 = vmatpush2.msra.mxu0 0.0
      %688 = vmatprep.subr.mxu0 0.0
      %689 = vmatpush2.msra.mxu0 0.0
      %690 = vmatprep.subr.mxu0 0.0
      %691 = vmatpush2.msra.mxu0 0.0
      %692 = vmatprep.subr.mxu0 0.0
      %693 = vmatpush2.msra.mxu0 0.0
      %694 = vmatprep.subr.mxu0 0.0
      %695 = vmatpush2.msra.mxu0 0.0
      %696 = vmatprep.subr.mxu0 0.0
      %697 = vmatpush2.msra.mxu0 0.0
      %698 = vmatprep.subr.mxu0 0.0
      %699 = vmatpush2.msra.mxu0 0.0
      %700 = vmatprep.subr.mxu0 0.0
      %701 = vmatpush2.msra.mxu0 0.0
      %702 = vmatprep.mubr.f32.mxu0 0.0
      %703 = vmatmul.mubr.f32.gmra.mxu0 %v613
      %v704 = vpop.f32.mrf.mxu0
      %v705 = vadd.f32 0.0, %v704
      %v706 = vpop.f32.mrf.mxu0
      %707 = vmatprep.mubr.f32.mxu0 0.0
      %708 = vmatmul.mubr.f32.gmra.mxu0 %v614
      %v709 = vpop.f32.mrf.mxu0
      %v710 = vadd.f32 0.0, %v709
      %v711 = vpop.f32.mrf.mxu0
      %712 = vmatprep.mubr.f32.mxu0 0.0
      %713 = vmatmul.mubr.f32.gmra.mxu0 %v615
      %v714 = vpop.f32.mrf.mxu0
      %v715 = vadd.f32 0.0, %v714
      %v716 = vpop.f32.mrf.mxu0
      %717 = vmatprep.mubr.f32.mxu0 0.0
      %718 = vmatmul.mubr.f32.gmra.mxu0 %v616
      %v719 = vpop.f32.mrf.mxu0
      %v720 = vadd.f32 0.0, %v719
      %v721 = vpop.f32.mrf.mxu0
      %722 = vmatprep.mubr.f32.mxu0 0.0
      %723 = vmatmul.mubr.f32.gmra.mxu0 %v617
      %v724 = vpop.f32.mrf.mxu0
      %v725 = vadd.f32 0.0, %v724
      %v726 = vpop.f32.mrf.mxu0
      %727 = vmatprep.mubr.f32.mxu0 0.0
      %728 = vmatmul.mubr.f32.gmra.mxu0 %v618
      %v729 = vpop.f32.mrf.mxu0
      %v730 = vadd.f32 0.0, %v729
      %v731 = vpop.f32.mrf.mxu0
      %732 = vmatprep.mubr.f32.mxu0 0.0
      %733 = vmatmul.mubr.f32.gmra.mxu0 %v619
      %v734 = vpop.f32.mrf.mxu0
      %v735 = vadd.f32 0.0, %v734
      %v736 = vpop.f32.mrf.mxu0
      %737 = vmatprep.mubr.f32.mxu0 0.0
      %738 = vmatmul.mubr.f32.gmra.mxu0 %v620
      %v739 = vpop.f32.mrf.mxu0
      %v740 = vadd.f32 0.0, %v739
      %v741 = vpop.f32.mrf.mxu0
      %742 = vdwg.mxu0
      %v743 = vadd.f32 %v604, %v705
      %v744 = vadd.f32 %v605, %v710
      %v745 = vadd.f32 %v606, %v715
      %v746 = vadd.f32 %v607, %v720
      %v747 = vadd.f32 %v608, %v725
      %v748 = vadd.f32 %v609, %v730
      %v749 = vadd.f32 %v610, %v735
      %v750 = vadd.f32 %v611, %v740
      %v751 = vld [vmem:[%s612 + $0x1] sm:$0xff]
      %v752 = vld [vmem:[%s612 + $0x11] sm:$0xff]
      %v753 = vld [vmem:[%s612 + $0x21] sm:$0xff]
      %v754 = vld [vmem:[%s612 + $0x31] sm:$0xff]
      %v755 = vld [vmem:[%s612 + $0x41] sm:$0xff]
      %v756 = vld [vmem:[%s612 + $0x51] sm:$0xff]
      %v757 = vld [vmem:[%s612 + $0x61] sm:$0xff]
      %v758 = vld [vmem:[%s612 + $0x71] sm:$0xff]
      %s759 = scalar_lea.vmem %s1, 512
      %v760 = vld [vmem:[%s759] sm:$0xff]
      %v761 = vld [vmem:[%s759 + $0x8] sm:$0xff]
      %v762 = vld [vmem:[%s759 + $0x10] sm:$0xff]
      %v763 = vld [vmem:[%s759 + $0x18] sm:$0xff]
      %v764 = vld [vmem:[%s759 + $0x20] sm:$0xff]
      %v765 = vld [vmem:[%s759 + $0x28] sm:$0xff]
      %v766 = vld [vmem:[%s759 + $0x30] sm:$0xff]
      %v767 = vld [vmem:[%s759 + $0x38] sm:$0xff]
      %v768 = vld [vmem:[%s759 + $0x40] sm:$0xff]
      %v769 = vld [vmem:[%s759 + $0x48] sm:$0xff]
      %v770 = vld [vmem:[%s759 + $0x50] sm:$0xff]
      %v771 = vld [vmem:[%s759 + $0x58] sm:$0xff]
      %v772 = vld [vmem:[%s759 + $0x60] sm:$0xff]
      %v773 = vld [vmem:[%s759 + $0x68] sm:$0xff]
      %v774 = vld [vmem:[%s759 + $0x70] sm:$0xff]
      %v775 = vld [vmem:[%s759 + $0x78] sm:$0xff]
      %776 = vmatprep.subr.mxu0 0.0
      %777 = vmatpush1.msra.mxu0 %v775
      %778 = vmatprep.subr.mxu0 0.0
      %779 = vmatpush1.msra.mxu0 %v774
      %780 = vmatprep.subr.mxu0 0.0
      %781 = vmatpush1.msra.mxu0 %v773
      %782 = vmatprep.subr.mxu0 0.0
      %783 = vmatpush1.msra.mxu0 %v772
      %784 = vmatprep.subr.mxu0 0.0
      %785 = vmatpush1.msra.mxu0 %v771
      %786 = vmatprep.subr.mxu0 0.0
      %787 = vmatpush1.msra.mxu0 %v770
      %788 = vmatprep.subr.mxu0 0.0
      %789 = vmatpush1.msra.mxu0 %v769
      %790 = vmatprep.subr.mxu0 0.0
      %791 = vmatpush1.msra.mxu0 %v768
      %792 = vmatprep.subr.mxu0 0.0
      %793 = vmatpush1.msra.mxu0 %v767
      %794 = vmatprep.subr.mxu0 0.0
      %795 = vmatpush1.msra.mxu0 %v766
      %796 = vmatprep.subr.mxu0 0.0
      %797 = vmatpush1.msra.mxu0 %v765
      %798 = vmatprep.subr.mxu0 0.0
      %799 = vmatpush1.msra.mxu0 %v764
      %800 = vmatprep.subr.mxu0 0.0
      %801 = vmatpush1.msra.mxu0 %v763
      %802 = vmatprep.subr.mxu0 0.0
      %803 = vmatpush1.msra.mxu0 %v762
      %804 = vmatprep.subr.mxu0 0.0
      %805 = vmatpush1.msra.mxu0 %v761
      %806 = vmatprep.subr.mxu0 0.0
      %807 = vmatpush1.msra.mxu0 %v760
      %808 = vmatprep.subr.mxu0 0.0
      %809 = vmatpush2.msra.mxu0 0.0
      %810 = vmatprep.subr.mxu0 0.0
      %811 = vmatpush2.msra.mxu0 0.0
      %812 = vmatprep.subr.mxu0 0.0
      %813 = vmatpush2.msra.mxu0 0.0
      %814 = vmatprep.subr.mxu0 0.0
      %815 = vmatpush2.msra.mxu0 0.0
      %816 = vmatprep.subr.mxu0 0.0
      %817 = vmatpush2.msra.mxu0 0.0
      %818 = vmatprep.subr.mxu0 0.0
      %819 = vmatpush2.msra.mxu0 0.0
      %820 = vmatprep.subr.mxu0 0.0
      %821 = vmatpush2.msra.mxu0 0.0
      %822 = vmatprep.subr.mxu0 0.0
      %823 = vmatpush2.msra.mxu0 0.0
      %824 = vmatprep.subr.mxu0 0.0
      %825 = vmatpush2.msra.mxu0 0.0
      %826 = vmatprep.subr.mxu0 0.0
      %827 = vmatpush2.msra.mxu0 0.0
      %828 = vmatprep.subr.mxu0 0.0
      %829 = vmatpush2.msra.mxu0 0.0
      %830 = vmatprep.subr.mxu0 0.0
      %831 = vmatpush2.msra.mxu0 0.0
      %832 = vmatprep.subr.mxu0 0.0
      %833 = vmatpush2.msra.mxu0 0.0
      %834 = vmatprep.subr.mxu0 0.0
      %835 = vmatpush2.msra.mxu0 0.0
      %836 = vmatprep.subr.mxu0 0.0
      %837 = vmatpush2.msra.mxu0 0.0
      %838 = vmatprep.subr.mxu0 0.0
      %839 = vmatpush2.msra.mxu0 0.0
      %840 = vmatprep.mubr.f32.mxu0 0.0
      %841 = vmatmul.mubr.f32.gmra.mxu0 %v751
      %v842 = vpop.f32.mrf.mxu0
      %v843 = vadd.f32 0.0, %v842
      %v844 = vpop.f32.mrf.mxu0
      %845 = vmatprep.mubr.f32.mxu0 0.0
      %846 = vmatmul.mubr.f32.gmra.mxu0 %v752
      %v847 = vpop.f32.mrf.mxu0
      %v848 = vadd.f32 0.0, %v847
      %v849 = vpop.f32.mrf.mxu0
      %850 = vmatprep.mubr.f32.mxu0 0.0
      %851 = vmatmul.mubr.f32.gmra.mxu0 %v753
      %v852 = vpop.f32.mrf.mxu0
      %v853 = vadd.f32 0.0, %v852
      %v854 = vpop.f32.mrf.mxu0
      %855 = vmatprep.mubr.f32.mxu0 0.0
      %856 = vmatmul.mubr.f32.gmra.mxu0 %v754
      %v857 = vpop.f32.mrf.mxu0
      %v858 = vadd.f32 0.0, %v857
      %v859 = vpop.f32.mrf.mxu0
      %860 = vmatprep.mubr.f32.mxu0 0.0
      %861 = vmatmul.mubr.f32.gmra.mxu0 %v755
      %v862 = vpop.f32.mrf.mxu0
      %v863 = vadd.f32 0.0, %v862
      %v864 = vpop.f32.mrf.mxu0
      %865 = vmatprep.mubr.f32.mxu0 0.0
      %866 = vmatmul.mubr.f32.gmra.mxu0 %v756
      %v867 = vpop.f32.mrf.mxu0
      %v868 = vadd.f32 0.0, %v867
      %v869 = vpop.f32.mrf.mxu0
      %870 = vmatprep.mubr.f32.mxu0 0.0
      %871 = vmatmul.mubr.f32.gmra.mxu0 %v757
      %v872 = vpop.f32.mrf.mxu0
      %v873 = vadd.f32 0.0, %v872
      %v874 = vpop.f32.mrf.mxu0
      %875 = vmatprep.mubr.f32.mxu0 0.0
      %876 = vmatmul.mubr.f32.gmra.mxu0 %v758
      %v877 = vpop.f32.mrf.mxu0
      %v878 = vadd.f32 0.0, %v877
      %v879 = vpop.f32.mrf.mxu0
      %880 = vdwg.mxu0
      %v881 = vadd.f32 %v743, %v843
      %v882 = vadd.f32 %v744, %v848
      %v883 = vadd.f32 %v745, %v853
      %v884 = vadd.f32 %v746, %v858
      %v885 = vadd.f32 %v747, %v863
      %v886 = vadd.f32 %v748, %v868
      %v887 = vadd.f32 %v749, %v873
      %v888 = vadd.f32 %v750, %v878
      %v889 = vld [vmem:[%s612 + $0x2] sm:$0xff]
      %v890 = vld [vmem:[%s612 + $0x12] sm:$0xff]
      %v891 = vld [vmem:[%s612 + $0x22] sm:$0xff]
      %v892 = vld [vmem:[%s612 + $0x32] sm:$0xff]
      %v893 = vld [vmem:[%s612 + $0x42] sm:$0xff]
      %v894 = vld [vmem:[%s612 + $0x52] sm:$0xff]
      %v895 = vld [vmem:[%s612 + $0x62] sm:$0xff]
      %v896 = vld [vmem:[%s612 + $0x72] sm:$0xff]
      %s897 = scalar_lea.vmem %s1, 640
      %v898 = vld [vmem:[%s897] sm:$0xff]
      %v899 = vld [vmem:[%s897 + $0x8] sm:$0xff]
      %v900 = vld [vmem:[%s897 + $0x10] sm:$0xff]
      %v901 = vld [vmem:[%s897 + $0x18] sm:$0xff]
      %v902 = vld [vmem:[%s897 + $0x20] sm:$0xff]
      %v903 = vld [vmem:[%s897 + $0x28] sm:$0xff]
      %v904 = vld [vmem:[%s897 + $0x30] sm:$0xff]
      %v905 = vld [vmem:[%s897 + $0x38] sm:$0xff]
      %v906 = vld [vmem:[%s897 + $0x40] sm:$0xff]
      %v907 = vld [vmem:[%s897 + $0x48] sm:$0xff]
      %v908 = vld [vmem:[%s897 + $0x50] sm:$0xff]
      %v909 = vld [vmem:[%s897 + $0x58] sm:$0xff]
      %v910 = vld [vmem:[%s897 + $0x60] sm:$0xff]
      %v911 = vld [vmem:[%s897 + $0x68] sm:$0xff]
      %v912 = vld [vmem:[%s897 + $0x70] sm:$0xff]
      %v913 = vld [vmem:[%s897 + $0x78] sm:$0xff]
      %914 = vmatprep.subr.mxu0 0.0
      %915 = vmatpush1.msra.mxu0 %v913
      %916 = vmatprep.subr.mxu0 0.0
      %917 = vmatpush1.msra.mxu0 %v912
      %918 = vmatprep.subr.mxu0 0.0
      %919 = vmatpush1.msra.mxu0 %v911
      %920 = vmatprep.subr.mxu0 0.0
      %921 = vmatpush1.msra.mxu0 %v910
      %922 = vmatprep.subr.mxu0 0.0
      %923 = vmatpush1.msra.mxu0 %v909
      %924 = vmatprep.subr.mxu0 0.0
      %925 = vmatpush1.msra.mxu0 %v908
      %926 = vmatprep.subr.mxu0 0.0
      %927 = vmatpush1.msra.mxu0 %v907
      %928 = vmatprep.subr.mxu0 0.0
      %929 = vmatpush1.msra.mxu0 %v906
      %930 = vmatprep.subr.mxu0 0.0
      %931 = vmatpush1.msra.mxu0 %v905
      %932 = vmatprep.subr.mxu0 0.0
      %933 = vmatpush1.msra.mxu0 %v904
      %934 = vmatprep.subr.mxu0 0.0
      %935 = vmatpush1.msra.mxu0 %v903
      %936 = vmatprep.subr.mxu0 0.0
      %937 = vmatpush1.msra.mxu0 %v902
      %938 = vmatprep.subr.mxu0 0.0
      %939 = vmatpush1.msra.mxu0 %v901
      %940 = vmatprep.subr.mxu0 0.0
      %941 = vmatpush1.msra.mxu0 %v900
      %942 = vmatprep.subr.mxu0 0.0
      %943 = vmatpush1.msra.mxu0 %v899
      %944 = vmatprep.subr.mxu0 0.0
      %945 = vmatpush1.msra.mxu0 %v898
      %946 = vmatprep.subr.mxu0 0.0
      %947 = vmatpush2.msra.mxu0 0.0
      %948 = vmatprep.subr.mxu0 0.0
      %949 = vmatpush2.msra.mxu0 0.0
      %950 = vmatprep.subr.mxu0 0.0
      %951 = vmatpush2.msra.mxu0 0.0
      %952 = vmatprep.subr.mxu0 0.0
      %953 = vmatpush2.msra.mxu0 0.0
      %954 = vmatprep.subr.mxu0 0.0
      %955 = vmatpush2.msra.mxu0 0.0
      %956 = vmatprep.subr.mxu0 0.0
      %957 = vmatpush2.msra.mxu0 0.0
      %958 = vmatprep.subr.mxu0 0.0
      %959 = vmatpush2.msra.mxu0 0.0
      %960 = vmatprep.subr.mxu0 0.0
      %961 = vmatpush2.msra.mxu0 0.0
      %962 = vmatprep.subr.mxu0 0.0
      %963 = vmatpush2.msra.mxu0 0.0
      %964 = vmatprep.subr.mxu0 0.0
      %965 = vmatpush2.msra.mxu0 0.0
      %966 = vmatprep.subr.mxu0 0.0
      %967 = vmatpush2.msra.mxu0 0.0
      %968 = vmatprep.subr.mxu0 0.0
      %969 = vmatpush2.msra.mxu0 0.0
      %970 = vmatprep.subr.mxu0 0.0
      %971 = vmatpush2.msra.mxu0 0.0
      %972 = vmatprep.subr.mxu0 0.0
      %973 = vmatpush2.msra.mxu0 0.0
      %974 = vmatprep.subr.mxu0 0.0
      %975 = vmatpush2.msra.mxu0 0.0
      %976 = vmatprep.subr.mxu0 0.0
      %977 = vmatpush2.msra.mxu0 0.0
      %978 = vmatprep.mubr.f32.mxu0 0.0
      %979 = vmatmul.mubr.f32.gmra.mxu0 %v889
      %v980 = vpop.f32.mrf.mxu0
      %v981 = vadd.f32 0.0, %v980
      %v982 = vpop.f32.mrf.mxu0
      %983 = vmatprep.mubr.f32.mxu0 0.0
      %984 = vmatmul.mubr.f32.gmra.mxu0 %v890
      %v985 = vpop.f32.mrf.mxu0
      %v986 = vadd.f32 0.0, %v985
      %v987 = vpop.f32.mrf.mxu0
      %988 = vmatprep.mubr.f32.mxu0 0.0
      %989 = vmatmul.mubr.f32.gmra.mxu0 %v891
      %v990 = vpop.f32.mrf.mxu0
      %v991 = vadd.f32 0.0, %v990
      %v992 = vpop.f32.mrf.mxu0
      %993 = vmatprep.mubr.f32.mxu0 0.0
      %994 = vmatmul.mubr.f32.gmra.mxu0 %v892
      %v995 = vpop.f32.mrf.mxu0
      %v996 = vadd.f32 0.0, %v995
      %v997 = vpop.f32.mrf.mxu0
      %998 = vmatprep.mubr.f32.mxu0 0.0
      %999 = vmatmul.mubr.f32.gmra.mxu0 %v893
      %v1000 = vpop.f32.mrf.mxu0
      %v1001 = vadd.f32 0.0, %v1000
      %v1002 = vpop.f32.mrf.mxu0
      %1003 = vmatprep.mubr.f32.mxu0 0.0
      %1004 = vmatmul.mubr.f32.gmra.mxu0 %v894
      %v1005 = vpop.f32.mrf.mxu0
      %v1006 = vadd.f32 0.0, %v1005
      %v1007 = vpop.f32.mrf.mxu0
      %1008 = vmatprep.mubr.f32.mxu0 0.0
      %1009 = vmatmul.mubr.f32.gmra.mxu0 %v895
      %v1010 = vpop.f32.mrf.mxu0
      %v1011 = vadd.f32 0.0, %v1010
      %v1012 = vpop.f32.mrf.mxu0
      %1013 = vmatprep.mubr.f32.mxu0 0.0
      %1014 = vmatmul.mubr.f32.gmra.mxu0 %v896
      %v1015 = vpop.f32.mrf.mxu0
      %v1016 = vadd.f32 0.0, %v1015
      %v1017 = vpop.f32.mrf.mxu0
      %1018 = vdwg.mxu0
      %v1019 = vadd.f32 %v881, %v981
      %v1020 = vadd.f32 %v882, %v986
      %v1021 = vadd.f32 %v883, %v991
      %v1022 = vadd.f32 %v884, %v996
      %v1023 = vadd.f32 %v885, %v1001
      %v1024 = vadd.f32 %v886, %v1006
      %v1025 = vadd.f32 %v887, %v1011
      %v1026 = vadd.f32 %v888, %v1016
      %s1027 = scalar_lea.vmem %s180, 32
      %v1028 = vld [vmem:[%s1027] sm:$0xff]
      %v1029 = vld [vmem:[%s1027 + $0x10] sm:$0xff]
      %v1030 = vld [vmem:[%s1027 + $0x20] sm:$0xff]
      %v1031 = vld [vmem:[%s1027 + $0x30] sm:$0xff]
      %v1032 = vld [vmem:[%s1027 + $0x40] sm:$0xff]
      %v1033 = vld [vmem:[%s1027 + $0x50] sm:$0xff]
      %v1034 = vld [vmem:[%s1027 + $0x60] sm:$0xff]
      %v1035 = vld [vmem:[%s1027 + $0x70] sm:$0xff]
      %s1036 = scalar_lea.vmem %s1, 768
      %v1037 = vld [vmem:[%s1036] sm:$0xff]
      %v1038 = vld [vmem:[%s1036 + $0x8] sm:$0xff]
      %v1039 = vld [vmem:[%s1036 + $0x10] sm:$0xff]
      %v1040 = vld [vmem:[%s1036 + $0x18] sm:$0xff]
      %v1041 = vld [vmem:[%s1036 + $0x20] sm:$0xff]
      %v1042 = vld [vmem:[%s1036 + $0x28] sm:$0xff]
      %v1043 = vld [vmem:[%s1036 + $0x30] sm:$0xff]
      %v1044 = vld [vmem:[%s1036 + $0x38] sm:$0xff]
      %v1045 = vld [vmem:[%s1036 + $0x40] sm:$0xff]
      %v1046 = vld [vmem:[%s1036 + $0x48] sm:$0xff]
      %v1047 = vld [vmem:[%s1036 + $0x50] sm:$0xff]
      %v1048 = vld [vmem:[%s1036 + $0x58] sm:$0xff]
      %v1049 = vld [vmem:[%s1036 + $0x60] sm:$0xff]
      %v1050 = vld [vmem:[%s1036 + $0x68] sm:$0xff]
      %v1051 = vld [vmem:[%s1036 + $0x70] sm:$0xff]
      %v1052 = vld [vmem:[%s1036 + $0x78] sm:$0xff]
      %1053 = vmatprep.subr.mxu0 0.0
      %1054 = vmatpush1.msra.mxu0 %v1052
      %1055 = vmatprep.subr.mxu0 0.0
      %1056 = vmatpush1.msra.mxu0 %v1051
      %1057 = vmatprep.subr.mxu0 0.0
      %1058 = vmatpush1.msra.mxu0 %v1050
      %1059 = vmatprep.subr.mxu0 0.0
      %1060 = vmatpush1.msra.mxu0 %v1049
      %1061 = vmatprep.subr.mxu0 0.0
      %1062 = vmatpush1.msra.mxu0 %v1048
      %1063 = vmatprep.subr.mxu0 0.0
      %1064 = vmatpush1.msra.mxu0 %v1047
      %1065 = vmatprep.subr.mxu0 0.0
      %1066 = vmatpush1.msra.mxu0 %v1046
      %1067 = vmatprep.subr.mxu0 0.0
      %1068 = vmatpush1.msra.mxu0 %v1045
      %1069 = vmatprep.subr.mxu0 0.0
      %1070 = vmatpush1.msra.mxu0 %v1044
      %1071 = vmatprep.subr.mxu0 0.0
      %1072 = vmatpush1.msra.mxu0 %v1043
      %1073 = vmatprep.subr.mxu0 0.0
      %1074 = vmatpush1.msra.mxu0 %v1042
      %1075 = vmatprep.subr.mxu0 0.0
      %1076 = vmatpush1.msra.mxu0 %v1041
      %1077 = vmatprep.subr.mxu0 0.0
      %1078 = vmatpush1.msra.mxu0 %v1040
      %1079 = vmatprep.subr.mxu0 0.0
      %1080 = vmatpush1.msra.mxu0 %v1039
      %1081 = vmatprep.subr.mxu0 0.0
      %1082 = vmatpush1.msra.mxu0 %v1038
      %1083 = vmatprep.subr.mxu0 0.0
      %1084 = vmatpush1.msra.mxu0 %v1037
      %1085 = vmatprep.subr.mxu0 0.0
      %1086 = vmatpush2.msra.mxu0 0.0
      %1087 = vmatprep.subr.mxu0 0.0
      %1088 = vmatpush2.msra.mxu0 0.0
      %1089 = vmatprep.subr.mxu0 0.0
      %1090 = vmatpush2.msra.mxu0 0.0
      %1091 = vmatprep.subr.mxu0 0.0
      %1092 = vmatpush2.msra.mxu0 0.0
      %1093 = vmatprep.subr.mxu0 0.0
      %1094 = vmatpush2.msra.mxu0 0.0
      %1095 = vmatprep.subr.mxu0 0.0
      %1096 = vmatpush2.msra.mxu0 0.0
      %1097 = vmatprep.subr.mxu0 0.0
      %1098 = vmatpush2.msra.mxu0 0.0
      %1099 = vmatprep.subr.mxu0 0.0
      %1100 = vmatpush2.msra.mxu0 0.0
      %1101 = vmatprep.subr.mxu0 0.0
      %1102 = vmatpush2.msra.mxu0 0.0
      %1103 = vmatprep.subr.mxu0 0.0
      %1104 = vmatpush2.msra.mxu0 0.0
      %1105 = vmatprep.subr.mxu0 0.0
      %1106 = vmatpush2.msra.mxu0 0.0
      %1107 = vmatprep.subr.mxu0 0.0
      %1108 = vmatpush2.msra.mxu0 0.0
      %1109 = vmatprep.subr.mxu0 0.0
      %1110 = vmatpush2.msra.mxu0 0.0
      %1111 = vmatprep.subr.mxu0 0.0
      %1112 = vmatpush2.msra.mxu0 0.0
      %1113 = vmatprep.subr.mxu0 0.0
      %1114 = vmatpush2.msra.mxu0 0.0
      %1115 = vmatprep.subr.mxu0 0.0
      %1116 = vmatpush2.msra.mxu0 0.0
      %1117 = vmatprep.mubr.f32.mxu0 0.0
      %1118 = vmatmul.mubr.f32.gmra.mxu0 %v1028
      %v1119 = vpop.f32.mrf.mxu0
      %v1120 = vadd.f32 0.0, %v1119
      %v1121 = vpop.f32.mrf.mxu0
      %1122 = vmatprep.mubr.f32.mxu0 0.0
      %1123 = vmatmul.mubr.f32.gmra.mxu0 %v1029
      %v1124 = vpop.f32.mrf.mxu0
      %v1125 = vadd.f32 0.0, %v1124
      %v1126 = vpop.f32.mrf.mxu0
      %1127 = vmatprep.mubr.f32.mxu0 0.0
      %1128 = vmatmul.mubr.f32.gmra.mxu0 %v1030
      %v1129 = vpop.f32.mrf.mxu0
      %v1130 = vadd.f32 0.0, %v1129
      %v1131 = vpop.f32.mrf.mxu0
      %1132 = vmatprep.mubr.f32.mxu0 0.0
      %1133 = vmatmul.mubr.f32.gmra.mxu0 %v1031
      %v1134 = vpop.f32.mrf.mxu0
      %v1135 = vadd.f32 0.0, %v1134
      %v1136 = vpop.f32.mrf.mxu0
      %1137 = vmatprep.mubr.f32.mxu0 0.0
      %1138 = vmatmul.mubr.f32.gmra.mxu0 %v1032
      %v1139 = vpop.f32.mrf.mxu0
      %v1140 = vadd.f32 0.0, %v1139
      %v1141 = vpop.f32.mrf.mxu0
      %1142 = vmatprep.mubr.f32.mxu0 0.0
      %1143 = vmatmul.mubr.f32.gmra.mxu0 %v1033
      %v1144 = vpop.f32.mrf.mxu0
      %v1145 = vadd.f32 0.0, %v1144
      %v1146 = vpop.f32.mrf.mxu0
      %1147 = vmatprep.mubr.f32.mxu0 0.0
      %1148 = vmatmul.mubr.f32.gmra.mxu0 %v1034
      %v1149 = vpop.f32.mrf.mxu0
      %v1150 = vadd.f32 0.0, %v1149
      %v1151 = vpop.f32.mrf.mxu0
      %1152 = vmatprep.mubr.f32.mxu0 0.0
      %1153 = vmatmul.mubr.f32.gmra.mxu0 %v1035
      %v1154 = vpop.f32.mrf.mxu0
      %v1155 = vadd.f32 0.0, %v1154
      %v1156 = vpop.f32.mrf.mxu0
      %1157 = vdwg.mxu0
      %v1158 = vadd.f32 %v1019, %v1120
      %v1159 = vadd.f32 %v1020, %v1125
      %v1160 = vadd.f32 %v1021, %v1130
      %v1161 = vadd.f32 %v1022, %v1135
      %v1162 = vadd.f32 %v1023, %v1140
      %v1163 = vadd.f32 %v1024, %v1145
      %v1164 = vadd.f32 %v1025, %v1150
      %v1165 = vadd.f32 %v1026, %v1155
      %v1166 = vld [vmem:[%s1027 + $0x1] sm:$0xff]
      %v1167 = vld [vmem:[%s1027 + $0x11] sm:$0xff]
      %v1168 = vld [vmem:[%s1027 + $0x21] sm:$0xff]
      %v1169 = vld [vmem:[%s1027 + $0x31] sm:$0xff]
      %v1170 = vld [vmem:[%s1027 + $0x41] sm:$0xff]
      %v1171 = vld [vmem:[%s1027 + $0x51] sm:$0xff]
      %v1172 = vld [vmem:[%s1027 + $0x61] sm:$0xff]
      %v1173 = vld [vmem:[%s1027 + $0x71] sm:$0xff]
      %s1174 = scalar_lea.vmem %s1, 896
      %v1175 = vld [vmem:[%s1174] sm:$0xff]
      %v1176 = vld [vmem:[%s1174 + $0x8] sm:$0xff]
      %v1177 = vld [vmem:[%s1174 + $0x10] sm:$0xff]
      %v1178 = vld [vmem:[%s1174 + $0x18] sm:$0xff]
      %v1179 = vld [vmem:[%s1174 + $0x20] sm:$0xff]
      %v1180 = vld [vmem:[%s1174 + $0x28] sm:$0xff]
      %v1181 = vld [vmem:[%s1174 + $0x30] sm:$0xff]
      %v1182 = vld [vmem:[%s1174 + $0x38] sm:$0xff]
      %v1183 = vld [vmem:[%s1174 + $0x40] sm:$0xff]
      %v1184 = vld [vmem:[%s1174 + $0x48] sm:$0xff]
      %v1185 = vld [vmem:[%s1174 + $0x50] sm:$0xff]
      %v1186 = vld [vmem:[%s1174 + $0x58] sm:$0xff]
      %v1187 = vld [vmem:[%s1174 + $0x60] sm:$0xff]
      %v1188 = vld [vmem:[%s1174 + $0x68] sm:$0xff]
      %v1189 = vld [vmem:[%s1174 + $0x70] sm:$0xff]
      %v1190 = vld [vmem:[%s1174 + $0x78] sm:$0xff]
      %1191 = vmatprep.subr.mxu0 0.0
      %1192 = vmatpush1.msra.mxu0 %v1190
      %1193 = vmatprep.subr.mxu0 0.0
      %1194 = vmatpush1.msra.mxu0 %v1189
      %1195 = vmatprep.subr.mxu0 0.0
      %1196 = vmatpush1.msra.mxu0 %v1188
      %1197 = vmatprep.subr.mxu0 0.0
      %1198 = vmatpush1.msra.mxu0 %v1187
      %1199 = vmatprep.subr.mxu0 0.0
      %1200 = vmatpush1.msra.mxu0 %v1186
      %1201 = vmatprep.subr.mxu0 0.0
      %1202 = vmatpush1.msra.mxu0 %v1185
      %1203 = vmatprep.subr.mxu0 0.0
      %1204 = vmatpush1.msra.mxu0 %v1184
      %1205 = vmatprep.subr.mxu0 0.0
      %1206 = vmatpush1.msra.mxu0 %v1183
      %1207 = vmatprep.subr.mxu0 0.0
      %1208 = vmatpush1.msra.mxu0 %v1182
      %1209 = vmatprep.subr.mxu0 0.0
      %1210 = vmatpush1.msra.mxu0 %v1181
      %1211 = vmatprep.subr.mxu0 0.0
      %1212 = vmatpush1.msra.mxu0 %v1180
      %1213 = vmatprep.subr.mxu0 0.0
      %1214 = vmatpush1.msra.mxu0 %v1179
      %1215 = vmatprep.subr.mxu0 0.0
      %1216 = vmatpush1.msra.mxu0 %v1178
      %1217 = vmatprep.subr.mxu0 0.0
      %1218 = vmatpush1.msra.mxu0 %v1177
      %1219 = vmatprep.subr.mxu0 0.0
      %1220 = vmatpush1.msra.mxu0 %v1176
      %1221 = vmatprep.subr.mxu0 0.0
      %1222 = vmatpush1.msra.mxu0 %v1175
      %1223 = vmatprep.subr.mxu0 0.0
      %1224 = vmatpush2.msra.mxu0 0.0
      %1225 = vmatprep.subr.mxu0 0.0
      %1226 = vmatpush2.msra.mxu0 0.0
      %1227 = vmatprep.subr.mxu0 0.0
      %1228 = vmatpush2.msra.mxu0 0.0
      %1229 = vmatprep.subr.mxu0 0.0
      %1230 = vmatpush2.msra.mxu0 0.0
      %1231 = vmatprep.subr.mxu0 0.0
      %1232 = vmatpush2.msra.mxu0 0.0
      %1233 = vmatprep.subr.mxu0 0.0
      %1234 = vmatpush2.msra.mxu0 0.0
      %1235 = vmatprep.subr.mxu0 0.0
      %1236 = vmatpush2.msra.mxu0 0.0
      %1237 = vmatprep.subr.mxu0 0.0
      %1238 = vmatpush2.msra.mxu0 0.0
      %1239 = vmatprep.subr.mxu0 0.0
      %1240 = vmatpush2.msra.mxu0 0.0
      %1241 = vmatprep.subr.mxu0 0.0
      %1242 = vmatpush2.msra.mxu0 0.0
      %1243 = vmatprep.subr.mxu0 0.0
      %1244 = vmatpush2.msra.mxu0 0.0
      %1245 = vmatprep.subr.mxu0 0.0
      %1246 = vmatpush2.msra.mxu0 0.0
      %1247 = vmatprep.subr.mxu0 0.0
      %1248 = vmatpush2.msra.mxu0 0.0
      %1249 = vmatprep.subr.mxu0 0.0
      %1250 = vmatpush2.msra.mxu0 0.0
      %1251 = vmatprep.subr.mxu0 0.0
      %1252 = vmatpush2.msra.mxu0 0.0
      %1253 = vmatprep.subr.mxu0 0.0
      %1254 = vmatpush2.msra.mxu0 0.0
      %1255 = vmatprep.mubr.f32.mxu0 0.0
      %1256 = vmatmul.mubr.f32.gmra.mxu0 %v1166
      %v1257 = vpop.f32.mrf.mxu0
      %v1258 = vadd.f32 0.0, %v1257
      %v1259 = vpop.f32.mrf.mxu0
      %1260 = vmatprep.mubr.f32.mxu0 0.0
      %1261 = vmatmul.mubr.f32.gmra.mxu0 %v1167
      %v1262 = vpop.f32.mrf.mxu0
      %v1263 = vadd.f32 0.0, %v1262
      %v1264 = vpop.f32.mrf.mxu0
      %1265 = vmatprep.mubr.f32.mxu0 0.0
      %1266 = vmatmul.mubr.f32.gmra.mxu0 %v1168
      %v1267 = vpop.f32.mrf.mxu0
      %v1268 = vadd.f32 0.0, %v1267
      %v1269 = vpop.f32.mrf.mxu0
      %1270 = vmatprep.mubr.f32.mxu0 0.0
      %1271 = vmatmul.mubr.f32.gmra.mxu0 %v1169
      %v1272 = vpop.f32.mrf.mxu0
      %v1273 = vadd.f32 0.0, %v1272
      %v1274 = vpop.f32.mrf.mxu0
      %1275 = vmatprep.mubr.f32.mxu0 0.0
      %1276 = vmatmul.mubr.f32.gmra.mxu0 %v1170
      %v1277 = vpop.f32.mrf.mxu0
      %v1278 = vadd.f32 0.0, %v1277
      %v1279 = vpop.f32.mrf.mxu0
      %1280 = vmatprep.mubr.f32.mxu0 0.0
      %1281 = vmatmul.mubr.f32.gmra.mxu0 %v1171
      %v1282 = vpop.f32.mrf.mxu0
      %v1283 = vadd.f32 0.0, %v1282
      %v1284 = vpop.f32.mrf.mxu0
      %1285 = vmatprep.mubr.f32.mxu0 0.0
      %1286 = vmatmul.mubr.f32.gmra.mxu0 %v1172
      %v1287 = vpop.f32.mrf.mxu0
      %v1288 = vadd.f32 0.0, %v1287
      %v1289 = vpop.f32.mrf.mxu0
      %1290 = vmatprep.mubr.f32.mxu0 0.0
      %1291 = vmatmul.mubr.f32.gmra.mxu0 %v1173
      %v1292 = vpop.f32.mrf.mxu0
      %v1293 = vadd.f32 0.0, %v1292
      %v1294 = vpop.f32.mrf.mxu0
      %1295 = vdwg.mxu0
      %v1296 = vadd.f32 %v1158, %v1258
      %v1297 = vadd.f32 %v1159, %v1263
      %v1298 = vadd.f32 %v1160, %v1268
      %v1299 = vadd.f32 %v1161, %v1273
      %v1300 = vadd.f32 %v1162, %v1278
      %v1301 = vadd.f32 %v1163, %v1283
      %v1302 = vadd.f32 %v1164, %v1288
      %v1303 = vadd.f32 %v1165, %v1293
      %v1304 = vld [vmem:[%s1027 + $0x2] sm:$0xff]
      %v1305 = vld [vmem:[%s1027 + $0x12] sm:$0xff]
      %v1306 = vld [vmem:[%s1027 + $0x22] sm:$0xff]
      %v1307 = vld [vmem:[%s1027 + $0x32] sm:$0xff]
      %v1308 = vld [vmem:[%s1027 + $0x42] sm:$0xff]
      %v1309 = vld [vmem:[%s1027 + $0x52] sm:$0xff]
      %v1310 = vld [vmem:[%s1027 + $0x62] sm:$0xff]
      %v1311 = vld [vmem:[%s1027 + $0x72] sm:$0xff]
      %s1312 = scalar_lea.vmem %s1, 1024
      %v1313 = vld [vmem:[%s1312] sm:$0xff]
      %v1314 = vld [vmem:[%s1312 + $0x8] sm:$0xff]
      %v1315 = vld [vmem:[%s1312 + $0x10] sm:$0xff]
      %v1316 = vld [vmem:[%s1312 + $0x18] sm:$0xff]
      %v1317 = vld [vmem:[%s1312 + $0x20] sm:$0xff]
      %v1318 = vld [vmem:[%s1312 + $0x28] sm:$0xff]
      %v1319 = vld [vmem:[%s1312 + $0x30] sm:$0xff]
      %v1320 = vld [vmem:[%s1312 + $0x38] sm:$0xff]
      %v1321 = vld [vmem:[%s1312 + $0x40] sm:$0xff]
      %v1322 = vld [vmem:[%s1312 + $0x48] sm:$0xff]
      %v1323 = vld [vmem:[%s1312 + $0x50] sm:$0xff]
      %v1324 = vld [vmem:[%s1312 + $0x58] sm:$0xff]
      %v1325 = vld [vmem:[%s1312 + $0x60] sm:$0xff]
      %v1326 = vld [vmem:[%s1312 + $0x68] sm:$0xff]
      %v1327 = vld [vmem:[%s1312 + $0x70] sm:$0xff]
      %v1328 = vld [vmem:[%s1312 + $0x78] sm:$0xff]
      %1329 = vmatprep.subr.mxu0 0.0
      %1330 = vmatpush1.msra.mxu0 %v1328
      %1331 = vmatprep.subr.mxu0 0.0
      %1332 = vmatpush1.msra.mxu0 %v1327
      %1333 = vmatprep.subr.mxu0 0.0
      %1334 = vmatpush1.msra.mxu0 %v1326
      %1335 = vmatprep.subr.mxu0 0.0
      %1336 = vmatpush1.msra.mxu0 %v1325
      %1337 = vmatprep.subr.mxu0 0.0
      %1338 = vmatpush1.msra.mxu0 %v1324
      %1339 = vmatprep.subr.mxu0 0.0
      %1340 = vmatpush1.msra.mxu0 %v1323
      %1341 = vmatprep.subr.mxu0 0.0
      %1342 = vmatpush1.msra.mxu0 %v1322
      %1343 = vmatprep.subr.mxu0 0.0
      %1344 = vmatpush1.msra.mxu0 %v1321
      %1345 = vmatprep.subr.mxu0 0.0
      %1346 = vmatpush1.msra.mxu0 %v1320
      %1347 = vmatprep.subr.mxu0 0.0
      %1348 = vmatpush1.msra.mxu0 %v1319
      %1349 = vmatprep.subr.mxu0 0.0
      %1350 = vmatpush1.msra.mxu0 %v1318
      %1351 = vmatprep.subr.mxu0 0.0
      %1352 = vmatpush1.msra.mxu0 %v1317
      %1353 = vmatprep.subr.mxu0 0.0
      %1354 = vmatpush1.msra.mxu0 %v1316
      %1355 = vmatprep.subr.mxu0 0.0
      %1356 = vmatpush1.msra.mxu0 %v1315
      %1357 = vmatprep.subr.mxu0 0.0
      %1358 = vmatpush1.msra.mxu0 %v1314
      %1359 = vmatprep.subr.mxu0 0.0
      %1360 = vmatpush1.msra.mxu0 %v1313
      %1361 = vmatprep.subr.mxu0 0.0
      %1362 = vmatpush2.msra.mxu0 0.0
      %1363 = vmatprep.subr.mxu0 0.0
      %1364 = vmatpush2.msra.mxu0 0.0
      %1365 = vmatprep.subr.mxu0 0.0
      %1366 = vmatpush2.msra.mxu0 0.0
      %1367 = vmatprep.subr.mxu0 0.0
      %1368 = vmatpush2.msra.mxu0 0.0
      %1369 = vmatprep.subr.mxu0 0.0
      %1370 = vmatpush2.msra.mxu0 0.0
      %1371 = vmatprep.subr.mxu0 0.0
      %1372 = vmatpush2.msra.mxu0 0.0
      %1373 = vmatprep.subr.mxu0 0.0
      %1374 = vmatpush2.msra.mxu0 0.0
      %1375 = vmatprep.subr.mxu0 0.0
      %1376 = vmatpush2.msra.mxu0 0.0
      %1377 = vmatprep.subr.mxu0 0.0
      %1378 = vmatpush2.msra.mxu0 0.0
      %1379 = vmatprep.subr.mxu0 0.0
      %1380 = vmatpush2.msra.mxu0 0.0
      %1381 = vmatprep.subr.mxu0 0.0
      %1382 = vmatpush2.msra.mxu0 0.0
      %1383 = vmatprep.subr.mxu0 0.0
      %1384 = vmatpush2.msra.mxu0 0.0
      %1385 = vmatprep.subr.mxu0 0.0
      %1386 = vmatpush2.msra.mxu0 0.0
      %1387 = vmatprep.subr.mxu0 0.0
      %1388 = vmatpush2.msra.mxu0 0.0
      %1389 = vmatprep.subr.mxu0 0.0
      %1390 = vmatpush2.msra.mxu0 0.0
      %1391 = vmatprep.subr.mxu0 0.0
      %1392 = vmatpush2.msra.mxu0 0.0
      %1393 = vmatprep.mubr.f32.mxu0 0.0
      %1394 = vmatmul.mubr.f32.gmra.mxu0 %v1304
      %v1395 = vpop.f32.mrf.mxu0
      %v1396 = vadd.f32 0.0, %v1395
      %v1397 = vpop.f32.mrf.mxu0
      %1398 = vmatprep.mubr.f32.mxu0 0.0
      %1399 = vmatmul.mubr.f32.gmra.mxu0 %v1305
      %v1400 = vpop.f32.mrf.mxu0
      %v1401 = vadd.f32 0.0, %v1400
      %v1402 = vpop.f32.mrf.mxu0
      %1403 = vmatprep.mubr.f32.mxu0 0.0
      %1404 = vmatmul.mubr.f32.gmra.mxu0 %v1306
      %v1405 = vpop.f32.mrf.mxu0
      %v1406 = vadd.f32 0.0, %v1405
      %v1407 = vpop.f32.mrf.mxu0
      %1408 = vmatprep.mubr.f32.mxu0 0.0
      %1409 = vmatmul.mubr.f32.gmra.mxu0 %v1307
      %v1410 = vpop.f32.mrf.mxu0
      %v1411 = vadd.f32 0.0, %v1410
      %v1412 = vpop.f32.mrf.mxu0
      %1413 = vmatprep.mubr.f32.mxu0 0.0
      %1414 = vmatmul.mubr.f32.gmra.mxu0 %v1308
      %v1415 = vpop.f32.mrf.mxu0
      %v1416 = vadd.f32 0.0, %v1415
      %v1417 = vpop.f32.mrf.mxu0
      %1418 = vmatprep.mubr.f32.mxu0 0.0
      %1419 = vmatmul.mubr.f32.gmra.mxu0 %v1309
      %v1420 = vpop.f32.mrf.mxu0
      %v1421 = vadd.f32 0.0, %v1420
      %v1422 = vpop.f32.mrf.mxu0
      %1423 = vmatprep.mubr.f32.mxu0 0.0
      %1424 = vmatmul.mubr.f32.gmra.mxu0 %v1310
      %v1425 = vpop.f32.mrf.mxu0
      %v1426 = vadd.f32 0.0, %v1425
      %v1427 = vpop.f32.mrf.mxu0
      %1428 = vmatprep.mubr.f32.mxu0 0.0
      %1429 = vmatmul.mubr.f32.gmra.mxu0 %v1311
      %v1430 = vpop.f32.mrf.mxu0
      %v1431 = vadd.f32 0.0, %v1430
      %v1432 = vpop.f32.mrf.mxu0
      %1433 = vdwg.mxu0
      %v1434 = vadd.f32 %v1296, %v1396
      %v1435 = vadd.f32 %v1297, %v1401
      %v1436 = vadd.f32 %v1298, %v1406
      %v1437 = vadd.f32 %v1299, %v1411
      %v1438 = vadd.f32 %v1300, %v1416
      %v1439 = vadd.f32 %v1301, %v1421
      %v1440 = vadd.f32 %v1302, %v1426
      %v1441 = vadd.f32 %v1303, %v1431
      %1442 = vst [vmem:[%s190] sm:$0xff] %v1434
      %1443 = vst [vmem:[%s190 + $0x8] sm:$0xff] %v1435
      %1444 = vst [vmem:[%s190 + $0x10] sm:$0xff] %v1436
      %1445 = vst [vmem:[%s190 + $0x18] sm:$0xff] %v1437
      %1446 = vst [vmem:[%s190 + $0x20] sm:$0xff] %v1438
      %1447 = vst [vmem:[%s190 + $0x28] sm:$0xff] %v1439
      %1448 = vst [vmem:[%s190 + $0x30] sm:$0xff] %v1440
      %1449 = vst [vmem:[%s190 + $0x38] sm:$0xff] %v1441
      %p1450 = scmp.lt.s32.totalorder %s14, 1
      %s1451 = scalar_select %p1450, %s14, 1
      %s1452 = smul.addr %s1451, 8
      %s1453 = smul.addr %s1452, 8
      %s1454 = scalar_lea.vmem %s3, %s1453
      // Predicated region
      $region33: #{preact_block_forward.3} parent=31 // pred_check
        %p1455 = pneg %p105
      $region34: #{preact_block_forward.3} parent=31 // pred_check_branch
        %1457 = sbr.rel (%p1455) target = $region36
      $region35: #{preact_block_forward.3} parent=31 // pred_region
        _
      $region36: #{preact_block_forward.3} parent=31 // pred_fallthru
        _
    $region32: #{preact_block_forward.3} parent=5 // pred_fallthru
      _
    %p1458 = scmp.le.s32.totalorder 2, %s9
    // Predicated region
    $region37: #{preact_block_forward.3} parent=5 // pred_check
      %p1459 = pneg %p1458
    $region38: #{preact_block_forward.3} parent=5 // pred_check_branch
      %1461 = sbr.rel (%p1459) target = $region40
    $region39: #{preact_block_forward.3} parent=5 // pred_region
      %s1462 = ssub.s32 %s9, 2
      // Predicated region
      $region41: #{preact_block_forward.3} parent=39 // pred_check
        %p1463 = pneg %p111
      $region42: #{preact_block_forward.3} parent=39 // pred_check_branch
        %1465 = sbr.rel (%p1463) target = $region44
      $region43: #{preact_block_forward.3} parent=39 // pred_region
        %p1466 = scmp.lt.s32.totalorder %s15, 1
        %s1467 = scalar_select %p1466, %s15, 1
        %s1468 = smul.addr %s1467, 8
        %s1469 = smul.addr %s1468, 8
        %s1470 = scalar_lea.vmem %s3, %s1469
      $region44: #{preact_block_forward.3} parent=39 // pred_fallthru
        _
    $region40: #{preact_block_forward.3} parent=5 // pred_fallthru
      _
  $region6: #{preact_block_forward.3} parent=0 // loop_footer
    %s13 = sadd.s32 1, %s9
  $region7: #{preact_block_forward.3} parent=0 // loop_footer_branch
    %8 = sbr.rel target = $region3
  $region8: #{preact_block_forward.3} parent=0 // loop_exit
    _

// kernel: preact_block_forward.2
$region0: #{preact_block_forward.2}
  #allocation0 [shape = 'u32[]', space=smem, size = 0x4, offset = 0x4, fixed_abs, tag = 'smem constant byte address 0x4 - core index']
  #allocation1 [shape = 'u32[144,128]{1,0:T(1,128)}', space=vmem, size = 0x12000, scoped, tag = 'internal scratch']
  %s0 = inlined_call_operand.vmem [shape: f32[2,36,16,128], index: 0, kind: input, shape index: {}]
  %s1 = inlined_call_operand.vmem [shape: f32[36,16,1], index: 1, kind: input, shape index: {}]
  %s2 = inlined_call_operand.vmem [shape: f32[9,128,128], index: 2, kind: input, shape index: {}]
  %s3 = inlined_call_operand.vmem [shape: f32[1,128], index: 3, kind: input, shape index: {}]
  %s4 = inlined_call_operand.vmem [shape: f32[1,128], index: 4, kind: input, shape index: {}]
  %s5 = inlined_call_operand.vmem [shape: f32[1,128], index: 5, kind: input, shape index: {}]
  %s6 = inlined_call_operand.vmem [shape: f32[1,128], index: 6, kind: input, shape index: {}]
  %s7 = inlined_call_operand.vmem [shape: f32[128,128], index: 7, kind: input, shape index: {}]
  %s8 = inlined_call_operand.vmem [shape: f32[2,8,8,128], index: 8, kind: output, shape index: {0}]
  %s9 = inlined_call_operand.vmem [shape: f32[2,8,8,128], index: 9, kind: output, shape index: {1}]
  %10 = xla_tuple %s8, %s9
  %s11 = sld [smem:[#allocation0]]
  $region73: #{preact_block_forward.2} parent=0
    _
  %s13 = ssub.s32 1, %s11
  %s14 = scalar_select 0, %s13, %s11
  loop: start=0, step=1, limit=4
  $region2: #{preact_block_forward.2} parent=0 // loop_pre_header
    _
  $region3: #{preact_block_forward.2} parent=0 // loop_header
    %s16 = sphi 0, %s20
    %p17 = scmp.ge.s32.totalorder %s16, 4
    %s26 = sphi 0, %s28
    %s29 = sphi 0, %s26
    %s30 = sphi 0, %s29
    %s46 = sphi 0, %s30
    %s50 = sphi 0, %s50
    %s52 = sphi 0, %s50
    %s53 = sphi 0, %s52
    %s67 = sphi 0, %s53
    %s71 = sphi 0, %s71
    %s73 = sphi 0, %s71
    %s74 = sphi 0, %s73
    %s88 = sphi 0, %s74
    %s92 = sphi 0, %s92
    %s94 = sphi 0, %s92
    %s95 = sphi 0, %s94
    %s109 = sphi 0, %s95
    %s113 = sphi 0, %s113
    %s115 = sphi 0, %s113
    %s116 = sphi 0, %s115
    %s130 = sphi 0, %s116
    %s134 = sphi 0, %s134
    %s136 = sphi 0, %s134
    %s137 = sphi 0, %s136
    %s151 = sphi 0, %s137
    %s155 = sphi 0, %s155
    %s157 = sphi 0, %s155
    %s158 = sphi 0, %s157
    %s172 = sphi 0, %s158
    %s176 = sphi 0, %s176
    %s178 = sphi 0, %s176
    %s179 = sphi 0, %s178
    %s193 = sphi 0, %s179
    %s199 = sphi 0, %s201
    %s202 = sphi 0, %s199
    %s203 = sphi 0, %s202
    %s219 = sphi 0, %s203
    %s225 = sphi 0, %s227
    %s228 = sphi 0, %s225
    %s229 = sphi 0, %s228
    %s245 = sphi 0, %s229
  $region4: #{preact_block_forward.2} parent=0 // loop_header_branch
    %19 = sbr.rel (%p17) target = $region8
  $region5: #{preact_block_forward.2} parent=0 // loop_body
    %s21 = ssub.s32 %s16, 1
    %s22 = ssub.s32 %s16, 2
    %s23 = sadd.s32 %s16, 1
    %s24 = ssub.s32 %s16, %s23
    %p25 = scmp.eq.s32.totalorder %s24, 0
    %s27 = sadd.s32 %s26, 1
    %s28 = scalar_select %p25, %s26, %s27
    %p31 = pneg %p25
    %p32 = scmp.eq.s32.totalorder %s16, 1
    %p33 = por %p31, %p32
    %p34 = scmp.ne.s32.totalorder %s26, %s29
    %p35 = scmp.eq.s32.totalorder %s16, 0
    %p36 = por %p34, %p35
    %p37 = scmp.ne.s32.totalorder %s26, %s29
    %p38 = scmp.eq.s32.totalorder %s21, 1
    %p39 = por %p37, %p38
    %p40 = scmp.ne.s32.totalorder %s29, %s30
    %p41 = scmp.eq.s32.totalorder %s21, 0
    %p42 = por %p40, %p41
    %p43 = scmp.ne.s32.totalorder %s29, %s30
    %p44 = scmp.eq.s32.totalorder %s22, 1
    %p45 = por %p43, %p44
    %p47 = scmp.ne.s32.totalorder %s30, %s46
    %p48 = scmp.eq.s32.totalorder %s22, 0
    %p49 = por %p47, %p48
    %s51 = sadd.s32 %s50, 1
    %p54 = scmp.eq.s32.totalorder %s16, 1
    %p55 = scmp.ne.s32.totalorder %s50, %s52
    %p56 = scmp.eq.s32.totalorder %s16, 0
    %p57 = por %p55, %p56
    %p58 = scmp.ne.s32.totalorder %s50, %s52
    %p59 = scmp.eq.s32.totalorder %s21, 1
    %p60 = por %p58, %p59
    %p61 = scmp.ne.s32.totalorder %s52, %s53
    %p62 = scmp.eq.s32.totalorder %s21, 0
    %p63 = por %p61, %p62
    %p64 = scmp.ne.s32.totalorder %s52, %s53
    %p65 = scmp.eq.s32.totalorder %s22, 1
    %p66 = por %p64, %p65
    %p68 = scmp.ne.s32.totalorder %s53, %s67
    %p69 = scmp.eq.s32.totalorder %s22, 0
    %p70 = por %p68, %p69
    %s72 = sadd.s32 %s71, 1
    %p75 = scmp.eq.s32.totalorder %s16, 1
    %p76 = scmp.ne.s32.totalorder %s71, %s73
    %p77 = scmp.eq.s32.totalorder %s16, 0
    %p78 = por %p76, %p77
    %p79 = scmp.ne.s32.totalorder %s71, %s73
    %p80 = scmp.eq.s32.totalorder %s21, 1
    %p81 = por %p79, %p80
    %p82 = scmp.ne.s32.totalorder %s73, %s74
    %p83 = scmp.eq.s32.totalorder %s21, 0
    %p84 = por %p82, %p83
    %p85 = scmp.ne.s32.totalorder %s73, %s74
    %p86 = scmp.eq.s32.totalorder %s22, 1
    %p87 = por %p85, %p86
    %p89 = scmp.ne.s32.totalorder %s74, %s88
    %p90 = scmp.eq.s32.totalorder %s22, 0
    %p91 = por %p89, %p90
    %s93 = sadd.s32 %s92, 1
    %p96 = scmp.eq.s32.totalorder %s16, 1
    %p97 = scmp.ne.s32.totalorder %s92, %s94
    %p98 = scmp.eq.s32.totalorder %s16, 0
    %p99 = por %p97, %p98
    %p100 = scmp.ne.s32.totalorder %s92, %s94
    %p101 = scmp.eq.s32.totalorder %s21, 1
    %p102 = por %p100, %p101
    %p103 = scmp.ne.s32.totalorder %s94, %s95
    %p104 = scmp.eq.s32.totalorder %s21, 0
    %p105 = por %p103, %p104
    %p106 = scmp.ne.s32.totalorder %s94, %s95
    %p107 = scmp.eq.s32.totalorder %s22, 1
    %p108 = por %p106, %p107
    %p110 = scmp.ne.s32.totalorder %s95, %s109
    %p111 = scmp.eq.s32.totalorder %s22, 0
    %p112 = por %p110, %p111
    %s114 = sadd.s32 %s113, 1
    %p117 = scmp.eq.s32.totalorder %s16, 1
    %p118 = scmp.ne.s32.totalorder %s113, %s115
    %p119 = scmp.eq.s32.totalorder %s16, 0
    %p120 = por %p118, %p119
    %p121 = scmp.ne.s32.totalorder %s113, %s115
    %p122 = scmp.eq.s32.totalorder %s21, 1
    %p123 = por %p121, %p122
    %p124 = scmp.ne.s32.totalorder %s115, %s116
    %p125 = scmp.eq.s32.totalorder %s21, 0
    %p126 = por %p124, %p125
    %p127 = scmp.ne.s32.totalorder %s115, %s116
    %p128 = scmp.eq.s32.totalorder %s22, 1
    %p129 = por %p127, %p128
    %p131 = scmp.ne.s32.totalorder %s116, %s130
    %p132 = scmp.eq.s32.totalorder %s22, 0
    %p133 = por %p131, %p132
    %s135 = sadd.s32 %s134, 1
    %p138 = scmp.eq.s32.totalorder %s16, 1
    %p139 = scmp.ne.s32.totalorder %s134, %s136
    %p140 = scmp.eq.s32.totalorder %s16, 0
    %p141 = por %p139, %p140
    %p142 = scmp.ne.s32.totalorder %s134, %s136
    %p143 = scmp.eq.s32.totalorder %s21, 1
    %p144 = por %p142, %p143
    %p145 = scmp.ne.s32.totalorder %s136, %s137
    %p146 = scmp.eq.s32.totalorder %s21, 0
    %p147 = por %p145, %p146
    %p148 = scmp.ne.s32.totalorder %s136, %s137
    %p149 = scmp.eq.s32.totalorder %s22, 1
    %p150 = por %p148, %p149
    %p152 = scmp.ne.s32.totalorder %s137, %s151
    %p153 = scmp.eq.s32.totalorder %s22, 0
    %p154 = por %p152, %p153
    %s156 = sadd.s32 %s155, 1
    %p159 = scmp.eq.s32.totalorder %s16, 1
    %p160 = scmp.ne.s32.totalorder %s155, %s157
    %p161 = scmp.eq.s32.totalorder %s16, 0
    %p162 = por %p160, %p161
    %p163 = scmp.ne.s32.totalorder %s155, %s157
    %p164 = scmp.eq.s32.totalorder %s21, 1
    %p165 = por %p163, %p164
    %p166 = scmp.ne.s32.totalorder %s157, %s158
    %p167 = scmp.eq.s32.totalorder %s21, 0
    %p168 = por %p166, %p167
    %p169 = scmp.ne.s32.totalorder %s157, %s158
    %p170 = scmp.eq.s32.totalorder %s22, 1
    %p171 = por %p169, %p170
    %p173 = scmp.ne.s32.totalorder %s158, %s172
    %p174 = scmp.eq.s32.totalorder %s22, 0
    %p175 = por %p173, %p174
    %s177 = sadd.s32 %s176, 1
    %p180 = scmp.eq.s32.totalorder %s16, 1
    %p181 = scmp.ne.s32.totalorder %s176, %s178
    %p182 = scmp.eq.s32.totalorder %s16, 0
    %p183 = por %p181, %p182
    %p184 = scmp.ne.s32.totalorder %s176, %s178
    %p185 = scmp.eq.s32.totalorder %s21, 1
    %p186 = por %p184, %p185
    %p187 = scmp.ne.s32.totalorder %s178, %s179
    %p188 = scmp.eq.s32.totalorder %s21, 0
    %p189 = por %p187, %p188
    %p190 = scmp.ne.s32.totalorder %s178, %s179
    %p191 = scmp.eq.s32.totalorder %s22, 1
    %p192 = por %p190, %p191
    %p194 = scmp.ne.s32.totalorder %s179, %s193
    %p195 = scmp.eq.s32.totalorder %s22, 0
    %p196 = por %p194, %p195
    %s197 = ssub.s32 %s16, %s23
    %p198 = scmp.eq.s32.totalorder %s197, 0
    %s200 = sadd.s32 %s199, 1
    %s201 = scalar_select %p198, %s199, %s200
    %p204 = pneg %p198
    %p205 = scmp.eq.s32.totalorder %s16, 1
    %p206 = por %p204, %p205
    %p207 = scmp.ne.s32.totalorder %s199, %s202
    %p208 = scmp.eq.s32.totalorder %s16, 0
    %p209 = por %p207, %p208
    %p210 = scmp.ne.s32.totalorder %s199, %s202
    %p211 = scmp.eq.s32.totalorder %s21, 1
    %p212 = por %p210, %p211
    %p213 = scmp.ne.s32.totalorder %s202, %s203
    %p214 = scmp.eq.s32.totalorder %s21, 0
    %p215 = por %p213, %p214
    %p216 = scmp.ne.s32.totalorder %s202, %s203
    %p217 = scmp.eq.s32.totalorder %s22, 1
    %p218 = por %p216, %p217
    %p220 = scmp.ne.s32.totalorder %s203, %s219
    %p221 = scmp.eq.s32.totalorder %s22, 0
    %p222 = por %p220, %p221
    %s223 = ssub.s32 %s16, %s23
    %p224 = scmp.eq.s32.totalorder %s223, 0
    %s226 = sadd.s32 %s225, 1
    %s227 = scalar_select %p224, %s225, %s226
    %p230 = pneg %p224
    %p231 = scmp.eq.s32.totalorder %s16, 1
    %p232 = por %p230, %p231
    %p233 = scmp.ne.s32.totalorder %s225, %s228
    %p234 = scmp.eq.s32.totalorder %s16, 0
    %p235 = por %p233, %p234
    %p236 = scmp.ne.s32.totalorder %s225, %s228
    %p237 = scmp.eq.s32.totalorder %s21, 1
    %p238 = por %p236, %p237
    %p239 = scmp.ne.s32.totalorder %s228, %s229
    %p240 = scmp.eq.s32.totalorder %s21, 0
    %p241 = por %p239, %p240
    %p242 = scmp.ne.s32.totalorder %s228, %s229
    %p243 = scmp.eq.s32.totalorder %s22, 1
    %p244 = por %p242, %p243
    %p246 = scmp.ne.s32.totalorder %s229, %s245
    %p247 = scmp.eq.s32.totalorder %s22, 0
    %p248 = por %p246, %p247
    %p249 = scmp.le.s32.totalorder 1, %s16
    %p250 = scmp.lt.s32.totalorder %s16, 3
    %p251 = pnand %p249, %p250
    %p252 = pneg %p251
    // Predicated region
    $region9: #{preact_block_forward.2} parent=5 // pred_check
      _
    $region10: #{preact_block_forward.2} parent=5 // pred_check_branch
      %254 = sbr.rel (%p251) target = $region12
    $region11: #{preact_block_forward.2} parent=5 // pred_region
      %s255 = ssub.s32 %s16, 1
      // Predicated region
      $region13: #{preact_block_forward.2} parent=11 // pred_check
        %p256 = pneg %p63
      $region14: #{preact_block_forward.2} parent=11 // pred_check_branch
        %258 = sbr.rel (%p256) target = $region16
      $region15: #{preact_block_forward.2} parent=11 // pred_region
        _
      $region16: #{preact_block_forward.2} parent=11 // pred_fallthru
        _
      // Predicated region
      $region17: #{preact_block_forward.2} parent=11 // pred_check
        %p259 = pneg %p84
      $region18: #{preact_block_forward.2} parent=11 // pred_check_branch
        %261 = sbr.rel (%p259) target = $region20
      $region19: #{preact_block_forward.2} parent=11 // pred_region
        _
      $region20: #{preact_block_forward.2} parent=11 // pred_fallthru
        _
      // Predicated region
      $region21: #{preact_block_forward.2} parent=11 // pred_check
        %p262 = pneg %p105
      $region22: #{preact_block_forward.2} parent=11 // pred_check_branch
        %264 = sbr.rel (%p262) target = $region24
      $region23: #{preact_block_forward.2} parent=11 // pred_region
        _
      $region24: #{preact_block_forward.2} parent=11 // pred_fallthru
        _
      // Predicated region
      $region25: #{preact_block_forward.2} parent=11 // pred_check
        %p265 = pneg %p126
      $region26: #{preact_block_forward.2} parent=11 // pred_check_branch
        %267 = sbr.rel (%p265) target = $region28
      $region27: #{preact_block_forward.2} parent=11 // pred_region
        _
      $region28: #{preact_block_forward.2} parent=11 // pred_fallthru
        _
      // Predicated region
      $region29: #{preact_block_forward.2} parent=11 // pred_check
        %p268 = pneg %p147
      $region30: #{preact_block_forward.2} parent=11 // pred_check_branch
        %270 = sbr.rel (%p268) target = $region32
      $region31: #{preact_block_forward.2} parent=11 // pred_region
        _
      $region32: #{preact_block_forward.2} parent=11 // pred_fallthru
        _
      // Predicated region
      $region33: #{preact_block_forward.2} parent=11 // pred_check
        %p271 = pneg %p168
      $region34: #{preact_block_forward.2} parent=11 // pred_check_branch
        %273 = sbr.rel (%p271) target = $region36
      $region35: #{preact_block_forward.2} parent=11 // pred_region
        _
      $region36: #{preact_block_forward.2} parent=11 // pred_fallthru
        _
      // Predicated region
      $region37: #{preact_block_forward.2} parent=11 // pred_check
        %p274 = pneg %p189
      $region38: #{preact_block_forward.2} parent=11 // pred_check_branch
        %276 = sbr.rel (%p274) target = $region40
      $region39: #{preact_block_forward.2} parent=11 // pred_region
        _
      $region40: #{preact_block_forward.2} parent=11 // pred_fallthru
        _
    $region12: #{preact_block_forward.2} parent=5 // pred_fallthru
      _
    %p277 = scmp.lt.s32.totalorder %s16, 2
    // Predicated region
    $region41: #{preact_block_forward.2} parent=5 // pred_check
      %p278 = pneg %p277
    $region42: #{preact_block_forward.2} parent=5 // pred_check_branch
      %280 = sbr.rel (%p278) target = $region44
    $region43: #{preact_block_forward.2} parent=5 // pred_region
      // Predicated region
      $region45: #{preact_block_forward.2} parent=43 // pred_check
        %p281 = pneg %p36
      $region46: #{preact_block_forward.2} parent=43 // pred_check_branch
        %283 = sbr.rel (%p281) target = $region48
      $region47: #{preact_block_forward.2} parent=43 // pred_region
        %p284 = scmp.lt.s32.totalorder %s16, 1
        %s285 = scalar_select %p284, %s16, 1
        %s286 = smul.addr %s285, 72
        %s287 = smul.addr %s286, 8
        %s288 = scalar_lea.vmem %s0, %s287
      $region48: #{preact_block_forward.2} parent=43 // pred_fallthru
        _
    $region44: #{preact_block_forward.2} parent=5 // pred_fallthru
      _
    %p289 = scmp.le.s32.totalorder 1, %s16
    %p290 = scmp.lt.s32.totalorder %s16, 3
    %p291 = pnand %p289, %p290
    %p292 = pneg %p291
    // Predicated region
    $region49: #{preact_block_forward.2} parent=5 // pred_check
      _
    $region50: #{preact_block_forward.2} parent=5 // pred_check_branch
      %294 = sbr.rel (%p291) target = $region52
    $region51: #{preact_block_forward.2} parent=5 // pred_region
      %s295 = ssub.s32 %s16, 1
      %p296 = scmp.lt.s32.totalorder %s21, 1
      %s297 = scalar_select %p296, %s21, 1
      %s298 = smul.addr %s297, 72
      %s299 = smul.addr %s298, 8
      %s300 = scalar_lea.vmem %s0, %s299
      %p301 = pneg %p42
      %p302 = pneg %p39
      %p303 = pneg %p63
      %p304 = pneg %p60
      %p305 = pneg %p84
      %p306 = pneg %p81
      %p307 = pneg %p105
      %p308 = pneg %p102
      %p309 = pneg %p126
      %p310 = pneg %p123
      %p311 = pneg %p147
      %p312 = pneg %p144
      %p313 = pneg %p168
      %p314 = pneg %p165
      %p315 = pneg %p189
      %p316 = pneg %p186
      %p317 = pneg %p215
      %p318 = pneg %p212
      %p319 = scmp.lt.s32.totalorder %s21, 1
      %s320 = scalar_select %p319, %s21, 1
      %s321 = smul.addr %s320, 8
      %s322 = smul.addr %s321, 8
      %s323 = scalar_lea.vmem %s8, %s322
      %p324 = pneg %p241
      %p325 = pneg %p238
      %p326 = scmp.lt.s32.totalorder %s21, 1
      %s327 = scalar_select %p326, %s21, 1
      %s328 = smul.addr %s327, 8
      %s329 = smul.addr %s328, 8
      %s330 = scalar_lea.vmem %s9, %s329
      %p331 = scmp.lt.s32.totalorder %s21, 1
      %s332 = scalar_select %p331, %s21, 1
      %s333 = smul.addr %s332, 72
      %s334 = smul.addr %s333, 8
      %s335 = scalar_lea.vmem %s0, %s334
      %p336 = scmp.lt.s32.totalorder %s21, 1
      %s337 = scalar_select %p336, %s21, 1
      %s338 = smul.addr %s337, 8
      %s339 = smul.addr %s338, 8
      %s340 = scalar_lea.vmem %s8, %s339
      %p341 = scmp.lt.s32.totalorder %s21, 1
      %s342 = scalar_select %p341, %s21, 1
      %s343 = smul.addr %s342, 8
      %s344 = smul.addr %s343, 8
      %s345 = scalar_lea.vmem %s9, %s344
      %v346 = vld [vmem:[%s335] sm:$0xff]
      %v347 = vld [vmem:[%s335 + $0x8] sm:$0xff]
      %v348 = vld [vmem:[%s335 + $0x10] sm:$0xff]
      %v349 = vld [vmem:[%s335 + $0x18] sm:$0xff]
      %v350 = vld [vmem:[%s335 + $0x20] sm:$0xff]
      %v351 = vld [vmem:[%s335 + $0x28] sm:$0xff]
      %v352 = vld [vmem:[%s335 + $0x30] sm:$0xff]
      %v353 = vld [vmem:[%s335 + $0x38] sm:$0xff]
      %v354 = vld [vmem:[%s335 + $0x40] sm:$0xff]
      %v355 = vld [vmem:[%s335 + $0x48] sm:$0xff]
      %v356 = vld [vmem:[%s335 + $0x50] sm:$0xff]
      %v357 = vld [vmem:[%s335 + $0x58] sm:$0xff]
      %v358 = vld [vmem:[%s335 + $0x60] sm:$0xff]
      %v359 = vld [vmem:[%s335 + $0x68] sm:$0xff]
      %v360 = vld [vmem:[%s335 + $0x70] sm:$0xff]
      %v361 = vld [vmem:[%s335 + $0x78] sm:$0xff]
      %v362 = vld [vmem:[%s335 + $0x80] sm:$0xff]
      %v363 = vld [vmem:[%s335 + $0x88] sm:$0xff]
      %v364 = vld [vmem:[%s335 + $0x90] sm:$0xff]
      %v365 = vld [vmem:[%s335 + $0xa0] sm:$0xff]
      %v366 = vld [vmem:[%s335 + $0xb0] sm:$0xff]
      %v367 = vld [vmem:[%s335 + $0xc0] sm:$0xff]
      %v368 = vld [vmem:[%s335 + $0xd0] sm:$0xff]
      %v369 = vld [vmem:[%s335 + $0xe0] sm:$0xff]
      %v370 = vld [vmem:[%s335 + $0xf0] sm:$0xff]
      %v371 = vld [vmem:[%s335 + $0x100] sm:$0xff]
      %v372 = vld [vmem:[%s335 + $0x110] sm:$0xff]
      %v373 = vld [vmem:[%s335 + $0x120] sm:$0xff]
      %v374 = vld [vmem:[%s335 + $0x128] sm:$0xff]
      %v375 = vld [vmem:[%s335 + $0x130] sm:$0xff]
      %v376 = vld [vmem:[%s335 + $0x138] sm:$0xff]
      %v377 = vld [vmem:[%s335 + $0x140] sm:$0xff]
      %v378 = vld [vmem:[%s335 + $0x148] sm:$0xff]
      %v379 = vld [vmem:[%s335 + $0x150] sm:$0xff]
      %v380 = vld [vmem:[%s335 + $0x158] sm:$0xff]
      %v381 = vld [vmem:[%s335 + $0x160] sm:$0xff]
      %v382 = vld [vmem:[%s335 + $0x168] sm:$0xff]
      %v383 = vld [vmem:[%s335 + $0x170] sm:$0xff]
      %v384 = vld [vmem:[%s335 + $0x178] sm:$0xff]
      %v385 = vld [vmem:[%s335 + $0x180] sm:$0xff]
      %v386 = vld [vmem:[%s335 + $0x188] sm:$0xff]
      %v387 = vld [vmem:[%s335 + $0x190] sm:$0xff]
      %v388 = vld [vmem:[%s335 + $0x198] sm:$0xff]
      %v389 = vld [vmem:[%s335 + $0x1b0] sm:$0xff]
      %v390 = vld [vmem:[%s335 + $0x1c0] sm:$0xff]
      %v391 = vld [vmem:[%s335 + $0x1d0] sm:$0xff]
      %v392 = vld [vmem:[%s335 + $0x1e0] sm:$0xff]
      %v393 = vld [vmem:[%s335 + $0x1f0] sm:$0xff]
      %v394 = vld [vmem:[%s335 + $0x200] sm:$0xff]
      %v395 = vld [vmem:[%s335 + $0x210] sm:$0xff]
      %v396 = vld [vmem:[%s335 + $0x220] sm:$0xff]
      %v397 = vld [vmem:[%s3] sm:$0x1]
      %v399 = vlaneseq
      %v400 = vshrl.u32 %v399, 7
      %v401 = vsub.s32 0, %v400
      %v402 = vrot.slane %v397, %v401
      %v404 = vmul.f32 %v346, %v402
      %v405 = vmul.f32 %v347, %v402
      %v406 = vmul.f32 %v348, %v402
      %v407 = vmul.f32 %v349, %v402
      %v408 = vmul.f32 %v350, %v402
      %v409 = vmul.f32 %v351, %v402
      %v410 = vmul.f32 %v352, %v402
      %v411 = vmul.f32 %v353, %v402
      %v412 = vmul.f32 %v354, %v402
      %v413 = vmul.f32 %v355, %v402
      %v414 = vmul.f32 %v356, %v402
      %v415 = vmul.f32 %v357, %v402
      %v416 = vmul.f32 %v358, %v402
      %v417 = vmul.f32 %v359, %v402
      %v418 = vmul.f32 %v360, %v402
      %v419 = vmul.f32 %v361, %v402
      %v420 = vmul.f32 %v362, %v402
      %v421 = vmul.f32 %v363, %v402
      %v422 = vmul.f32 %v364, %v402
      %v423 = vmul.f32 %v365, %v402
      %v424 = vmul.f32 %v366, %v402
      %v425 = vmul.f32 %v367, %v402
      %v426 = vmul.f32 %v368, %v402
      %v427 = vmul.f32 %v369, %v402
      %v428 = vmul.f32 %v370, %v402
      %v429 = vmul.f32 %v371, %v402
      %v430 = vmul.f32 %v372, %v402
      %v431 = vmul.f32 %v373, %v402
      %v432 = vmul.f32 %v374, %v402
      %v433 = vmul.f32 %v375, %v402
      %v434 = vmul.f32 %v376, %v402
      %v435 = vmul.f32 %v377, %v402
      %v436 = vmul.f32 %v378, %v402
      %v437 = vmul.f32 %v379, %v402
      %v438 = vmul.f32 %v380, %v402
      %v439 = vmul.f32 %v381, %v402
      %v440 = vmul.f32 %v382, %v402
      %v441 = vmul.f32 %v383, %v402
      %v442 = vmul.f32 %v384, %v402
      %v443 = vmul.f32 %v385, %v402
      %v444 = vmul.f32 %v386, %v402
      %v445 = vmul.f32 %v387, %v402
      %v446 = vmul.f32 %v388, %v402
      %v447 = vmul.f32 %v389, %v402
      %v448 = vmul.f32 %v390, %v402
      %v449 = vmul.f32 %v391, %v402
      %v450 = vmul.f32 %v392, %v402
      %v451 = vmul.f32 %v393, %v402
      %v452 = vmul.f32 %v394, %v402
      %v453 = vmul.f32 %v395, %v402
      %v454 = vmul.f32 %v396, %v402
      %v455 = vld [vmem:[%s4] sm:$0x1]
      %v457 = vlaneseq
      %v458 = vshrl.u32 %v457, 7
      %v459 = vsub.s32 0, %v458
      %v460 = vrot.slane %v455, %v459
      %v462 = vadd.f32 %v404, %v460
      %v463 = vadd.f32 %v405, %v460
      %v464 = vadd.f32 %v406, %v460
      %v465 = vadd.f32 %v407, %v460
      %v466 = vadd.f32 %v408, %v460
      %v467 = vadd.f32 %v409, %v460
      %v468 = vadd.f32 %v410, %v460
      %v469 = vadd.f32 %v411, %v460
      %v470 = vadd.f32 %v412, %v460
      %v471 = vadd.f32 %v413, %v460
      %v472 = vadd.f32 %v414, %v460
      %v473 = vadd.f32 %v415, %v460
      %v474 = vadd.f32 %v416, %v460
      %v475 = vadd.f32 %v417, %v460
      %v476 = vadd.f32 %v418, %v460
      %v477 = vadd.f32 %v419, %v460
      %v478 = vadd.f32 %v420, %v460
      %v479 = vadd.f32 %v421, %v460
      %v480 = vadd.f32 %v422, %v460
      %v481 = vadd.f32 %v423, %v460
      %v482 = vadd.f32 %v424, %v460
      %v483 = vadd.f32 %v425, %v460
      %v484 = vadd.f32 %v426, %v460
      %v485 = vadd.f32 %v427, %v460
      %v486 = vadd.f32 %v428, %v460
      %v487 = vadd.f32 %v429, %v460
      %v488 = vadd.f32 %v430, %v460
      %v489 = vadd.f32 %v431, %v460
      %v490 = vadd.f32 %v432, %v460
      %v491 = vadd.f32 %v433, %v460
      %v492 = vadd.f32 %v434, %v460
      %v493 = vadd.f32 %v435, %v460
      %v494 = vadd.f32 %v436, %v460
      %v495 = vadd.f32 %v437, %v460
      %v496 = vadd.f32 %v438, %v460
      %v497 = vadd.f32 %v439, %v460
      %v498 = vadd.f32 %v440, %v460
      %v499 = vadd.f32 %v441, %v460
      %v500 = vadd.f32 %v442, %v460
      %v501 = vadd.f32 %v443, %v460
      %v502 = vadd.f32 %v444, %v460
      %v503 = vadd.f32 %v445, %v460
      %v504 = vadd.f32 %v446, %v460
      %v505 = vadd.f32 %v447, %v460
      %v506 = vadd.f32 %v448, %v460
      %v507 = vadd.f32 %v449, %v460
      %v508 = vadd.f32 %v450, %v460
      %v509 = vadd.f32 %v451, %v460
      %v510 = vadd.f32 %v452, %v460
      %v511 = vadd.f32 %v453, %v460
      %v512 = vadd.f32 %v454, %v460
      %v513 = vmax.f32 %v462, 0.0
      %v514 = vmax.f32 %v463, 0.0
      %v515 = vmax.f32 %v464, 0.0
      %v516 = vmax.f32 %v465, 0.0
      %v517 = vmax.f32 %v466, 0.0
      %v518 = vmax.f32 %v467, 0.0
      %v519 = vmax.f32 %v468, 0.0
      %v520 = vmax.f32 %v469, 0.0
      %v521 = vmax.f32 %v470, 0.0
      %v522 = vmax.f32 %v471, 0.0
      %v523 = vmax.f32 %v472, 0.0
      %v524 = vmax.f32 %v473, 0.0
      %v525 = vmax.f32 %v474, 0.0
      %v526 = vmax.f32 %v475, 0.0
      %v527 = vmax.f32 %v476, 0.0
      %v528 = vmax.f32 %v477, 0.0
      %v529 = vmax.f32 %v478, 0.0
      %v530 = vmax.f32 %v479, 0.0
      %v531 = vmax.f32 %v480, 0.0
      %v532 = vmax.f32 %v481, 0.0
      %v533 = vmax.f32 %v482, 0.0
      %v534 = vmax.f32 %v483, 0.0
      %v535 = vmax.f32 %v484, 0.0
      %v536 = vmax.f32 %v485, 0.0
      %v537 = vmax.f32 %v486, 0.0
      %v538 = vmax.f32 %v487, 0.0
      %v539 = vmax.f32 %v488, 0.0
      %v540 = vmax.f32 %v489, 0.0
      %v541 = vmax.f32 %v490, 0.0
      %v542 = vmax.f32 %v491, 0.0
      %v543 = vmax.f32 %v492, 0.0
      %v544 = vmax.f32 %v493, 0.0
      %v545 = vmax.f32 %v494, 0.0
      %v546 = vmax.f32 %v495, 0.0
      %v547 = vmax.f32 %v496, 0.0
      %v548 = vmax.f32 %v497, 0.0
      %v549 = vmax.f32 %v498, 0.0
      %v550 = vmax.f32 %v499, 0.0
      %v551 = vmax.f32 %v500, 0.0
      %v552 = vmax.f32 %v501, 0.0
      %v553 = vmax.f32 %v502, 0.0
      %v554 = vmax.f32 %v503, 0.0
      %v555 = vmax.f32 %v504, 0.0
      %v556 = vmax.f32 %v505, 0.0
      %v557 = vmax.f32 %v506, 0.0
      %v558 = vmax.f32 %v507, 0.0
      %v559 = vmax.f32 %v508, 0.0
      %v560 = vmax.f32 %v509, 0.0
      %v561 = vmax.f32 %v510, 0.0
      %v562 = vmax.f32 %v511, 0.0
      %v563 = vmax.f32 %v512, 0.0
      %v564 = vld [vmem:[%s1] sm:$0xff]
      %v565 = vld [vmem:[%s1 + $0x8] sm:$0xff]
      %v566 = vld [vmem:[%s1 + $0x10] sm:$0xff]
      %v567 = vld [vmem:[%s1 + $0x18] sm:$0xff]
      %v568 = vld [vmem:[%s1 + $0x20] sm:$0xff]
      %v569 = vld [vmem:[%s1 + $0x28] sm:$0xff]
      %v570 = vld [vmem:[%s1 + $0x30] sm:$0xff]
      %v571 = vld [vmem:[%s1 + $0x38] sm:$0xff]
      %v572 = vld [vmem:[%s1 + $0x40] sm:$0xff]
      %v573 = vld [vmem:[%s1 + $0x48] sm:$0xff]
      %v574 = vld [vmem:[%s1 + $0x50] sm:$0xff]
      %v575 = vld [vmem:[%s1 + $0x58] sm:$0xff]
      %v576 = vld [vmem:[%s1 + $0x60] sm:$0xff]
      %v577 = vld [vmem:[%s1 + $0x68] sm:$0xff]
      %v578 = vld [vmem:[%s1 + $0x70] sm:$0xff]
      %v579 = vld [vmem:[%s1 + $0x78] sm:$0xff]
      %v580 = vld [vmem:[%s1 + $0x80] sm:$0xff]
      %v581 = vld [vmem:[%s1 + $0x88] sm:$0xff]
      %v582 = vld [vmem:[%s1 + $0x90] sm:$0xff]
      %v583 = vld [vmem:[%s1 + $0xa0] sm:$0xff]
      %v584 = vld [vmem:[%s1 + $0xb0] sm:$0xff]
      %v585 = vld [vmem:[%s1 + $0xc0] sm:$0xff]
      %v586 = vld [vmem:[%s1 + $0xd0] sm:$0xff]
      %v587 = vld [vmem:[%s1 + $0xe0] sm:$0xff]
      %v588 = vld [vmem:[%s1 + $0xf0] sm:$0xff]
      %v589 = vld [vmem:[%s1 + $0x100] sm:$0xff]
      %v590 = vld [vmem:[%s1 + $0x110] sm:$0xff]
      %v591 = vld [vmem:[%s1 + $0x120] sm:$0xff]
      %v592 = vld [vmem:[%s1 + $0x128] sm:$0xff]
      %v593 = vld [vmem:[%s1 + $0x130] sm:$0xff]
      %v594 = vld [vmem:[%s1 + $0x138] sm:$0xff]
      %v595 = vld [vmem:[%s1 + $0x140] sm:$0xff]
      %v596 = vld [vmem:[%s1 + $0x148] sm:$0xff]
      %v597 = vld [vmem:[%s1 + $0x150] sm:$0xff]
      %v598 = vld [vmem:[%s1 + $0x158] sm:$0xff]
      %v599 = vld [vmem:[%s1 + $0x160] sm:$0xff]
      %v600 = vld [vmem:[%s1 + $0x168] sm:$0xff]
      %v601 = vld [vmem:[%s1 + $0x170] sm:$0xff]
      %v602 = vld [vmem:[%s1 + $0x178] sm:$0xff]
      %v603 = vld [vmem:[%s1 + $0x180] sm:$0xff]
      %v604 = vld [vmem:[%s1 + $0x188] sm:$0xff]
      %v605 = vld [vmem:[%s1 + $0x190] sm:$0xff]
      %v606 = vld [vmem:[%s1 + $0x198] sm:$0xff]
      %v607 = vld [vmem:[%s1 + $0x1b0] sm:$0xff]
      %v608 = vld [vmem:[%s1 + $0x1c0] sm:$0xff]
      %v609 = vld [vmem:[%s1 + $0x1d0] sm:$0xff]
      %v610 = vld [vmem:[%s1 + $0x1e0] sm:$0xff]
      %v611 = vld [vmem:[%s1 + $0x1f0] sm:$0xff]
      %v612 = vld [vmem:[%s1 + $0x200] sm:$0xff]
      %v613 = vld [vmem:[%s1 + $0x210] sm:$0xff]
      %v614 = vld [vmem:[%s1 + $0x220] sm:$0xff]
      %616 = vset.pattern.permute.xlu0 0
      %617 = vperm.xlu0 %616, %v564
      %v618 = vpop.permute.xlu0 %617
      %621 = vset.pattern.permute.xlu0 0
      %622 = vperm.xlu0 %621, %v565
      %v623 = vpop.permute.xlu0 %622
      %626 = vset.pattern.permute.xlu0 0
      %627 = vperm.xlu0 %626, %v566
      %v628 = vpop.permute.xlu0 %627
      %631 = vset.pattern.permute.xlu0 0
      %632 = vperm.xlu0 %631, %v567
      %v633 = vpop.permute.xlu0 %632
      %636 = vset.pattern.permute.xlu0 0
      %637 = vperm.xlu0 %636, %v568
      %v638 = vpop.permute.xlu0 %637
      %641 = vset.pattern.permute.xlu0 0
      %642 = vperm.xlu0 %641, %v569
      %v643 = vpop.permute.xlu0 %642
      %646 = vset.pattern.permute.xlu0 0
      %647 = vperm.xlu0 %646, %v570
      %v648 = vpop.permute.xlu0 %647
      %651 = vset.pattern.permute.xlu0 0
      %652 = vperm.xlu0 %651, %v571
      %v653 = vpop.permute.xlu0 %652
      %656 = vset.pattern.permute.xlu0 0
      %657 = vperm.xlu0 %656, %v572
      %v658 = vpop.permute.xlu0 %657
      %661 = vset.pattern.permute.xlu0 0
      %662 = vperm.xlu0 %661, %v573
      %v663 = vpop.permute.xlu0 %662
      %666 = vset.pattern.permute.xlu0 0
      %667 = vperm.xlu0 %666, %v574
      %v668 = vpop.permute.xlu0 %667
      %671 = vset.pattern.permute.xlu0 0
      %672 = vperm.xlu0 %671, %v575
      %v673 = vpop.permute.xlu0 %672
      %676 = vset.pattern.permute.xlu0 0
      %677 = vperm.xlu0 %676, %v576
      %v678 = vpop.permute.xlu0 %677
      %681 = vset.pattern.permute.xlu0 0
      %682 = vperm.xlu0 %681, %v577
      %v683 = vpop.permute.xlu0 %682
      %686 = vset.pattern.permute.xlu0 0
      %687 = vperm.xlu0 %686, %v578
      %v688 = vpop.permute.xlu0 %687
      %691 = vset.pattern.permute.xlu0 0
      %692 = vperm.xlu0 %691, %v579
      %v693 = vpop.permute.xlu0 %692
      %696 = vset.pattern.permute.xlu0 0
      %697 = vperm.xlu0 %696, %v580
      %v698 = vpop.permute.xlu0 %697
      %701 = vset.pattern.permute.xlu0 0
      %702 = vperm.xlu0 %701, %v581
      %v703 = vpop.permute.xlu0 %702
      %706 = vset.pattern.permute.xlu0 0
      %707 = vperm.xlu0 %706, %v582
      %v708 = vpop.permute.xlu0 %707
      %711 = vset.pattern.permute.xlu0 0
      %712 = vperm.xlu0 %711, %v583
      %v713 = vpop.permute.xlu0 %712
      %716 = vset.pattern.permute.xlu0 0
      %717 = vperm.xlu0 %716, %v584
      %v718 = vpop.permute.xlu0 %717
      %721 = vset.pattern.permute.xlu0 0
      %722 = vperm.xlu0 %721, %v585
      %v723 = vpop.permute.xlu0 %722
      %726 = vset.pattern.permute.xlu0 0
      %727 = vperm.xlu0 %726, %v586
      %v728 = vpop.permute.xlu0 %727
      %731 = vset.pattern.permute.xlu0 0
      %732 = vperm.xlu0 %731, %v587
      %v733 = vpop.permute.xlu0 %732
      %736 = vset.pattern.permute.xlu0 0
      %737 = vperm.xlu0 %736, %v588
      %v738 = vpop.permute.xlu0 %737
      %741 = vset.pattern.permute.xlu0 0
      %742 = vperm.xlu0 %741, %v589
      %v743 = vpop.permute.xlu0 %742
      %746 = vset.pattern.permute.xlu0 0
      %747 = vperm.xlu0 %746, %v590
      %v748 = vpop.permute.xlu0 %747
      %751 = vset.pattern.permute.xlu0 0
      %752 = vperm.xlu0 %751, %v591
      %v753 = vpop.permute.xlu0 %752
      %756 = vset.pattern.permute.xlu0 0
      %757 = vperm.xlu0 %756, %v592
      %v758 = vpop.permute.xlu0 %757
      %761 = vset.pattern.permute.xlu0 0
      %762 = vperm.xlu0 %761, %v593
      %v763 = vpop.permute.xlu0 %762
      %766 = vset.pattern.permute.xlu0 0
      %767 = vperm.xlu0 %766, %v594
      %v768 = vpop.permute.xlu0 %767
      %771 = vset.pattern.permute.xlu0 0
      %772 = vperm.xlu0 %771, %v595
      %v773 = vpop.permute.xlu0 %772
      %776 = vset.pattern.permute.xlu0 0
      %777 = vperm.xlu0 %776, %v596
      %v778 = vpop.permute.xlu0 %777
      %781 = vset.pattern.permute.xlu0 0
      %782 = vperm.xlu0 %781, %v597
      %v783 = vpop.permute.xlu0 %782
      %786 = vset.pattern.permute.xlu0 0
      %787 = vperm.xlu0 %786, %v598
      %v788 = vpop.permute.xlu0 %787
      %791 = vset.pattern.permute.xlu0 0
      %792 = vperm.xlu0 %791, %v599
      %v793 = vpop.permute.xlu0 %792
      %796 = vset.pattern.permute.xlu0 0
      %797 = vperm.xlu0 %796, %v600
      %v798 = vpop.permute.xlu0 %797
      %801 = vset.pattern.permute.xlu0 0
      %802 = vperm.xlu0 %801, %v601
      %v803 = vpop.permute.xlu0 %802
      %806 = vset.pattern.permute.xlu0 0
      %807 = vperm.xlu0 %806, %v602
      %v808 = vpop.permute.xlu0 %807
      %811 = vset.pattern.permute.xlu0 0
      %812 = vperm.xlu0 %811, %v603
      %v813 = vpop.permute.xlu0 %812
      %816 = vset.pattern.permute.xlu0 0
      %817 = vperm.xlu0 %816, %v604
      %v818 = vpop.permute.xlu0 %817
      %821 = vset.pattern.permute.xlu0 0
      %822 = vperm.xlu0 %821, %v605
      %v823 = vpop.permute.xlu0 %822
      %826 = vset.pattern.permute.xlu0 0
      %827 = vperm.xlu0 %826, %v606
      %v828 = vpop.permute.xlu0 %827
      %831 = vset.pattern.permute.xlu0 0
      %832 = vperm.xlu0 %831, %v607
      %v833 = vpop.permute.xlu0 %832
      %836 = vset.pattern.permute.xlu0 0
      %837 = vperm.xlu0 %836, %v608
      %v838 = vpop.permute.xlu0 %837
      %841 = vset.pattern.permute.xlu0 0
      %842 = vperm.xlu0 %841, %v609
      %v843 = vpop.permute.xlu0 %842
      %846 = vset.pattern.permute.xlu0 0
      %847 = vperm.xlu0 %846, %v610
      %v848 = vpop.permute.xlu0 %847
      %851 = vset.pattern.permute.xlu0 0
      %852 = vperm.xlu0 %851, %v611
      %v853 = vpop.permute.xlu0 %852
      %856 = vset.pattern.permute.xlu0 0
      %857 = vperm.xlu0 %856, %v612
      %v858 = vpop.permute.xlu0 %857
      %861 = vset.pattern.permute.xlu0 0
      %862 = vperm.xlu0 %861, %v613
      %v863 = vpop.permute.xlu0 %862
      %866 = vset.pattern.permute.xlu0 0
      %867 = vperm.xlu0 %866, %v614
      %v868 = vpop.permute.xlu0 %867
      %v870 = vmul.f32 %v513, %v618
      %v871 = vmul.f32 %v514, %v623
      %v872 = vmul.f32 %v515, %v628
      %v873 = vmul.f32 %v516, %v633
      %v874 = vmul.f32 %v517, %v638
      %v875 = vmul.f32 %v518, %v643
      %v876 = vmul.f32 %v519, %v648
      %v877 = vmul.f32 %v520, %v653
      %v878 = vmul.f32 %v521, %v658
      %v879 = vmul.f32 %v522, %v663
      %v880 = vmul.f32 %v523, %v668
      %v881 = vmul.f32 %v524, %v673
      %v882 = vmul.f32 %v525, %v678
      %v883 = vmul.f32 %v526, %v683
      %v884 = vmul.f32 %v527, %v688
      %v885 = vmul.f32 %v528, %v693
      %v886 = vmul.f32 %v529, %v698
      %v887 = vmul.f32 %v530, %v703
      %v888 = vmul.f32 %v531, %v708
      %v889 = vmul.f32 %v532, %v713
      %v890 = vmul.f32 %v533, %v718
      %v891 = vmul.f32 %v534, %v723
      %v892 = vmul.f32 %v535, %v728
      %v893 = vmul.f32 %v536, %v733
      %v894 = vmul.f32 %v537, %v738
      %v895 = vmul.f32 %v538, %v743
      %v896 = vmul.f32 %v539, %v748
      %v897 = vmul.f32 %v540, %v753
      %v898 = vmul.f32 %v541, %v758
      %v899 = vmul.f32 %v542, %v763
      %v900 = vmul.f32 %v543, %v768
      %v901 = vmul.f32 %v544, %v773
      %v902 = vmul.f32 %v545, %v778
      %v903 = vmul.f32 %v546, %v783
      %v904 = vmul.f32 %v547, %v788
      %v905 = vmul.f32 %v548, %v793
      %v906 = vmul.f32 %v549, %v798
      %v907 = vmul.f32 %v550, %v803
      %v908 = vmul.f32 %v551, %v808
      %v909 = vmul.f32 %v552, %v813
      %v910 = vmul.f32 %v553, %v818
      %v911 = vmul.f32 %v554, %v823
      %v912 = vmul.f32 %v555, %v828
      %v913 = vmul.f32 %v556, %v833
      %v914 = vmul.f32 %v557, %v838
      %v915 = vmul.f32 %v558, %v843
      %v916 = vmul.f32 %v559, %v848
      %v917 = vmul.f32 %v560, %v853
      %v918 = vmul.f32 %v561, %v858
      %v919 = vmul.f32 %v562, %v863
      %v920 = vmul.f32 %v563, %v868
      %v921 = vld [vmem:[%s2] sm:$0xff]
      %v922 = vld [vmem:[%s2 + $0x8] sm:$0xff]
      %v923 = vld [vmem:[%s2 + $0x10] sm:$0xff]
      %v924 = vld [vmem:[%s2 + $0x18] sm:$0xff]
      %v925 = vld [vmem:[%s2 + $0x20] sm:$0xff]
      %v926 = vld [vmem:[%s2 + $0x28] sm:$0xff]
      %v927 = vld [vmem:[%s2 + $0x30] sm:$0xff]
      %v928 = vld [vmem:[%s2 + $0x38] sm:$0xff]
      %v929 = vld [vmem:[%s2 + $0x40] sm:$0xff]
      %v930 = vld [vmem:[%s2 + $0x48] sm:$0xff]
      %v931 = vld [vmem:[%s2 + $0x50] sm:$0xff]
      %v932 = vld [vmem:[%s2 + $0x58] sm:$0xff]
      %v933 = vld [vmem:[%s2 + $0x60] sm:$0xff]
      %v934 = vld [vmem:[%s2 + $0x68] sm:$0xff]
      %v935 = vld [vmem:[%s2 + $0x70] sm:$0xff]
      %v936 = vld [vmem:[%s2 + $0x78] sm:$0xff]
      %s937 = scalar_lea.vmem %s2, 128
      %v938 = vld [vmem:[%s937] sm:$0xff]
      %v939 = vld [vmem:[%s937 + $0x8] sm:$0xff]
      %v940 = vld [vmem:[%s937 + $0x10] sm:$0xff]
      %v941 = vld [vmem:[%s937 + $0x18] sm:$0xff]
      %v942 = vld [vmem:[%s937 + $0x20] sm:$0xff]
      %v943 = vld [vmem:[%s937 + $0x28] sm:$0xff]
      %v944 = vld [vmem:[%s937 + $0x30] sm:$0xff]
      %v945 = vld [vmem:[%s937 + $0x38] sm:$0xff]
      %v946 = vld [vmem:[%s937 + $0x40] sm:$0xff]
      %v947 = vld [vmem:[%s937 + $0x48] sm:$0xff]
      %v948 = vld [vmem:[%s937 + $0x50] sm:$0xff]
      %v949 = vld [vmem:[%s937 + $0x58] sm:$0xff]
      %v950 = vld [vmem:[%s937 + $0x60] sm:$0xff]
      %v951 = vld [vmem:[%s937 + $0x68] sm:$0xff]
      %v952 = vld [vmem:[%s937 + $0x70] sm:$0xff]
      %v953 = vld [vmem:[%s937 + $0x78] sm:$0xff]
      %954 = vmatprep.subr.mxu0 0.0
      %955 = vmatpush1.msra.mxu0 %v953
      %956 = vmatprep.subr.mxu0 0.0
      %957 = vmatpush1.msra.mxu0 %v952
      %958 = vmatprep.subr.mxu0 0.0
      %959 = vmatpush1.msra.mxu0 %v951
      %960 = vmatprep.subr.mxu0 0.0
      %961 = vmatpush1.msra.mxu0 %v950
      %962 = vmatprep.subr.mxu0 0.0
      %963 = vmatpush1.msra.mxu0 %v949
      %964 = vmatprep.subr.mxu0 0.0
      %965 = vmatpush1.msra.mxu0 %v948
      %966 = vmatprep.subr.mxu0 0.0
      %967 = vmatpush1.msra.mxu0 %v947
      %968 = vmatprep.subr.mxu0 0.0
      %969 = vmatpush1.msra.mxu0 %v946
      %970 = vmatprep.subr.mxu0 0.0
      %971 = vmatpush1.msra.mxu0 %v945
      %972 = vmatprep.subr.mxu0 0.0
      %973 = vmatpush1.msra.mxu0 %v944
      %974 = vmatprep.subr.mxu0 0.0
      %975 = vmatpush1.msra.mxu0 %v943
      %976 = vmatprep.subr.mxu0 0.0
      %977 = vmatpush1.msra.mxu0 %v942
      %978 = vmatprep.subr.mxu0 0.0
      %979 = vmatpush1.msra.mxu0 %v941
      %980 = vmatprep.subr.mxu0 0.0
      %981 = vmatpush1.msra.mxu0 %v940
      %982 = vmatprep.subr.mxu0 0.0
      %983 = vmatpush1.msra.mxu0 %v939
      %984 = vmatprep.subr.mxu0 0.0
      %985 = vmatpush1.msra.mxu0 %v938
      %986 = vmatprep.subr.mxu0 0.0
      %987 = vmatpush2.msra.mxu0 0.0
      %988 = vmatprep.subr.mxu0 0.0
      %989 = vmatpush2.msra.mxu0 0.0
      %990 = vmatprep.subr.mxu0 0.0
      %991 = vmatpush2.msra.mxu0 0.0
      %992 = vmatprep.subr.mxu0 0.0
      %993 = vmatpush2.msra.mxu0 0.0
      %994 = vmatprep.subr.mxu0 0.0
      %995 = vmatpush2.msra.mxu0 0.0
      %996 = vmatprep.subr.mxu0 0.0
      %997 = vmatpush2.msra.mxu0 0.0
      %998 = vmatprep.subr.mxu0 0.0
      %999 = vmatpush2.msra.mxu0 0.0
      %1000 = vmatprep.subr.mxu0 0.0
      %1001 = vmatpush2.msra.mxu0 0.0
      %1002 = vmatprep.subr.mxu0 0.0
      %1003 = vmatpush2.msra.mxu0 0.0
      %1004 = vmatprep.subr.mxu0 0.0
      %1005 = vmatpush2.msra.mxu0 0.0
      %1006 = vmatprep.subr.mxu0 0.0
      %1007 = vmatpush2.msra.mxu0 0.0
      %1008 = vmatprep.subr.mxu0 0.0
      %1009 = vmatpush2.msra.mxu0 0.0
      %1010 = vmatprep.subr.mxu0 0.0
      %1011 = vmatpush2.msra.mxu0 0.0
      %1012 = vmatprep.subr.mxu0 0.0
      %1013 = vmatpush2.msra.mxu0 0.0
      %1014 = vmatprep.subr.mxu0 0.0
      %1015 = vmatpush2.msra.mxu0 0.0
      %1016 = vmatprep.subr.mxu0 0.0
      %1017 = vmatpush2.msra.mxu0 0.0
      %1018 = vmatprep.mubr.f32.mxu0 0.0
      %1019 = vmatmul.mubr.f32.gmra.mxu0 %v888
      %v1020 = vpop.f32.mrf.mxu0
      %v1021 = vadd.f32 0.0, %v1020
      %v1022 = vpop.f32.mrf.mxu0
      %1023 = vmatprep.mubr.f32.mxu0 0.0
      %1024 = vmatmul.mubr.f32.gmra.mxu0 %v889
      %v1025 = vpop.f32.mrf.mxu0
      %v1026 = vadd.f32 0.0, %v1025
      %v1027 = vpop.f32.mrf.mxu0
      %1028 = vmatprep.mubr.f32.mxu0 0.0
      %1029 = vmatmul.mubr.f32.gmra.mxu0 %v890
      %v1030 = vpop.f32.mrf.mxu0
      %v1031 = vadd.f32 0.0, %v1030
      %v1032 = vpop.f32.mrf.mxu0
      %1033 = vmatprep.mubr.f32.mxu0 0.0
      %1034 = vmatmul.mubr.f32.gmra.mxu0 %v891
      %v1035 = vpop.f32.mrf.mxu0
      %v1036 = vadd.f32 0.0, %v1035
      %v1037 = vpop.f32.mrf.mxu0
      %1038 = vmatprep.mubr.f32.mxu0 0.0
      %1039 = vmatmul.mubr.f32.gmra.mxu0 %v892
      %v1040 = vpop.f32.mrf.mxu0
      %v1041 = vadd.f32 0.0, %v1040
      %v1042 = vpop.f32.mrf.mxu0
      %1043 = vmatprep.mubr.f32.mxu0 0.0
      %1044 = vmatmul.mubr.f32.gmra.mxu0 %v893
      %v1045 = vpop.f32.mrf.mxu0
      %v1046 = vadd.f32 0.0, %v1045
      %v1047 = vpop.f32.mrf.mxu0
      %1048 = vmatprep.mubr.f32.mxu0 0.0
      %1049 = vmatmul.mubr.f32.gmra.mxu0 %v894
      %v1050 = vpop.f32.mrf.mxu0
      %v1051 = vadd.f32 0.0, %v1050
      %v1052 = vpop.f32.mrf.mxu0
      %1053 = vmatprep.mubr.f32.mxu0 0.0
      %1054 = vmatmul.mubr.f32.gmra.mxu0 %v895
      %v1055 = vpop.f32.mrf.mxu0
      %v1056 = vadd.f32 0.0, %v1055
      %v1057 = vpop.f32.mrf.mxu0
      %1058 = vdwg.mxu0
      %1059 = vmatprep.subr.mxu0 0.0
      %1060 = vmatpush1.msra.mxu0 %v936
      %1061 = vmatprep.subr.mxu0 0.0
      %1062 = vmatpush1.msra.mxu0 %v935
      %1063 = vmatprep.subr.mxu0 0.0
      %1064 = vmatpush1.msra.mxu0 %v934
      %1065 = vmatprep.subr.mxu0 0.0
      %1066 = vmatpush1.msra.mxu0 %v933
      %1067 = vmatprep.subr.mxu0 0.0
      %1068 = vmatpush1.msra.mxu0 %v932
      %1069 = vmatprep.subr.mxu0 0.0
      %1070 = vmatpush1.msra.mxu0 %v931
      %1071 = vmatprep.subr.mxu0 0.0
      %1072 = vmatpush1.msra.mxu0 %v930
      %1073 = vmatprep.subr.mxu0 0.0
      %1074 = vmatpush1.msra.mxu0 %v929
      %1075 = vmatprep.subr.mxu0 0.0
      %1076 = vmatpush1.msra.mxu0 %v928
      %1077 = vmatprep.subr.mxu0 0.0
      %1078 = vmatpush1.msra.mxu0 %v927
      %1079 = vmatprep.subr.mxu0 0.0
      %1080 = vmatpush1.msra.mxu0 %v926
      %1081 = vmatprep.subr.mxu0 0.0
      %1082 = vmatpush1.msra.mxu0 %v925
      %1083 = vmatprep.subr.mxu0 0.0
      %1084 = vmatpush1.msra.mxu0 %v924
      %1085 = vmatprep.subr.mxu0 0.0
      %1086 = vmatpush1.msra.mxu0 %v923
      %1087 = vmatprep.subr.mxu0 0.0
      %1088 = vmatpush1.msra.mxu0 %v922
      %1089 = vmatprep.subr.mxu0 0.0
      %1090 = vmatpush1.msra.mxu0 %v921
      %1091 = vmatprep.subr.mxu0 0.0
      %1092 = vmatpush2.msra.mxu0 0.0
      %1093 = vmatprep.subr.mxu0 0.0
      %1094 = vmatpush2.msra.mxu0 0.0
      %1095 = vmatprep.subr.mxu0 0.0
      %1096 = vmatpush2.msra.mxu0 0.0
      %1097 = vmatprep.subr.mxu0 0.0
      %1098 = vmatpush2.msra.mxu0 0.0
      %1099 = vmatprep.subr.mxu0 0.0
      %1100 = vmatpush2.msra.mxu0 0.0
      %1101 = vmatprep.subr.mxu0 0.0
      %1102 = vmatpush2.msra.mxu0 0.0
      %1103 = vmatprep.subr.mxu0 0.0
      %1104 = vmatpush2.msra.mxu0 0.0
      %1105 = vmatprep.subr.mxu0 0.0
      %1106 = vmatpush2.msra.mxu0 0.0
      %1107 = vmatprep.subr.mxu0 0.0
      %1108 = vmatpush2.msra.mxu0 0.0
      %1109 = vmatprep.subr.mxu0 0.0
      %1110 = vmatpush2.msra.mxu0 0.0
      %1111 = vmatprep.subr.mxu0 0.0
      %1112 = vmatpush2.msra.mxu0 0.0
      %1113 = vmatprep.subr.mxu0 0.0
      %1114 = vmatpush2.msra.mxu0 0.0
      %1115 = vmatprep.subr.mxu0 0.0
      %1116 = vmatpush2.msra.mxu0 0.0
      %1117 = vmatprep.subr.mxu0 0.0
      %1118 = vmatpush2.msra.mxu0 0.0
      %1119 = vmatprep.subr.mxu0 0.0
      %1120 = vmatpush2.msra.mxu0 0.0
      %1121 = vmatprep.subr.mxu0 0.0
      %1122 = vmatpush2.msra.mxu0 0.0
      %1123 = vmatprep.mubr.f32.mxu0 0.0
      %1124 = vmatmul.mubr.f32.gmra.mxu0 %v870
      %v1125 = vpop.f32.mrf.mxu0
      %v1126 = vadd.f32 %v1021, %v1125
      %v1127 = vpop.f32.mrf.mxu0
      %1128 = vmatprep.mubr.f32.mxu0 0.0
      %1129 = vmatmul.mubr.f32.gmra.mxu0 %v872
      %v1130 = vpop.f32.mrf.mxu0
      %v1131 = vadd.f32 %v1026, %v1130
      %v1132 = vpop.f32.mrf.mxu0
      %1133 = vmatprep.mubr.f32.mxu0 0.0
      %1134 = vmatmul.mubr.f32.gmra.mxu0 %v874
      %v1135 = vpop.f32.mrf.mxu0
      %v1136 = vadd.f32 %v1031, %v1135
      %v1137 = vpop.f32.mrf.mxu0
      %1138 = vmatprep.mubr.f32.mxu0 0.0
      %1139 = vmatmul.mubr.f32.gmra.mxu0 %v876
      %v1140 = vpop.f32.mrf.mxu0
      %v1141 = vadd.f32 %v1036, %v1140
      %v1142 = vpop.f32.mrf.mxu0
      %1143 = vmatprep.mubr.f32.mxu0 0.0
      %1144 = vmatmul.mubr.f32.gmra.mxu0 %v878
      %v1145 = vpop.f32.mrf.mxu0
      %v1146 = vadd.f32 %v1041, %v1145
      %v1147 = vpop.f32.mrf.mxu0
      %1148 = vmatprep.mubr.f32.mxu0 0.0
      %1149 = vmatmul.mubr.f32.gmra.mxu0 %v880
      %v1150 = vpop.f32.mrf.mxu0
      %v1151 = vadd.f32 %v1046, %v1150
      %v1152 = vpop.f32.mrf.mxu0
      %1153 = vmatprep.mubr.f32.mxu0 0.0
      %1154 = vmatmul.mubr.f32.gmra.mxu0 %v882
      %v1155 = vpop.f32.mrf.mxu0
      %v1156 = vadd.f32 %v1051, %v1155
      %v1157 = vpop.f32.mrf.mxu0
      %1158 = vmatprep.mubr.f32.mxu0 0.0
      %1159 = vmatmul.mubr.f32.gmra.mxu0 %v884
      %v1160 = vpop.f32.mrf.mxu0
      %v1161 = vadd.f32 %v1056, %v1160
      %v1162 = vpop.f32.mrf.mxu0
      %1163 = vdwg.mxu0
      %vm1180 = vcmask 1046528
      %v1181 = vrot.slane %v870, 1
      %v1182 = vrot.slane %v871, 1
      %v1183 = vsel %vm1180, %v1181, %v1182
      %v1184 = vrot.slane %v872, 1
      %v1185 = vrot.slane %v873, 1
      %v1186 = vsel %vm1180, %v1184, %v1185
      %v1187 = vrot.slane %v874, 1
      %v1188 = vrot.slane %v875, 1
      %v1189 = vsel %vm1180, %v1187, %v1188
      %v1190 = vrot.slane %v876, 1
      %v1191 = vrot.slane %v877, 1
      %v1192 = vsel %vm1180, %v1190, %v1191
      %v1193 = vrot.slane %v878, 1
      %v1194 = vrot.slane %v879, 1
      %v1195 = vsel %vm1180, %v1193, %v1194
      %v1196 = vrot.slane %v880, 1
      %v1197 = vrot.slane %v881, 1
      %v1198 = vsel %vm1180, %v1196, %v1197
      %v1199 = vrot.slane %v882, 1
      %v1200 = vrot.slane %v883, 1
      %v1201 = vsel %vm1180, %v1199, %v1200
      %v1202 = vrot.slane %v884, 1
      %v1203 = vrot.slane %v885, 1
      %v1204 = vsel %vm1180, %v1202, %v1203
      %s1213 = scalar_lea.vmem %s2, 256
      %v1214 = vld [vmem:[%s1213] sm:$0xff]
      %v1215 = vld [vmem:[%s1213 + $0x8] sm:$0xff]
      %v1216 = vld [vmem:[%s1213 + $0x10] sm:$0xff]
      %v1217 = vld [vmem:[%s1213 + $0x18] sm:$0xff]
      %v1218 = vld [vmem:[%s1213 + $0x20] sm:$0xff]
      %v1219 = vld [vmem:[%s1213 + $0x28] sm:$0xff]
      %v1220 = vld [vmem:[%s1213 + $0x30] sm:$0xff]
      %v1221 = vld [vmem:[%s1213 + $0x38] sm:$0xff]
      %v1222 = vld [vmem:[%s1213 + $0x40] sm:$0xff]
      %v1223 = vld [vmem:[%s1213 + $0x48] sm:$0xff]
      %v1224 = vld [vmem:[%s1213 + $0x50] sm:$0xff]
      %v1225 = vld [vmem:[%s1213 + $0x58] sm:$0xff]
      %v1226 = vld [vmem:[%s1213 + $0x60] sm:$0xff]
      %v1227 = vld [vmem:[%s1213 + $0x68] sm:$0xff]
      %v1228 = vld [vmem:[%s1213 + $0x70] sm:$0xff]
      %v1229 = vld [vmem:[%s1213 + $0x78] sm:$0xff]
      %1230 = vmatprep.subr.mxu0 0.0
      %1231 = vmatpush1.msra.mxu0 %v1229
      %1232 = vmatprep.subr.mxu0 0.0
      %1233 = vmatpush1.msra.mxu0 %v1228
      %1234 = vmatprep.subr.mxu0 0.0
      %1235 = vmatpush1.msra.mxu0 %v1227
      %1236 = vmatprep.subr.mxu0 0.0
      %1237 = vmatpush1.msra.mxu0 %v1226
      %1238 = vmatprep.subr.mxu0 0.0
      %1239 = vmatpush1.msra.mxu0 %v1225
      %1240 = vmatprep.subr.mxu0 0.0
      %1241 = vmatpush1.msra.mxu0 %v1224
      %1242 = vmatprep.subr.mxu0 0.0
      %1243 = vmatpush1.msra.mxu0 %v1223
      %1244 = vmatprep.subr.mxu0 0.0
      %1245 = vmatpush1.msra.mxu0 %v1222
      %1246 = vmatprep.subr.mxu0 0.0
      %1247 = vmatpush1.msra.mxu0 %v1221
      %1248 = vmatprep.subr.mxu0 0.0
      %1249 = vmatpush1.msra.mxu0 %v1220
      %1250 = vmatprep.subr.mxu0 0.0
      %1251 = vmatpush1.msra.mxu0 %v1219
      %1252 = vmatprep.subr.mxu0 0.0
      %1253 = vmatpush1.msra.mxu0 %v1218
      %1254 = vmatprep.subr.mxu0 0.0
      %1255 = vmatpush1.msra.mxu0 %v1217
      %1256 = vmatprep.subr.mxu0 0.0
      %1257 = vmatpush1.msra.mxu0 %v1216
      %1258 = vmatprep.subr.mxu0 0.0
      %1259 = vmatpush1.msra.mxu0 %v1215
      %1260 = vmatprep.subr.mxu0 0.0
      %1261 = vmatpush1.msra.mxu0 %v1214
      %1262 = vmatprep.subr.mxu0 0.0
      %1263 = vmatpush2.msra.mxu0 0.0
      %1264 = vmatprep.subr.mxu0 0.0
      %1265 = vmatpush2.msra.mxu0 0.0
      %1266 = vmatprep.subr.mxu0 0.0
      %1267 = vmatpush2.msra.mxu0 0.0
      %1268 = vmatprep.subr.mxu0 0.0
      %1269 = vmatpush2.msra.mxu0 0.0
      %1270 = vmatprep.subr.mxu0 0.0
      %1271 = vmatpush2.msra.mxu0 0.0
      %1272 = vmatprep.subr.mxu0 0.0
      %1273 = vmatpush2.msra.mxu0 0.0
      %1274 = vmatprep.subr.mxu0 0.0
      %1275 = vmatpush2.msra.mxu0 0.0
      %1276 = vmatprep.subr.mxu0 0.0
      %1277 = vmatpush2.msra.mxu0 0.0
      %1278 = vmatprep.subr.mxu0 0.0
      %1279 = vmatpush2.msra.mxu0 0.0
      %1280 = vmatprep.subr.mxu0 0.0
      %1281 = vmatpush2.msra.mxu0 0.0
      %1282 = vmatprep.subr.mxu0 0.0
      %1283 = vmatpush2.msra.mxu0 0.0
      %1284 = vmatprep.subr.mxu0 0.0
      %1285 = vmatpush2.msra.mxu0 0.0
      %1286 = vmatprep.subr.mxu0 0.0
      %1287 = vmatpush2.msra.mxu0 0.0
      %1288 = vmatprep.subr.mxu0 0.0
      %1289 = vmatpush2.msra.mxu0 0.0
      %1290 = vmatprep.subr.mxu0 0.0
      %1291 = vmatpush2.msra.mxu0 0.0
      %1292 = vmatprep.subr.mxu0 0.0
      %1293 = vmatpush2.msra.mxu0 0.0
      %1294 = vmatprep.mubr.f32.mxu0 0.0
      %1295 = vmatmul.mubr.f32.gmra.mxu0 %v1183
      %v1296 = vpop.f32.mrf.mxu0
      %v1297 = vadd.f32 0.0, %v1296
      %v1298 = vpop.f32.mrf.mxu0
      %1299 = vmatprep.mubr.f32.mxu0 0.0
      %1300 = vmatmul.mubr.f32.gmra.mxu0 %v1186
      %v1301 = vpop.f32.mrf.mxu0
      %v1302 = vadd.f32 0.0, %v1301
      %v1303 = vpop.f32.mrf.mxu0
      %1304 = vmatprep.mubr.f32.mxu0 0.0
      %1305 = vmatmul.mubr.f32.gmra.mxu0 %v1189
      %v1306 = vpop.f32.mrf.mxu0
      %v1307 = vadd.f32 0.0, %v1306
      %v1308 = vpop.f32.mrf.mxu0
      %1309 = vmatprep.mubr.f32.mxu0 0.0
      %1310 = vmatmul.mubr.f32.gmra.mxu0 %v1192
      %v1311 = vpop.f32.mrf.mxu0
      %v1312 = vadd.f32 0.0, %v1311
      %v1313 = vpop.f32.mrf.mxu0
      %1314 = vmatprep.mubr.f32.mxu0 0.0
      %1315 = vmatmul.mubr.f32.gmra.mxu0 %v1195
      %v1316 = vpop.f32.mrf.mxu0
      %v1317 = vadd.f32 0.0, %v1316
      %v1318 = vpop.f32.mrf.mxu0
      %1319 = vmatprep.mubr.f32.mxu0 0.0
      %1320 = vmatmul.mubr.f32.gmra.mxu0 %v1198
      %v1321 = vpop.f32.mrf.mxu0
      %v1322 = vadd.f32 0.0, %v1321
      %v1323 = vpop.f32.mrf.mxu0
      %1324 = vmatprep.mubr.f32.mxu0 0.0
      %1325 = vmatmul.mubr.f32.gmra.mxu0 %v1201
      %v1326 = vpop.f32.mrf.mxu0
      %v1327 = vadd.f32 0.0, %v1326
      %v1328 = vpop.f32.mrf.mxu0
      %1329 = vmatprep.mubr.f32.mxu0 0.0
      %1330 = vmatmul.mubr.f32.gmra.mxu0 %v1204
      %v1331 = vpop.f32.mrf.mxu0
      %v1332 = vadd.f32 0.0, %v1331
      %v1333 = vpop.f32.mrf.mxu0
      %1334 = vdwg.mxu0
      %v1335 = vadd.f32 %v1126, %v1297
      %v1336 = vadd.f32 %v1131, %v1302
      %v1337 = vadd.f32 %v1136, %v1307
      %v1338 = vadd.f32 %v1141, %v1312
      %v1339 = vadd.f32 %v1146, %v1317
      %v1340 = vadd.f32 %v1151, %v1322
      %v1341 = vadd.f32 %v1156, %v1327
      %v1342 = vadd.f32 %v1161, %v1332
      %s1343 = scalar_lea.vmem %s2, 384
      %v1344 = vld [vmem:[%s1343] sm:$0xff]
      %v1345 = vld [vmem:[%s1343 + $0x8] sm:$0xff]
      %v1346 = vld [vmem:[%s1343 + $0x10] sm:$0xff]
      %v1347 = vld [vmem:[%s1343 + $0x18] sm:$0xff]
      %v1348 = vld [vmem:[%s1343 + $0x20] sm:$0xff]
      %v1349 = vld [vmem:[%s1343 + $0x28] sm:$0xff]
      %v1350 = vld [vmem:[%s1343 + $0x30] sm:$0xff]
      %v1351 = vld [vmem:[%s1343 + $0x38] sm:$0xff]
      %v1352 = vld [vmem:[%s1343 + $0x40] sm:$0xff]
      %v1353 = vld [vmem:[%s1343 + $0x48] sm:$0xff]
      %v1354 = vld [vmem:[%s1343 + $0x50] sm:$0xff]
      %v1355 = vld [vmem:[%s1343 + $0x58] sm:$0xff]
      %v1356 = vld [vmem:[%s1343 + $0x60] sm:$0xff]
      %v1357 = vld [vmem:[%s1343 + $0x68] sm:$0xff]
      %v1358 = vld [vmem:[%s1343 + $0x70] sm:$0xff]
      %v1359 = vld [vmem:[%s1343 + $0x78] sm:$0xff]
      %1360 = vmatprep.subr.mxu0 0.0
      %1361 = vmatpush1.msra.mxu0 %v1359
      %1362 = vmatprep.subr.mxu0 0.0
      %1363 = vmatpush1.msra.mxu0 %v1358
      %1364 = vmatprep.subr.mxu0 0.0
      %1365 = vmatpush1.msra.mxu0 %v1357
      %1366 = vmatprep.subr.mxu0 0.0
      %1367 = vmatpush1.msra.mxu0 %v1356
      %1368 = vmatprep.subr.mxu0 0.0
      %1369 = vmatpush1.msra.mxu0 %v1355
      %1370 = vmatprep.subr.mxu0 0.0
      %1371 = vmatpush1.msra.mxu0 %v1354
      %1372 = vmatprep.subr.mxu0 0.0
      %1373 = vmatpush1.msra.mxu0 %v1353
      %1374 = vmatprep.subr.mxu0 0.0
      %1375 = vmatpush1.msra.mxu0 %v1352
      %1376 = vmatprep.subr.mxu0 0.0
      %1377 = vmatpush1.msra.mxu0 %v1351
      %1378 = vmatprep.subr.mxu0 0.0
      %1379 = vmatpush1.msra.mxu0 %v1350
      %1380 = vmatprep.subr.mxu0 0.0
      %1381 = vmatpush1.msra.mxu0 %v1349
      %1382 = vmatprep.subr.mxu0 0.0
      %1383 = vmatpush1.msra.mxu0 %v1348
      %1384 = vmatprep.subr.mxu0 0.0
      %1385 = vmatpush1.msra.mxu0 %v1347
      %1386 = vmatprep.subr.mxu0 0.0
      %1387 = vmatpush1.msra.mxu0 %v1346
      %1388 = vmatprep.subr.mxu0 0.0
      %1389 = vmatpush1.msra.mxu0 %v1345
      %1390 = vmatprep.subr.mxu0 0.0
      %1391 = vmatpush1.msra.mxu0 %v1344
      %1392 = vmatprep.subr.mxu0 0.0
      %1393 = vmatpush2.msra.mxu0 0.0
      %1394 = vmatprep.subr.mxu0 0.0
      %1395 = vmatpush2.msra.mxu0 0.0
      %1396 = vmatprep.subr.mxu0 0.0
      %1397 = vmatpush2.msra.mxu0 0.0
      %1398 = vmatprep.subr.mxu0 0.0
      %1399 = vmatpush2.msra.mxu0 0.0
      %1400 = vmatprep.subr.mxu0 0.0
      %1401 = vmatpush2.msra.mxu0 0.0
      %1402 = vmatprep.subr.mxu0 0.0
      %1403 = vmatpush2.msra.mxu0 0.0
      %1404 = vmatprep.subr.mxu0 0.0
      %1405 = vmatpush2.msra.mxu0 0.0
      %1406 = vmatprep.subr.mxu0 0.0
      %1407 = vmatpush2.msra.mxu0 0.0
      %1408 = vmatprep.subr.mxu0 0.0
      %1409 = vmatpush2.msra.mxu0 0.0
      %1410 = vmatprep.subr.mxu0 0.0
      %1411 = vmatpush2.msra.mxu0 0.0
      %1412 = vmatprep.subr.mxu0 0.0
      %1413 = vmatpush2.msra.mxu0 0.0
      %1414 = vmatprep.subr.mxu0 0.0
      %1415 = vmatpush2.msra.mxu0 0.0
      %1416 = vmatprep.subr.mxu0 0.0
      %1417 = vmatpush2.msra.mxu0 0.0
      %1418 = vmatprep.subr.mxu0 0.0
      %1419 = vmatpush2.msra.mxu0 0.0
      %1420 = vmatprep.subr.mxu0 0.0
      %1421 = vmatpush2.msra.mxu0 0.0
      %1422 = vmatprep.subr.mxu0 0.0
      %1423 = vmatpush2.msra.mxu0 0.0
      %1424 = vmatprep.mubr.f32.mxu0 0.0
      %1425 = vmatmul.mubr.f32.gmra.mxu0 %v897
      %v1426 = vpop.f32.mrf.mxu0
      %v1427 = vadd.f32 0.0, %v1426
      %v1428 = vpop.f32.mrf.mxu0
      %1429 = vmatprep.mubr.f32.mxu0 0.0
      %1430 = vmatmul.mubr.f32.gmra.mxu0 %v899
      %v1431 = vpop.f32.mrf.mxu0
      %v1432 = vadd.f32 0.0, %v1431
      %v1433 = vpop.f32.mrf.mxu0
      %1434 = vmatprep.mubr.f32.mxu0 0.0
      %1435 = vmatmul.mubr.f32.gmra.mxu0 %v901
      %v1436 = vpop.f32.mrf.mxu0
      %v1437 = vadd.f32 0.0, %v1436
      %v1438 = vpop.f32.mrf.mxu0
      %1439 = vmatprep.mubr.f32.mxu0 0.0
      %1440 = vmatmul.mubr.f32.gmra.mxu0 %v903
      %v1441 = vpop.f32.mrf.mxu0
      %v1442 = vadd.f32 0.0, %v1441
      %v1443 = vpop.f32.mrf.mxu0
      %1444 = vmatprep.mubr.f32.mxu0 0.0
      %1445 = vmatmul.mubr.f32.gmra.mxu0 %v905
      %v1446 = vpop.f32.mrf.mxu0
      %v1447 = vadd.f32 0.0, %v1446
      %v1448 = vpop.f32.mrf.mxu0
      %1449 = vmatprep.mubr.f32.mxu0 0.0
      %1450 = vmatmul.mubr.f32.gmra.mxu0 %v907
      %v1451 = vpop.f32.mrf.mxu0
      %v1452 = vadd.f32 0.0, %v1451
      %v1453 = vpop.f32.mrf.mxu0
      %1454 = vmatprep.mubr.f32.mxu0 0.0
      %1455 = vmatmul.mubr.f32.gmra.mxu0 %v909
      %v1456 = vpop.f32.mrf.mxu0
      %v1457 = vadd.f32 0.0, %v1456
      %v1458 = vpop.f32.mrf.mxu0
      %1459 = vmatprep.mubr.f32.mxu0 0.0
      %1460 = vmatmul.mubr.f32.gmra.mxu0 %v911
      %v1461 = vpop.f32.mrf.mxu0
      %v1462 = vadd.f32 0.0, %v1461
      %v1463 = vpop.f32.mrf.mxu0
      %1464 = vdwg.mxu0
      %v1465 = vadd.f32 %v1335, %v1427
      %v1466 = vadd.f32 %v1336, %v1432
      %v1467 = vadd.f32 %v1337, %v1437
      %v1468 = vadd.f32 %v1338, %v1442
      %v1469 = vadd.f32 %v1339, %v1447
      %v1470 = vadd.f32 %v1340, %v1452
      %v1471 = vadd.f32 %v1341, %v1457
      %v1472 = vadd.f32 %v1342, %v1462
      %s1473 = scalar_lea.vmem %s2, 512
      %v1474 = vld [vmem:[%s1473] sm:$0xff]
      %v1475 = vld [vmem:[%s1473 + $0x8] sm:$0xff]
      %v1476 = vld [vmem:[%s1473 + $0x10] sm:$0xff]
      %v1477 = vld [vmem:[%s1473 + $0x18] sm:$0xff]
      %v1478 = vld [vmem:[%s1473 + $0x20] sm:$0xff]
      %v1479 = vld [vmem:[%s1473 + $0x28] sm:$0xff]
      %v1480 = vld [vmem:[%s1473 + $0x30] sm:$0xff]
      %v1481 = vld [vmem:[%s1473 + $0x38] sm:$0xff]
      %v1482 = vld [vmem:[%s1473 + $0x40] sm:$0xff]
      %v1483 = vld [vmem:[%s1473 + $0x48] sm:$0xff]
      %v1484 = vld [vmem:[%s1473 + $0x50] sm:$0xff]
      %v1485 = vld [vmem:[%s1473 + $0x58] sm:$0xff]
      %v1486 = vld [vmem:[%s1473 + $0x60] sm:$0xff]
      %v1487 = vld [vmem:[%s1473 + $0x68] sm:$0xff]
      %v1488 = vld [vmem:[%s1473 + $0x70] sm:$0xff]
      %v1489 = vld [vmem:[%s1473 + $0x78] sm:$0xff]
      %1490 = vmatprep.subr.mxu0 0.0
      %1491 = vmatpush1.msra.mxu0 %v1489
      %1492 = vmatprep.subr.mxu0 0.0
      %1493 = vmatpush1.msra.mxu0 %v1488
      %1494 = vmatprep.subr.mxu0 0.0
      %1495 = vmatpush1.msra.mxu0 %v1487
      %1496 = vmatprep.subr.mxu0 0.0
      %1497 = vmatpush1.msra.mxu0 %v1486
      %1498 = vmatprep.subr.mxu0 0.0
      %1499 = vmatpush1.msra.mxu0 %v1485
      %1500 = vmatprep.subr.mxu0 0.0
      %1501 = vmatpush1.msra.mxu0 %v1484
      %1502 = vmatprep.subr.mxu0 0.0
      %1503 = vmatpush1.msra.mxu0 %v1483
      %1504 = vmatprep.subr.mxu0 0.0
      %1505 = vmatpush1.msra.mxu0 %v1482
      %1506 = vmatprep.subr.mxu0 0.0
      %1507 = vmatpush1.msra.mxu0 %v1481
      %1508 = vmatprep.subr.mxu0 0.0
      %1509 = vmatpush1.msra.mxu0 %v1480
      %1510 = vmatprep.subr.mxu0 0.0
      %1511 = vmatpush1.msra.mxu0 %v1479
      %1512 = vmatprep.subr.mxu0 0.0
      %1513 = vmatpush1.msra.mxu0 %v1478
      %1514 = vmatprep.subr.mxu0 0.0
      %1515 = vmatpush1.msra.mxu0 %v1477
      %1516 = vmatprep.subr.mxu0 0.0
      %1517 = vmatpush1.msra.mxu0 %v1476
      %1518 = vmatprep.subr.mxu0 0.0
      %1519 = vmatpush1.msra.mxu0 %v1475
      %1520 = vmatprep.subr.mxu0 0.0
      %1521 = vmatpush1.msra.mxu0 %v1474
      %1522 = vmatprep.subr.mxu0 0.0
      %1523 = vmatpush2.msra.mxu0 0.0
      %1524 = vmatprep.subr.mxu0 0.0
      %1525 = vmatpush2.msra.mxu0 0.0
      %1526 = vmatprep.subr.mxu0 0.0
      %1527 = vmatpush2.msra.mxu0 0.0
      %1528 = vmatprep.subr.mxu0 0.0
      %1529 = vmatpush2.msra.mxu0 0.0
      %1530 = vmatprep.subr.mxu0 0.0
      %1531 = vmatpush2.msra.mxu0 0.0
      %1532 = vmatprep.subr.mxu0 0.0
      %1533 = vmatpush2.msra.mxu0 0.0
      %1534 = vmatprep.subr.mxu0 0.0
      %1535 = vmatpush2.msra.mxu0 0.0
      %1536 = vmatprep.subr.mxu0 0.0
      %1537 = vmatpush2.msra.mxu0 0.0
      %1538 = vmatprep.subr.mxu0 0.0
      %1539 = vmatpush2.msra.mxu0 0.0
      %1540 = vmatprep.subr.mxu0 0.0
      %1541 = vmatpush2.msra.mxu0 0.0
      %1542 = vmatprep.subr.mxu0 0.0
      %1543 = vmatpush2.msra.mxu0 0.0
      %1544 = vmatprep.subr.mxu0 0.0
      %1545 = vmatpush2.msra.mxu0 0.0
      %1546 = vmatprep.subr.mxu0 0.0
      %1547 = vmatpush2.msra.mxu0 0.0
      %1548 = vmatprep.subr.mxu0 0.0
      %1549 = vmatpush2.msra.mxu0 0.0
      %1550 = vmatprep.subr.mxu0 0.0
      %1551 = vmatpush2.msra.mxu0 0.0
      %1552 = vmatprep.subr.mxu0 0.0
      %1553 = vmatpush2.msra.mxu0 0.0
      %1554 = vmatprep.mubr.f32.mxu0 0.0
      %1555 = vmatmul.mubr.f32.gmra.mxu0 %v913
      %v1556 = vpop.f32.mrf.mxu0
      %v1557 = vadd.f32 0.0, %v1556
      %v1558 = vpop.f32.mrf.mxu0
      %1559 = vmatprep.mubr.f32.mxu0 0.0
      %1560 = vmatmul.mubr.f32.gmra.mxu0 %v914
      %v1561 = vpop.f32.mrf.mxu0
      %v1562 = vadd.f32 0.0, %v1561
      %v1563 = vpop.f32.mrf.mxu0
      %1564 = vmatprep.mubr.f32.mxu0 0.0
      %1565 = vmatmul.mubr.f32.gmra.mxu0 %v915
      %v1566 = vpop.f32.mrf.mxu0
      %v1567 = vadd.f32 0.0, %v1566
      %v1568 = vpop.f32.mrf.mxu0
      %1569 = vmatprep.mubr.f32.mxu0 0.0
      %1570 = vmatmul.mubr.f32.gmra.mxu0 %v916
      %v1571 = vpop.f32.mrf.mxu0
      %v1572 = vadd.f32 0.0, %v1571
      %v1573 = vpop.f32.mrf.mxu0
      %1574 = vmatprep.mubr.f32.mxu0 0.0
      %1575 = vmatmul.mubr.f32.gmra.mxu0 %v917
      %v1576 = vpop.f32.mrf.mxu0
      %v1577 = vadd.f32 0.0, %v1576
      %v1578 = vpop.f32.mrf.mxu0
      %1579 = vmatprep.mubr.f32.mxu0 0.0
      %1580 = vmatmul.mubr.f32.gmra.mxu0 %v918
      %v1581 = vpop.f32.mrf.mxu0
      %v1582 = vadd.f32 0.0, %v1581
      %v1583 = vpop.f32.mrf.mxu0
      %1584 = vmatprep.mubr.f32.mxu0 0.0
      %1585 = vmatmul.mubr.f32.gmra.mxu0 %v919
      %v1586 = vpop.f32.mrf.mxu0
      %v1587 = vadd.f32 0.0, %v1586
      %v1588 = vpop.f32.mrf.mxu0
      %1589 = vmatprep.mubr.f32.mxu0 0.0
      %1590 = vmatmul.mubr.f32.gmra.mxu0 %v920
      %v1591 = vpop.f32.mrf.mxu0
      %v1592 = vadd.f32 0.0, %v1591
      %v1593 = vpop.f32.mrf.mxu0
      %1594 = vdwg.mxu0
      %v1595 = vadd.f32 %v1465, %v1557
      %v1596 = vadd.f32 %v1466, %v1562
      %v1597 = vadd.f32 %v1467, %v1567
      %v1598 = vadd.f32 %v1468, %v1572
      %v1599 = vadd.f32 %v1469, %v1577
      %v1600 = vadd.f32 %v1470, %v1582
      %v1601 = vadd.f32 %v1471, %v1587
      %v1602 = vadd.f32 %v1472, %v1592
      %v1619 = vrot.slane %v897, 1
      %v1620 = vrot.slane %v898, 1
      %v1621 = vsel %vm1180, %v1619, %v1620
      %v1622 = vrot.slane %v899, 1
      %v1623 = vrot.slane %v900, 1
      %v1624 = vsel %vm1180, %v1622, %v1623
      %v1625 = vrot.slane %v901, 1
      %v1626 = vrot.slane %v902, 1
      %v1627 = vsel %vm1180, %v1625, %v1626
      %v1628 = vrot.slane %v903, 1
      %v1629 = vrot.slane %v904, 1
      %v1630 = vsel %vm1180, %v1628, %v1629
      %v1631 = vrot.slane %v905, 1
      %v1632 = vrot.slane %v906, 1
      %v1633 = vsel %vm1180, %v1631, %v1632
      %v1634 = vrot.slane %v907, 1
      %v1635 = vrot.slane %v908, 1
      %v1636 = vsel %vm1180, %v1634, %v1635
      %v1637 = vrot.slane %v909, 1
      %v1638 = vrot.slane %v910, 1
      %v1639 = vsel %vm1180, %v1637, %v1638
      %v1640 = vrot.slane %v911, 1
      %v1641 = vrot.slane %v912, 1
      %v1642 = vsel %vm1180, %v1640, %v1641
      %s1651 = scalar_lea.vmem %s2, 640
      %v1652 = vld [vmem:[%s1651] sm:$0xff]
      %v1653 = vld [vmem:[%s1651 + $0x8] sm:$0xff]
      %v1654 = vld [vmem:[%s1651 + $0x10] sm:$0xff]
      %v1655 = vld [vmem:[%s1651 + $0x18] sm:$0xff]
      %v1656 = vld [vmem:[%s1651 + $0x20] sm:$0xff]
      %v1657 = vld [vmem:[%s1651 + $0x28] sm:$0xff]
      %v1658 = vld [vmem:[%s1651 + $0x30] sm:$0xff]
      %v1659 = vld [vmem:[%s1651 + $0x38] sm:$0xff]
      %v1660 = vld [vmem:[%s1651 + $0x40] sm:$0xff]
      %v1661 = vld [vmem:[%s1651 + $0x48] sm:$0xff]
      %v1662 = vld [vmem:[%s1651 + $0x50] sm:$0xff]
      %v1663 = vld [vmem:[%s1651 + $0x58] sm:$0xff]
      %v1664 = vld [vmem:[%s1651 + $0x60] sm:$0xff]
      %v1665 = vld [vmem:[%s1651 + $0x68] sm:$0xff]
      %v1666 = vld [vmem:[%s1651 + $0x70] sm:$0xff]
      %v1667 = vld [vmem:[%s1651 + $0x78] sm:$0xff]
      %1668 = vmatprep.subr.mxu0 0.0
      %1669 = vmatpush1.msra.mxu0 %v1667
      %1670 = vmatprep.subr.mxu0 0.0
      %1671 = vmatpush1.msra.mxu0 %v1666
      %1672 = vmatprep.subr.mxu0 0.0
      %1673 = vmatpush1.msra.mxu0 %v1665
      %1674 = vmatprep.subr.mxu0 0.0
      %1675 = vmatpush1.msra.mxu0 %v1664
      %1676 = vmatprep.subr.mxu0 0.0
      %1677 = vmatpush1.msra.mxu0 %v1663
      %1678 = vmatprep.subr.mxu0 0.0
      %1679 = vmatpush1.msra.mxu0 %v1662
      %1680 = vmatprep.subr.mxu0 0.0
      %1681 = vmatpush1.msra.mxu0 %v1661
      %1682 = vmatprep.subr.mxu0 0.0
      %1683 = vmatpush1.msra.mxu0 %v1660
      %1684 = vmatprep.subr.mxu0 0.0
      %1685 = vmatpush1.msra.mxu0 %v1659
      %1686 = vmatprep.subr.mxu0 0.0
      %1687 = vmatpush1.msra.mxu0 %v1658
      %1688 = vmatprep.subr.mxu0 0.0
      %1689 = vmatpush1.msra.mxu0 %v1657
      %1690 = vmatprep.subr.mxu0 0.0
      %1691 = vmatpush1.msra.mxu0 %v1656
      %1692 = vmatprep.subr.mxu0 0.0
      %1693 = vmatpush1.msra.mxu0 %v1655
      %1694 = vmatprep.subr.mxu0 0.0
      %1695 = vmatpush1.msra.mxu0 %v1654
      %1696 = vmatprep.subr.mxu0 0.0
      %1697 = vmatpush1.msra.mxu0 %v1653
      %1698 = vmatprep.subr.mxu0 0.0
      %1699 = vmatpush1.msra.mxu0 %v1652
      %1700 = vmatprep.subr.mxu0 0.0
      %1701 = vmatpush2.msra.mxu0 0.0
      %1702 = vmatprep.subr.mxu0 0.0
      %1703 = vmatpush2.msra.mxu0 0.0
      %1704 = vmatprep.subr.mxu0 0.0
      %1705 = vmatpush2.msra.mxu0 0.0
      %1706 = vmatprep.subr.mxu0 0.0
      %1707 = vmatpush2.msra.mxu0 0.0
      %1708 = vmatprep.subr.mxu0 0.0
      %1709 = vmatpush2.msra.mxu0 0.0
      %1710 = vmatprep.subr.mxu0 0.0
      %1711 = vmatpush2.msra.mxu0 0.0
      %1712 = vmatprep.subr.mxu0 0.0
      %1713 = vmatpush2.msra.mxu0 0.0
      %1714 = vmatprep.subr.mxu0 0.0
      %1715 = vmatpush2.msra.mxu0 0.0
      %1716 = vmatprep.subr.mxu0 0.0
      %1717 = vmatpush2.msra.mxu0 0.0
      %1718 = vmatprep.subr.mxu0 0.0
      %1719 = vmatpush2.msra.mxu0 0.0
      %1720 = vmatprep.subr.mxu0 0.0
      %1721 = vmatpush2.msra.mxu0 0.0
      %1722 = vmatprep.subr.mxu0 0.0
      %1723 = vmatpush2.msra.mxu0 0.0
      %1724 = vmatprep.subr.mxu0 0.0
      %1725 = vmatpush2.msra.mxu0 0.0
      %1726 = vmatprep.subr.mxu0 0.0
      %1727 = vmatpush2.msra.mxu0 0.0
      %1728 = vmatprep.subr.mxu0 0.0
      %1729 = vmatpush2.msra.mxu0 0.0
      %1730 = vmatprep.subr.mxu0 0.0
      %1731 = vmatpush2.msra.mxu0 0.0
      %1732 = vmatprep.mubr.f32.mxu0 0.0
      %1733 = vmatmul.mubr.f32.gmra.mxu0 %v1621
      %v1734 = vpop.f32.mrf.mxu0
      %v1735 = vadd.f32 0.0, %v1734
      %v1736 = vpop.f32.mrf.mxu0
      %1737 = vmatprep.mubr.f32.mxu0 0.0
      %1738 = vmatmul.mubr.f32.gmra.mxu0 %v1624
      %v1739 = vpop.f32.mrf.mxu0
      %v1740 = vadd.f32 0.0, %v1739
      %v1741 = vpop.f32.mrf.mxu0
      %1742 = vmatprep.mubr.f32.mxu0 0.0
      %1743 = vmatmul.mubr.f32.gmra.mxu0 %v1627
      %v1744 = vpop.f32.mrf.mxu0
      %v1745 = vadd.f32 0.0, %v1744
      %v1746 = vpop.f32.mrf.mxu0
      %1747 = vmatprep.mubr.f32.mxu0 0.0
      %1748 = vmatmul.mubr.f32.gmra.mxu0 %v1630
      %v1749 = vpop.f32.mrf.mxu0
      %v1750 = vadd.f32 0.0, %v1749
      %v1751 = vpop.f32.mrf.mxu0
      %1752 = vmatprep.mubr.f32.mxu0 0.0
      %1753 = vmatmul.mubr.f32.gmra.mxu0 %v1633
      %v1754 = vpop.f32.mrf.mxu0
      %v1755 = vadd.f32 0.0, %v1754
      %v1756 = vpop.f32.mrf.mxu0
      %1757 = vmatprep.mubr.f32.mxu0 0.0
      %1758 = vmatmul.mubr.f32.gmra.mxu0 %v1636
      %v1759 = vpop.f32.mrf.mxu0
      %v1760 = vadd.f32 0.0, %v1759
      %v1761 = vpop.f32.mrf.mxu0
      %1762 = vmatprep.mubr.f32.mxu0 0.0
      %1763 = vmatmul.mubr.f32.gmra.mxu0 %v1639
      %v1764 = vpop.f32.mrf.mxu0
      %v1765 = vadd.f32 0.0, %v1764
      %v1766 = vpop.f32.mrf.mxu0
      %1767 = vmatprep.mubr.f32.mxu0 0.0
      %1768 = vmatmul.mubr.f32.gmra.mxu0 %v1642
      %v1769 = vpop.f32.mrf.mxu0
      %v1770 = vadd.f32 0.0, %v1769
      %v1771 = vpop.f32.mrf.mxu0
      %1772 = vdwg.mxu0
      %v1773 = vadd.f32 %v1595, %v1735
      %v1774 = vadd.f32 %v1596, %v1740
      %v1775 = vadd.f32 %v1597, %v1745
      %v1776 = vadd.f32 %v1598, %v1750
      %v1777 = vadd.f32 %v1599, %v1755
      %v1778 = vadd.f32 %v1600, %v1760
      %v1779 = vadd.f32 %v1601, %v1765
      %v1780 = vadd.f32 %v1602, %v1770
      %s1781 = scalar_lea.vmem %s2, 768
      %v1782 = vld [vmem:[%s1781] sm:$0xff]
      %v1783 = vld [vmem:[%s1781 + $0x8] sm:$0xff]
      %v1784 = vld [vmem:[%s1781 + $0x10] sm:$0xff]
      %v1785 = vld [vmem:[%s1781 + $0x18] sm:$0xff]
      %v1786 = vld [vmem:[%s1781 + $0x20] sm:$0xff]
      %v1787 = vld [vmem:[%s1781 + $0x28] sm:$0xff]
      %v1788 = vld [vmem:[%s1781 + $0x30] sm:$0xff]
      %v1789 = vld [vmem:[%s1781 + $0x38] sm:$0xff]
      %v1790 = vld [vmem:[%s1781 + $0x40] sm:$0xff]
      %v1791 = vld [vmem:[%s1781 + $0x48] sm:$0xff]
      %v1792 = vld [vmem:[%s1781 + $0x50] sm:$0xff]
      %v1793 = vld [vmem:[%s1781 + $0x58] sm:$0xff]
      %v1794 = vld [vmem:[%s1781 + $0x60] sm:$0xff]
      %v1795 = vld [vmem:[%s1781 + $0x68] sm:$0xff]
      %v1796 = vld [vmem:[%s1781 + $0x70] sm:$0xff]
      %v1797 = vld [vmem:[%s1781 + $0x78] sm:$0xff]
      %1798 = vmatprep.subr.mxu0 0.0
      %1799 = vmatpush1.msra.mxu0 %v1797
      %1800 = vmatprep.subr.mxu0 0.0
      %1801 = vmatpush1.msra.mxu0 %v1796
      %1802 = vmatprep.subr.mxu0 0.0
      %1803 = vmatpush1.msra.mxu0 %v1795
      %1804 = vmatprep.subr.mxu0 0.0
      %1805 = vmatpush1.msra.mxu0 %v1794
      %1806 = vmatprep.subr.mxu0 0.0
      %1807 = vmatpush1.msra.mxu0 %v1793
      %1808 = vmatprep.subr.mxu0 0.0
      %1809 = vmatpush1.msra.mxu0 %v1792
      %1810 = vmatprep.subr.mxu0 0.0
      %1811 = vmatpush1.msra.mxu0 %v1791
      %1812 = vmatprep.subr.mxu0 0.0
      %1813 = vmatpush1.msra.mxu0 %v1790
      %1814 = vmatprep.subr.mxu0 0.0
      %1815 = vmatpush1.msra.mxu0 %v1789
      %1816 = vmatprep.subr.mxu0 0.0
      %1817 = vmatpush1.msra.mxu0 %v1788
      %1818 = vmatprep.subr.mxu0 0.0
      %1819 = vmatpush1.msra.mxu0 %v1787
      %1820 = vmatprep.subr.mxu0 0.0
      %1821 = vmatpush1.msra.mxu0 %v1786
      %1822 = vmatprep.subr.mxu0 0.0
      %1823 = vmatpush1.msra.mxu0 %v1785
      %1824 = vmatprep.subr.mxu0 0.0
      %1825 = vmatpush1.msra.mxu0 %v1784
      %1826 = vmatprep.subr.mxu0 0.0
      %1827 = vmatpush1.msra.mxu0 %v1783
      %1828 = vmatprep.subr.mxu0 0.0
      %1829 = vmatpush1.msra.mxu0 %v1782
      %1830 = vmatprep.subr.mxu0 0.0
      %1831 = vmatpush2.msra.mxu0 0.0
      %1832 = vmatprep.subr.mxu0 0.0
      %1833 = vmatpush2.msra.mxu0 0.0
      %1834 = vmatprep.subr.mxu0 0.0
      %1835 = vmatpush2.msra.mxu0 0.0
      %1836 = vmatprep.subr.mxu0 0.0
      %1837 = vmatpush2.msra.mxu0 0.0
      %1838 = vmatprep.subr.mxu0 0.0
      %1839 = vmatpush2.msra.mxu0 0.0
      %1840 = vmatprep.subr.mxu0 0.0
      %1841 = vmatpush2.msra.mxu0 0.0
      %1842 = vmatprep.subr.mxu0 0.0
      %1843 = vmatpush2.msra.mxu0 0.0
      %1844 = vmatprep.subr.mxu0 0.0
      %1845 = vmatpush2.msra.mxu0 0.0
      %1846 = vmatprep.subr.mxu0 0.0
      %1847 = vmatpush2.msra.mxu0 0.0
      %1848 = vmatprep.subr.mxu0 0.0
      %1849 = vmatpush2.msra.mxu0 0.0
      %1850 = vmatprep.subr.mxu0 0.0
      %1851 = vmatpush2.msra.mxu0 0.0
      %1852 = vmatprep.subr.mxu0 0.0
      %1853 = vmatpush2.msra.mxu0 0.0
      %1854 = vmatprep.subr.mxu0 0.0
      %1855 = vmatpush2.msra.mxu0 0.0
      %1856 = vmatprep.subr.mxu0 0.0
      %1857 = vmatpush2.msra.mxu0 0.0
      %1858 = vmatprep.subr.mxu0 0.0
      %1859 = vmatpush2.msra.mxu0 0.0
      %1860 = vmatprep.subr.mxu0 0.0
      %1861 = vmatpush2.msra.mxu0 0.0
      %1862 = vmatprep.mubr.f32.mxu0 0.0
      %1863 = vmatmul.mubr.f32.gmra.mxu0 %v872
      %v1864 = vpop.f32.mrf.mxu0
      %v1865 = vadd.f32 0.0, %v1864
      %v1866 = vpop.f32.mrf.mxu0
      %1867 = vmatprep.mubr.f32.mxu0 0.0
      %1868 = vmatmul.mubr.f32.gmra.mxu0 %v874
      %v1869 = vpop.f32.mrf.mxu0
      %v1870 = vadd.f32 0.0, %v1869
      %v1871 = vpop.f32.mrf.mxu0
      %1872 = vmatprep.mubr.f32.mxu0 0.0
      %1873 = vmatmul.mubr.f32.gmra.mxu0 %v876
      %v1874 = vpop.f32.mrf.mxu0
      %v1875 = vadd.f32 0.0, %v1874
      %v1876 = vpop.f32.mrf.mxu0
      %1877 = vmatprep.mubr.f32.mxu0 0.0
      %1878 = vmatmul.mubr.f32.gmra.mxu0 %v878
      %v1879 = vpop.f32.mrf.mxu0
      %v1880 = vadd.f32 0.0, %v1879
      %v1881 = vpop.f32.mrf.mxu0
      %1882 = vmatprep.mubr.f32.mxu0 0.0
      %1883 = vmatmul.mubr.f32.gmra.mxu0 %v880
      %v1884 = vpop.f32.mrf.mxu0
      %v1885 = vadd.f32 0.0, %v1884
      %v1886 = vpop.f32.mrf.mxu0
      %1887 = vmatprep.mubr.f32.mxu0 0.0
      %1888 = vmatmul.mubr.f32.gmra.mxu0 %v882
      %v1889 = vpop.f32.mrf.mxu0
      %v1890 = vadd.f32 0.0, %v1889
      %v1891 = vpop.f32.mrf.mxu0
      %1892 = vmatprep.mubr.f32.mxu0 0.0
      %1893 = vmatmul.mubr.f32.gmra.mxu0 %v884
      %v1894 = vpop.f32.mrf.mxu0
      %v1895 = vadd.f32 0.0, %v1894
      %v1896 = vpop.f32.mrf.mxu0
      %1897 = vmatprep.mubr.f32.mxu0 0.0
      %1898 = vmatmul.mubr.f32.gmra.mxu0 %v886
      %v1899 = vpop.f32.mrf.mxu0
      %v1900 = vadd.f32 0.0, %v1899
      %v1901 = vpop.f32.mrf.mxu0
      %1902 = vdwg.mxu0
      %v1903 = vadd.f32 %v1773, %v1865
      %v1904 = vadd.f32 %v1774, %v1870
      %v1905 = vadd.f32 %v1775, %v1875
      %v1906 = vadd.f32 %v1776, %v1880
      %v1907 = vadd.f32 %v1777, %v1885
      %v1908 = vadd.f32 %v1778, %v1890
      %v1909 = vadd.f32 %v1779, %v1895
      %v1910 = vadd.f32 %v1780, %v1900
      %s1911 = scalar_lea.vmem %s2, 896
      %v1912 = vld [vmem:[%s1911] sm:$0xff]
      %v1913 = vld [vmem:[%s1911 + $0x8] sm:$0xff]
      %v1914 = vld [vmem:[%s1911 + $0x10] sm:$0xff]
      %v1915 = vld [vmem:[%s1911 + $0x18] sm:$0xff]
      %v1916 = vld [vmem:[%s1911 + $0x20] sm:$0xff]
      %v1917 = vld [vmem:[%s1911 + $0x28] sm:$0xff]
      %v1918 = vld [vmem:[%s1911 + $0x30] sm:$0xff]
      %v1919 = vld [vmem:[%s1911 + $0x38] sm:$0xff]
      %v1920 = vld [vmem:[%s1911 + $0x40] sm:$0xff]
      %v1921 = vld [vmem:[%s1911 + $0x48] sm:$0xff]
      %v1922 = vld [vmem:[%s1911 + $0x50] sm:$0xff]
      %v1923 = vld [vmem:[%s1911 + $0x58] sm:$0xff]
      %v1924 = vld [vmem:[%s1911 + $0x60] sm:$0xff]
      %v1925 = vld [vmem:[%s1911 + $0x68] sm:$0xff]
      %v1926 = vld [vmem:[%s1911 + $0x70] sm:$0xff]
      %v1927 = vld [vmem:[%s1911 + $0x78] sm:$0xff]
      %1928 = vmatprep.subr.mxu0 0.0
      %1929 = vmatpush1.msra.mxu0 %v1927
      %1930 = vmatprep.subr.mxu0 0.0
      %1931 = vmatpush1.msra.mxu0 %v1926
      %1932 = vmatprep.subr.mxu0 0.0
      %1933 = vmatpush1.msra.mxu0 %v1925
      %1934 = vmatprep.subr.mxu0 0.0
      %1935 = vmatpush1.msra.mxu0 %v1924
      %1936 = vmatprep.subr.mxu0 0.0
      %1937 = vmatpush1.msra.mxu0 %v1923
      %1938 = vmatprep.subr.mxu0 0.0
      %1939 = vmatpush1.msra.mxu0 %v1922
      %1940 = vmatprep.subr.mxu0 0.0
      %1941 = vmatpush1.msra.mxu0 %v1921
      %1942 = vmatprep.subr.mxu0 0.0
      %1943 = vmatpush1.msra.mxu0 %v1920
      %1944 = vmatprep.subr.mxu0 0.0
      %1945 = vmatpush1.msra.mxu0 %v1919
      %1946 = vmatprep.subr.mxu0 0.0
      %1947 = vmatpush1.msra.mxu0 %v1918
      %1948 = vmatprep.subr.mxu0 0.0
      %1949 = vmatpush1.msra.mxu0 %v1917
      %1950 = vmatprep.subr.mxu0 0.0
      %1951 = vmatpush1.msra.mxu0 %v1916
      %1952 = vmatprep.subr.mxu0 0.0
      %1953 = vmatpush1.msra.mxu0 %v1915
      %1954 = vmatprep.subr.mxu0 0.0
      %1955 = vmatpush1.msra.mxu0 %v1914
      %1956 = vmatprep.subr.mxu0 0.0
      %1957 = vmatpush1.msra.mxu0 %v1913
      %1958 = vmatprep.subr.mxu0 0.0
      %1959 = vmatpush1.msra.mxu0 %v1912
      %1960 = vmatprep.subr.mxu0 0.0
      %1961 = vmatpush2.msra.mxu0 0.0
      %1962 = vmatprep.subr.mxu0 0.0
      %1963 = vmatpush2.msra.mxu0 0.0
      %1964 = vmatprep.subr.mxu0 0.0
      %1965 = vmatpush2.msra.mxu0 0.0
      %1966 = vmatprep.subr.mxu0 0.0
      %1967 = vmatpush2.msra.mxu0 0.0
      %1968 = vmatprep.subr.mxu0 0.0
      %1969 = vmatpush2.msra.mxu0 0.0
      %1970 = vmatprep.subr.mxu0 0.0
      %1971 = vmatpush2.msra.mxu0 0.0
      %1972 = vmatprep.subr.mxu0 0.0
      %1973 = vmatpush2.msra.mxu0 0.0
      %1974 = vmatprep.subr.mxu0 0.0
      %1975 = vmatpush2.msra.mxu0 0.0
      %1976 = vmatprep.subr.mxu0 0.0
      %1977 = vmatpush2.msra.mxu0 0.0
      %1978 = vmatprep.subr.mxu0 0.0
      %1979 = vmatpush2.msra.mxu0 0.0
      %1980 = vmatprep.subr.mxu0 0.0
      %1981 = vmatpush2.msra.mxu0 0.0
      %1982 = vmatprep.subr.mxu0 0.0
      %1983 = vmatpush2.msra.mxu0 0.0
      %1984 = vmatprep.subr.mxu0 0.0
      %1985 = vmatpush2.msra.mxu0 0.0
      %1986 = vmatprep.subr.mxu0 0.0
      %1987 = vmatpush2.msra.mxu0 0.0
      %1988 = vmatprep.subr.mxu0 0.0
      %1989 = vmatpush2.msra.mxu0 0.0
      %1990 = vmatprep.subr.mxu0 0.0
      %1991 = vmatpush2.msra.mxu0 0.0
      %1992 = vmatprep.mubr.f32.mxu0 0.0
      %1993 = vmatmul.mubr.f32.gmra.mxu0 %v889
      %v1994 = vpop.f32.mrf.mxu0
      %v1995 = vadd.f32 0.0, %v1994
      %v1996 = vpop.f32.mrf.mxu0
      %1997 = vmatprep.mubr.f32.mxu0 0.0
      %1998 = vmatmul.mubr.f32.gmra.mxu0 %v890
      %v1999 = vpop.f32.mrf.mxu0
      %v2000 = vadd.f32 0.0, %v1999
      %v2001 = vpop.f32.mrf.mxu0
      %2002 = vmatprep.mubr.f32.mxu0 0.0
      %2003 = vmatmul.mubr.f32.gmra.mxu0 %v891
      %v2004 = vpop.f32.mrf.mxu0
      %v2005 = vadd.f32 0.0, %v2004
      %v2006 = vpop.f32.mrf.mxu0
      %2007 = vmatprep.mubr.f32.mxu0 0.0
      %2008 = vmatmul.mubr.f32.gmra.mxu0 %v892
      %v2009 = vpop.f32.mrf.mxu0
      %v2010 = vadd.f32 0.0, %v2009
      %v2011 = vpop.f32.mrf.mxu0
      %2012 = vmatprep.mubr.f32.mxu0 0.0
      %2013 = vmatmul.mubr.f32.gmra.mxu0 %v893
      %v2014 = vpop.f32.mrf.mxu0
      %v2015 = vadd.f32 0.0, %v2014
      %v2016 = vpop.f32.mrf.mxu0
      %2017 = vmatprep.mubr.f32.mxu0 0.0
      %2018 = vmatmul.mubr.f32.gmra.mxu0 %v894
      %v2019 = vpop.f32.mrf.mxu0
      %v2020 = vadd.f32 0.0, %v2019
      %v2021 = vpop.f32.mrf.mxu0
      %2022 = vmatprep.mubr.f32.mxu0 0.0
      %2023 = vmatmul.mubr.f32.gmra.mxu0 %v895
      %v2024 = vpop.f32.mrf.mxu0
      %v2025 = vadd.f32 0.0, %v2024
      %v2026 = vpop.f32.mrf.mxu0
      %2027 = vmatprep.mubr.f32.mxu0 0.0
      %2028 = vmatmul.mubr.f32.gmra.mxu0 %v896
      %v2029 = vpop.f32.mrf.mxu0
      %v2030 = vadd.f32 0.0, %v2029
      %v2031 = vpop.f32.mrf.mxu0
      %2032 = vdwg.mxu0
      %v2033 = vadd.f32 %v1903, %v1995
      %v2034 = vadd.f32 %v1904, %v2000
      %v2035 = vadd.f32 %v1905, %v2005
      %v2036 = vadd.f32 %v1906, %v2010
      %v2037 = vadd.f32 %v1907, %v2015
      %v2038 = vadd.f32 %v1908, %v2020
      %v2039 = vadd.f32 %v1909, %v2025
      %v2040 = vadd.f32 %v1910, %v2030
      %v2043 = vrot.slane %v886, 1
      %v2044 = vrot.slane %v887, 1
      %v2045 = vsel %vm1180, %v2043, %v2044
      %s2047 = scalar_lea.vmem %s2, 1024
      %v2048 = vld [vmem:[%s2047] sm:$0xff]
      %v2049 = vld [vmem:[%s2047 + $0x8] sm:$0xff]
      %v2050 = vld [vmem:[%s2047 + $0x10] sm:$0xff]
      %v2051 = vld [vmem:[%s2047 + $0x18] sm:$0xff]
      %v2052 = vld [vmem:[%s2047 + $0x20] sm:$0xff]
      %v2053 = vld [vmem:[%s2047 + $0x28] sm:$0xff]
      %v2054 = vld [vmem:[%s2047 + $0x30] sm:$0xff]
      %v2055 = vld [vmem:[%s2047 + $0x38] sm:$0xff]
      %v2056 = vld [vmem:[%s2047 + $0x40] sm:$0xff]
      %v2057 = vld [vmem:[%s2047 + $0x48] sm:$0xff]
      %v2058 = vld [vmem:[%s2047 + $0x50] sm:$0xff]
      %v2059 = vld [vmem:[%s2047 + $0x58] sm:$0xff]
      %v2060 = vld [vmem:[%s2047 + $0x60] sm:$0xff]
      %v2061 = vld [vmem:[%s2047 + $0x68] sm:$0xff]
      %v2062 = vld [vmem:[%s2047 + $0x70] sm:$0xff]
      %v2063 = vld [vmem:[%s2047 + $0x78] sm:$0xff]
      %2064 = vmatprep.subr.mxu0 0.0
      %2065 = vmatpush1.msra.mxu0 %v2063
      %2066 = vmatprep.subr.mxu0 0.0
      %2067 = vmatpush1.msra.mxu0 %v2062
      %2068 = vmatprep.subr.mxu0 0.0
      %2069 = vmatpush1.msra.mxu0 %v2061
      %2070 = vmatprep.subr.mxu0 0.0
      %2071 = vmatpush1.msra.mxu0 %v2060
      %2072 = vmatprep.subr.mxu0 0.0
      %2073 = vmatpush1.msra.mxu0 %v2059
      %2074 = vmatprep.subr.mxu0 0.0
      %2075 = vmatpush1.msra.mxu0 %v2058
      %2076 = vmatprep.subr.mxu0 0.0
      %2077 = vmatpush1.msra.mxu0 %v2057
      %2078 = vmatprep.subr.mxu0 0.0
      %2079 = vmatpush1.msra.mxu0 %v2056
      %2080 = vmatprep.subr.mxu0 0.0
      %2081 = vmatpush1.msra.mxu0 %v2055
      %2082 = vmatprep.subr.mxu0 0.0
      %2083 = vmatpush1.msra.mxu0 %v2054
      %2084 = vmatprep.subr.mxu0 0.0
      %2085 = vmatpush1.msra.mxu0 %v2053
      %2086 = vmatprep.subr.mxu0 0.0
      %2087 = vmatpush1.msra.mxu0 %v2052
      %2088 = vmatprep.subr.mxu0 0.0
      %2089 = vmatpush1.msra.mxu0 %v2051
      %2090 = vmatprep.subr.mxu0 0.0
      %2091 = vmatpush1.msra.mxu0 %v2050
      %2092 = vmatprep.subr.mxu0 0.0
      %2093 = vmatpush1.msra.mxu0 %v2049
      %2094 = vmatprep.subr.mxu0 0.0
      %2095 = vmatpush1.msra.mxu0 %v2048
      %2096 = vmatprep.subr.mxu0 0.0
      %2097 = vmatpush2.msra.mxu0 0.0
      %2098 = vmatprep.subr.mxu0 0.0
      %2099 = vmatpush2.msra.mxu0 0.0
      %2100 = vmatprep.subr.mxu0 0.0
      %2101 = vmatpush2.msra.mxu0 0.0
      %2102 = vmatprep.subr.mxu0 0.0
      %2103 = vmatpush2.msra.mxu0 0.0
      %2104 = vmatprep.subr.mxu0 0.0
      %2105 = vmatpush2.msra.mxu0 0.0
      %2106 = vmatprep.subr.mxu0 0.0
      %2107 = vmatpush2.msra.mxu0 0.0
      %2108 = vmatprep.subr.mxu0 0.0
      %2109 = vmatpush2.msra.mxu0 0.0
      %2110 = vmatprep.subr.mxu0 0.0
      %2111 = vmatpush2.msra.mxu0 0.0
      %2112 = vmatprep.subr.mxu0 0.0
      %2113 = vmatpush2.msra.mxu0 0.0
      %2114 = vmatprep.subr.mxu0 0.0
      %2115 = vmatpush2.msra.mxu0 0.0
      %2116 = vmatprep.subr.mxu0 0.0
      %2117 = vmatpush2.msra.mxu0 0.0
      %2118 = vmatprep.subr.mxu0 0.0
      %2119 = vmatpush2.msra.mxu0 0.0
      %2120 = vmatprep.subr.mxu0 0.0
      %2121 = vmatpush2.msra.mxu0 0.0
      %2122 = vmatprep.subr.mxu0 0.0
      %2123 = vmatpush2.msra.mxu0 0.0
      %2124 = vmatprep.subr.mxu0 0.0
      %2125 = vmatpush2.msra.mxu0 0.0
      %2126 = vmatprep.subr.mxu0 0.0
      %2127 = vmatpush2.msra.mxu0 0.0
      %2128 = vmatprep.mubr.f32.mxu0 0.0
      %2129 = vmatmul.mubr.f32.gmra.mxu0 %v1186
      %v2130 = vpop.f32.mrf.mxu0
      %v2131 = vadd.f32 0.0, %v2130
      %v2132 = vpop.f32.mrf.mxu0
      %2133 = vmatprep.mubr.f32.mxu0 0.0
      %2134 = vmatmul.mubr.f32.gmra.mxu0 %v1189
      %v2135 = vpop.f32.mrf.mxu0
      %v2136 = vadd.f32 0.0, %v2135
      %v2137 = vpop.f32.mrf.mxu0
      %2138 = vmatprep.mubr.f32.mxu0 0.0
      %2139 = vmatmul.mubr.f32.gmra.mxu0 %v1192
      %v2140 = vpop.f32.mrf.mxu0
      %v2141 = vadd.f32 0.0, %v2140
      %v2142 = vpop.f32.mrf.mxu0
      %2143 = vmatprep.mubr.f32.mxu0 0.0
      %2144 = vmatmul.mubr.f32.gmra.mxu0 %v1195
      %v2145 = vpop.f32.mrf.mxu0
      %v2146 = vadd.f32 0.0, %v2145
      %v2147 = vpop.f32.mrf.mxu0
      %2148 = vmatprep.mubr.f32.mxu0 0.0
      %2149 = vmatmul.mubr.f32.gmra.mxu0 %v1198
      %v2150 = vpop.f32.mrf.mxu0
      %v2151 = vadd.f32 0.0, %v2150
      %v2152 = vpop.f32.mrf.mxu0
      %2153 = vmatprep.mubr.f32.mxu0 0.0
      %2154 = vmatmul.mubr.f32.gmra.mxu0 %v1201
      %v2155 = vpop.f32.mrf.mxu0
      %v2156 = vadd.f32 0.0, %v2155
      %v2157 = vpop.f32.mrf.mxu0
      %2158 = vmatprep.mubr.f32.mxu0 0.0
      %2159 = vmatmul.mubr.f32.gmra.mxu0 %v1204
      %v2160 = vpop.f32.mrf.mxu0
      %v2161 = vadd.f32 0.0, %v2160
      %v2162 = vpop.f32.mrf.mxu0
      %2163 = vmatprep.mubr.f32.mxu0 0.0
      %2164 = vmatmul.mubr.f32.gmra.mxu0 %v2045
      %v2165 = vpop.f32.mrf.mxu0
      %v2166 = vadd.f32 0.0, %v2165
      %v2167 = vpop.f32.mrf.mxu0
      %2168 = vdwg.mxu0
      %v2169 = vadd.f32 %v2033, %v2131
      %v2170 = vadd.f32 %v2034, %v2136
      %v2171 = vadd.f32 %v2035, %v2141
      %v2172 = vadd.f32 %v2036, %v2146
      %v2173 = vadd.f32 %v2037, %v2151
      %v2174 = vadd.f32 %v2038, %v2156
      %v2175 = vadd.f32 %v2039, %v2161
      %v2176 = vadd.f32 %v2040, %v2166
      %v2177 = vld [vmem:[%s5] sm:$0x1]
      %v2179 = vlaneseq
      %v2180 = vshrl.u32 %v2179, 7
      %v2181 = vsub.s32 0, %v2180
      %v2182 = vrot.slane %v2177, %v2181
      %v2184 = vmul.f32 %v2169, %v2182
      %v2185 = vmul.f32 %v2170, %v2182
      %v2186 = vmul.f32 %v2171, %v2182
      %v2187 = vmul.f32 %v2172, %v2182
      %v2188 = vmul.f32 %v2173, %v2182
      %v2189 = vmul.f32 %v2174, %v2182
      %v2190 = vmul.f32 %v2175, %v2182
      %v2191 = vmul.f32 %v2176, %v2182
      %v2192 = vld [vmem:[%s6] sm:$0x1]
      %v2194 = vlaneseq
      %v2195 = vshrl.u32 %v2194, 7
      %v2196 = vsub.s32 0, %v2195
      %v2197 = vrot.slane %v2192, %v2196
      %v2199 = vadd.f32 %v2184, %v2197
      %v2200 = vadd.f32 %v2185, %v2197
      %v2201 = vadd.f32 %v2186, %v2197
      %v2202 = vadd.f32 %v2187, %v2197
      %v2203 = vadd.f32 %v2188, %v2197
      %v2204 = vadd.f32 %v2189, %v2197
      %v2205 = vadd.f32 %v2190, %v2197
      %v2206 = vadd.f32 %v2191, %v2197
      %v2207 = vmax.f32 %v2199, 0.0
      %v2208 = vmax.f32 %v2200, 0.0
      %v2209 = vmax.f32 %v2201, 0.0
      %v2210 = vmax.f32 %v2202, 0.0
      %v2211 = vmax.f32 %v2203, 0.0
      %v2212 = vmax.f32 %v2204, 0.0
      %v2213 = vmax.f32 %v2205, 0.0
      %v2214 = vmax.f32 %v2206, 0.0
      %2215 = vst [vmem:[%s340] sm:$0xff] %v2207
      %2216 = vst [vmem:[%s340 + $0x8] sm:$0xff] %v2208
      %2217 = vst [vmem:[%s340 + $0x10] sm:$0xff] %v2209
      %2218 = vst [vmem:[%s340 + $0x18] sm:$0xff] %v2210
      %2219 = vst [vmem:[%s340 + $0x20] sm:$0xff] %v2211
      %2220 = vst [vmem:[%s340 + $0x28] sm:$0xff] %v2212
      %2221 = vst [vmem:[%s340 + $0x30] sm:$0xff] %v2213
      %2222 = vst [vmem:[%s340 + $0x38] sm:$0xff] %v2214
      %v2223 = vld [vmem:[%s7] sm:$0xff]
      %v2224 = vld [vmem:[%s7 + $0x8] sm:$0xff]
      %v2225 = vld [vmem:[%s7 + $0x10] sm:$0xff]
      %v2226 = vld [vmem:[%s7 + $0x18] sm:$0xff]
      %v2227 = vld [vmem:[%s7 + $0x20] sm:$0xff]
      %v2228 = vld [vmem:[%s7 + $0x28] sm:$0xff]
      %v2229 = vld [vmem:[%s7 + $0x30] sm:$0xff]
      %v2230 = vld [vmem:[%s7 + $0x38] sm:$0xff]
      %v2231 = vld [vmem:[%s7 + $0x40] sm:$0xff]
      %v2232 = vld [vmem:[%s7 + $0x48] sm:$0xff]
      %v2233 = vld [vmem:[%s7 + $0x50] sm:$0xff]
      %v2234 = vld [vmem:[%s7 + $0x58] sm:$0xff]
      %v2235 = vld [vmem:[%s7 + $0x60] sm:$0xff]
      %v2236 = vld [vmem:[%s7 + $0x68] sm:$0xff]
      %v2237 = vld [vmem:[%s7 + $0x70] sm:$0xff]
      %v2238 = vld [vmem:[%s7 + $0x78] sm:$0xff]
      %2239 = vmatprep.subr.mxu0 0.0
      %2240 = vmatpush1.msra.mxu0 %v2238
      %2241 = vmatprep.subr.mxu0 0.0
      %2242 = vmatpush1.msra.mxu0 %v2237
      %2243 = vmatprep.subr.mxu0 0.0
      %2244 = vmatpush1.msra.mxu0 %v2236
      %2245 = vmatprep.subr.mxu0 0.0
      %2246 = vmatpush1.msra.mxu0 %v2235
      %2247 = vmatprep.subr.mxu0 0.0
      %2248 = vmatpush1.msra.mxu0 %v2234
      %2249 = vmatprep.subr.mxu0 0.0
      %2250 = vmatpush1.msra.mxu0 %v2233
      %2251 = vmatprep.subr.mxu0 0.0
      %2252 = vmatpush1.msra.mxu0 %v2232
      %2253 = vmatprep.subr.mxu0 0.0
      %2254 = vmatpush1.msra.mxu0 %v2231
      %2255 = vmatprep.subr.mxu0 0.0
      %2256 = vmatpush1.msra.mxu0 %v2230
      %2257 = vmatprep.subr.mxu0 0.0
      %2258 = vmatpush1.msra.mxu0 %v2229
      %2259 = vmatprep.subr.mxu0 0.0
      %2260 = vmatpush1.msra.mxu0 %v2228
      %2261 = vmatprep.subr.mxu0 0.0
      %2262 = vmatpush1.msra.mxu0 %v2227
      %2263 = vmatprep.subr.mxu0 0.0
      %2264 = vmatpush1.msra.mxu0 %v2226
      %2265 = vmatprep.subr.mxu0 0.0
      %2266 = vmatpush1.msra.mxu0 %v2225
      %2267 = vmatprep.subr.mxu0 0.0
      %2268 = vmatpush1.msra.mxu0 %v2224
      %2269 = vmatprep.subr.mxu0 0.0
      %2270 = vmatpush1.msra.mxu0 %v2223
      %2271 = vmatprep.subr.mxu0 0.0
      %2272 = vmatpush2.msra.mxu0 0.0
      %2273 = vmatprep.subr.mxu0 0.0
      %2274 = vmatpush2.msra.mxu0 0.0
      %2275 = vmatprep.subr.mxu0 0.0
      %2276 = vmatpush2.msra.mxu0 0.0
      %2277 = vmatprep.subr.mxu0 0.0
      %2278 = vmatpush2.msra.mxu0 0.0
      %2279 = vmatprep.subr.mxu0 0.0
      %2280 = vmatpush2.msra.mxu0 0.0
      %2281 = vmatprep.subr.mxu0 0.0
      %2282 = vmatpush2.msra.mxu0 0.0
      %2283 = vmatprep.subr.mxu0 0.0
      %2284 = vmatpush2.msra.mxu0 0.0
      %2285 = vmatprep.subr.mxu0 0.0
      %2286 = vmatpush2.msra.mxu0 0.0
      %2287 = vmatprep.subr.mxu0 0.0
      %2288 = vmatpush2.msra.mxu0 0.0
      %2289 = vmatprep.subr.mxu0 0.0
      %2290 = vmatpush2.msra.mxu0 0.0
      %2291 = vmatprep.subr.mxu0 0.0
      %2292 = vmatpush2.msra.mxu0 0.0
      %2293 = vmatprep.subr.mxu0 0.0
      %2294 = vmatpush2.msra.mxu0 0.0
      %2295 = vmatprep.subr.mxu0 0.0
      %2296 = vmatpush2.msra.mxu0 0.0
      %2297 = vmatprep.subr.mxu0 0.0
      %2298 = vmatpush2.msra.mxu0 0.0
      %2299 = vmatprep.subr.mxu0 0.0
      %2300 = vmatpush2.msra.mxu0 0.0
      %2301 = vmatprep.subr.mxu0 0.0
      %2302 = vmatpush2.msra.mxu0 0.0
      %2303 = vmatprep.mubr.f32.mxu0 0.0
      %2304 = vmatmul.mubr.f32.gmra.mxu0 %v913
      %v2305 = vpop.f32.mrf.mxu0
      %v2306 = vadd.f32 0.0, %v2305
      %v2307 = vpop.f32.mrf.mxu0
      %2308 = vmatprep.mubr.f32.mxu0 0.0
      %2309 = vmatmul.mubr.f32.gmra.mxu0 %v914
      %v2310 = vpop.f32.mrf.mxu0
      %v2311 = vadd.f32 0.0, %v2310
      %v2312 = vpop.f32.mrf.mxu0
      %2313 = vmatprep.mubr.f32.mxu0 0.0
      %2314 = vmatmul.mubr.f32.gmra.mxu0 %v915
      %v2315 = vpop.f32.mrf.mxu0
      %v2316 = vadd.f32 0.0, %v2315
      %v2317 = vpop.f32.mrf.mxu0
      %2318 = vmatprep.mubr.f32.mxu0 0.0
      %2319 = vmatmul.mubr.f32.gmra.mxu0 %v916
      %v2320 = vpop.f32.mrf.mxu0
      %v2321 = vadd.f32 0.0, %v2320
      %v2322 = vpop.f32.mrf.mxu0
      %2323 = vmatprep.mubr.f32.mxu0 0.0
      %2324 = vmatmul.mubr.f32.gmra.mxu0 %v917
      %v2325 = vpop.f32.mrf.mxu0
      %v2326 = vadd.f32 0.0, %v2325
      %v2327 = vpop.f32.mrf.mxu0
      %2328 = vmatprep.mubr.f32.mxu0 0.0
      %2329 = vmatmul.mubr.f32.gmra.mxu0 %v918
      %v2330 = vpop.f32.mrf.mxu0
      %v2331 = vadd.f32 0.0, %v2330
      %v2332 = vpop.f32.mrf.mxu0
      %2333 = vmatprep.mubr.f32.mxu0 0.0
      %2334 = vmatmul.mubr.f32.gmra.mxu0 %v919
      %v2335 = vpop.f32.mrf.mxu0
      %v2336 = vadd.f32 0.0, %v2335
      %v2337 = vpop.f32.mrf.mxu0
      %2338 = vmatprep.mubr.f32.mxu0 0.0
      %2339 = vmatmul.mubr.f32.gmra.mxu0 %v920
      %v2340 = vpop.f32.mrf.mxu0
      %v2341 = vadd.f32 0.0, %v2340
      %v2342 = vpop.f32.mrf.mxu0
      %2343 = vdwg.mxu0
      %2344 = vst [vmem:[%s345] sm:$0xff] %v2306
      %2345 = vst [vmem:[%s345 + $0x8] sm:$0xff] %v2311
      %2346 = vst [vmem:[%s345 + $0x10] sm:$0xff] %v2316
      %2347 = vst [vmem:[%s345 + $0x18] sm:$0xff] %v2321
      %2348 = vst [vmem:[%s345 + $0x20] sm:$0xff] %v2326
      %2349 = vst [vmem:[%s345 + $0x28] sm:$0xff] %v2331
      %2350 = vst [vmem:[%s345 + $0x30] sm:$0xff] %v2336
      %2351 = vst [vmem:[%s345 + $0x38] sm:$0xff] %v2341
      %p2352 = scmp.lt.s32.totalorder %s21, 1
      %s2353 = scalar_select %p2352, %s21, 1
      %s2354 = smul.addr %s2353, 8
      %s2355 = smul.addr %s2354, 8
      %s2356 = scalar_lea.vmem %s8, %s2355
      %p2357 = scmp.lt.s32.totalorder %s21, 1
      %s2358 = scalar_select %p2357, %s21, 1
      %s2359 = smul.addr %s2358, 8
      %s2360 = smul.addr %s2359, 8
      %s2361 = scalar_lea.vmem %s9, %s2360
      // Predicated region
      $region53: #{preact_block_forward.2} parent=51 // pred_check
        %p2362 = pneg %p212
      $region54: #{preact_block_forward.2} parent=51 // pred_check_branch
        %2364 = sbr.rel (%p2362) target = $region56
      $region55: #{preact_block_forward.2} parent=51 // pred_region
        _
      $region56: #{preact_block_forward.2} parent=51 // pred_fallthru
        _
      // Predicated region
      $region57: #{preact_block_forward.2} parent=51 // pred_check
        %p2365 = pneg %p238
      $region58: #{preact_block_forward.2} parent=51 // pred_check_branch
        %2367 = sbr.rel (%p2365) target = $region60
      $region59: #{preact_block_forward.2} parent=51 // pred_region
        _
      $region60: #{preact_block_forward.2} parent=51 // pred_fallthru
        _
    $region52: #{preact_block_forward.2} parent=5 // pred_fallthru
      _
    %p2368 = scmp.le.s32.totalorder 2, %s16
    // Predicated region
    $region61: #{preact_block_forward.2} parent=5 // pred_check
      %p2369 = pneg %p2368
    $region62: #{preact_block_forward.2} parent=5 // pred_check_branch
      %2371 = sbr.rel (%p2369) target = $region64
    $region63: #{preact_block_forward.2} parent=5 // pred_region
      %s2372 = ssub.s32 %s16, 2
      // Predicated region
      $region65: #{preact_block_forward.2} parent=63 // pred_check
        %p2373 = pneg %p218
      $region66: #{preact_block_forward.2} parent=63 // pred_check_branch
        %2375 = sbr.rel (%p2373) target = $region68
      $region67: #{preact_block_forward.2} parent=63 // pred_region
        %p2376 = scmp.lt.s32.totalorder %s22, 1
        %s2377 = scalar_select %p2376, %s22, 1
        %s2378 = smul.addr %s2377, 8
        %s2379 = smul.addr %s2378, 8
        %s2380 = scalar_lea.vmem %s8, %s2379
      $region68: #{preact_block_forward.2} parent=63 // pred_fallthru
        _
      // Predicated region
      $region69: #{preact_block_forward.2} parent=63 // pred_check
        %p2381 = pneg %p244
      $region70: #{preact_block_forward.2} parent=63 // pred_check_branch
        %2383 = sbr.rel (%p2381) target = $region72
      $region71: #{preact_block_forward.2} parent=63 // pred_region
        %p2384 = scmp.lt.s32.totalorder %s22, 1
        %s2385 = scalar_select %p2384, %s22, 1
        %s2386 = smul.addr %s2385, 8
        %s2387 = smul.addr %s2386, 8
        %s2388 = scalar_lea.vmem %s9, %s2387
      $region72: #{preact_block_forward.2} parent=63 // pred_fallthru
        _
    $region64: #{preact_block_forward.2} parent=5 // pred_fallthru
      _
  $region6: #{preact_block_forward.2} parent=0 // loop_footer
    %s20 = sadd.s32 1, %s16
  $region7: #{preact_block_forward.2} parent=0 // loop_footer_branch
    %15 = sbr.rel target = $region3
  $region8: #{preact_block_forward.2} parent=0 // loop_exit
    _

</llo_original>
